<compile_context>
chip_gen: v5e
topology: v5e:2x2
jax: 0.10.0
libtpu: 0.0.40
codegen_flags: <defaults>
</compile_context>

<pallas_src>
import functools

import jax
import jax.numpy as jnp
import numpy as np
from jax.experimental import pallas as pl
from jax.experimental.pallas import tpu as pltpu

LANES = 128  # TPU vreg lane width; batch lives on the lane axis.


def _conv_valid_kernel(x_ref, w_ref, o_ref, xs_ref, *, kh, kw, oh, ow):
    """Valid cross-correlation (no kernel flip), batch-in-lanes.

    x_ref : (H, W, Bt)   VMEM  -- Bt images, batch on the lane axis
    w_ref : (kh*kw,)     SMEM  -- flattened conv weight (scalar table)
    o_ref : (OH, OW, Bt) VMEM  -- output block
    xs_ref: (H, OW, Bt)  VMEM scratch -- per-q sublane-shifted slab

    out[i, j, b] = sum_{p, q} x[i + p, j + q, b] * w[p, q]
    """
    acc = None
    for q in range(kw):
        # One sublane-offset copy per kernel column q; the kh taps below then
        # reuse it with pure major-axis (free address) offsets, so the inner
        # accumulation is plain VALU mul/add work with scalar weights from
        # SMEM (scalar slot, co-issues for free).
        xs_ref[...] = x_ref[:, q:q + ow, :]
        for p in range(kh):
            term = xs_ref[p:p + oh, :, :] * w_ref[p * kw + q]
            acc = term if acc is None else acc + term
    # acc is (OH, OW, Bt) f32: ~18 live vregs at Bt=128, written once,
    # lane-dense unmasked store.
    o_ref[...] = acc.astype(o_ref.dtype)


def dccnn_forward(x_nchw, weight):
    """x_nchw: (B, 1, H, W) f32, weight: (1, 1, KH, KW) f32 -> (B, 1, OH, OW)."""
    b, c, h, w = x_nchw.shape
    assert c == 1, "DCCNN uses a single input channel"
    kh, kw = weight.shape[-2:]
    oh, ow = h - kh + 1, w - kw + 1
    assert oh >= 1 and ow >= 1, "'valid' conv requires input >= kernel"

    # Bt = 128 images per grid step: keeps the register accumulator at ~18
    # vregs (no spills) while each step still moves >100 KiB, amortizing the
    # fixed per-step pipeline overhead.  Larger B just adds grid steps, which
    # the "parallel" axis spreads across TensorCores (v7x megacore).
    bt = LANES
    bp = ((b + bt - 1) // bt) * bt

    # Lane-dense layout: batch on the last (lane) axis, zero-padded to Bp.
    x_hwb = jnp.transpose(x_nchw.reshape(b, h, w).astype(jnp.float32), (1, 2, 0))
    x_hwb = jnp.pad(x_hwb, ((0, 0), (0, 0), (0, bp - b)))

    # 1-D weight table in SMEM (avoids 2-D SMEM padding blowup).
    wt = weight.reshape(kh * kw).astype(jnp.float32)

    kernel = functools.partial(_conv_valid_kernel, kh=kh, kw=kw, oh=oh, ow=ow)

    out = pl.pallas_call(
        kernel,
        out_shape=jax.ShapeDtypeStruct((oh, ow, bp), jnp.float32),
        grid_spec=pltpu.PrefetchScalarGridSpec(
            num_scalar_prefetch=0,
            grid=(bp // bt,),
            in_specs=[
                # (H, W, Bt) block: first two dims are full extents, last dim
                # is a 128-aligned lane block -> satisfies the (8, 128) rule.
                pl.BlockSpec((h, w, bt), lambda i: (0, 0, i)),
                # tiny weight table lives in SMEM (scalar reads broadcast on VPU)
                pl.BlockSpec(memory_space=pltpu.MemorySpace.SMEM),
            ],
            out_specs=pl.BlockSpec((oh, ow, bt), lambda i: (0, 0, i)),
            scratch_shapes=[pltpu.VMEM((h, ow, bt), jnp.float32)],
        ),
        compiler_params=pltpu.CompilerParams(
            dimension_semantics=("parallel",)),
    )(x_hwb, wt)

    # (OH, OW, Bp) -> (B, 1, OH, OW)   (drop batch padding, restore NCHW)
    out = jnp.transpose(out[:, :, :b], (2, 0, 1)).reshape(b, 1, oh, ow)
    return out


if __name__ == "__main__":
    key = jax.random.PRNGKey(0)
    k_x, k_w = jax.random.split(key)

    # Module-implied shapes: Conv2d(1, 1, (nx, ny)); pick small nx = ny = 8 and
    # a (B, 1, 16, 16) NCHW input so the 'valid' conv yields a (B, 1, 9, 9) map.
    nx, ny = 8, 8
    B, H, W = 2, 16, 16

    x = jax.random.normal(k_x, (B, 1, H, W), dtype=jnp.float32)

    # Deterministic weight init (Conv2d default-style uniform, bias=False).
    fan_in = 1 * nx * ny
    bound = 1.0 / np.sqrt(fan_in)
    weight = jax.random.uniform(
        k_w, (1, 1, nx, ny), minval=-bound, maxval=bound, dtype=jnp.float32)

    out = dccnn_forward(x, weight)
    out = jax.block_until_ready(out)

    # Cross-check against XLA's valid cross-correlation (same semantics as
    # torch.nn.Conv2d with padding='valid', stride 1, no bias).
    ref = jax.lax.conv_general_dilated(
        x, weight, window_strides=(1, 1), padding="VALID",
        dimension_numbers=("NCHW", "OIHW", "NCHW"))
    assert out.shape == (B, 1, H - nx + 1, W - ny + 1)
    assert np.allclose(np.asarray(out), np.asarray(ref), rtol=1e-4, atol=1e-4)

    print("KERNEL_OK")
</pallas_src>

<mosaic_0001>
module attributes {stable_mosaic.version = 11 : i64} {
  func.func @_conv_valid_kernel(%arg0: i32, %arg1: memref<16x16x128xf32, #tpu.memory_space<vmem>>, %arg2: memref<64xf32, #tpu.memory_space<smem>>, %arg3: memref<9x9x128xf32, #tpu.memory_space<vmem>>, %arg4: memref<16x9x128xf32, #tpu.memory_space<vmem>>) attributes {dimension_semantics = [#tpu.dimension_semantics<parallel>], iteration_bounds = array<i64: 1>, scalar_prefetch = 0 : i64, scratch_operands = 1 : i64, tpu.core_type = #tpu.core_type<tc>, window_params = [{transform_indices = @transform_0, window_bounds = array<i64: 16, 16, 128>}, {transform_indices = @transform_1, window_bounds = array<i64: 64>}, {transform_indices = @transform_2, window_bounds = array<i64: 9, 9, 128>}]} {
    %c0 = arith.constant 0 : index
    %c0_0 = arith.constant 0 : index
    %c0_1 = arith.constant 0 : index
    %0 = vector.load %arg1[%c0, %c0_0, %c0_1] : memref<16x16x128xf32, #tpu.memory_space<vmem>>, vector<16x9x128xf32>
    %c0_2 = arith.constant 0 : index
    %c0_3 = arith.constant 0 : index
    %c0_4 = arith.constant 0 : index
    %1 = vector.load %arg4[%c0_2, %c0_3, %c0_4] : memref<16x9x128xf32, #tpu.memory_space<vmem>>, vector<16x9x128xf32>
    tpu.vector_store %arg4[%c0_2, %c0_3, %c0_4], %0 {strides = array<i32>} : memref<16x9x128xf32, #tpu.memory_space<vmem>>, vector<16x9x128xf32>,
    %c0_5 = arith.constant 0 : index
    %c0_6 = arith.constant 0 : index
    %c0_7 = arith.constant 0 : index
    %2 = vector.load %arg4[%c0_5, %c0_6, %c0_7] : memref<16x9x128xf32, #tpu.memory_space<vmem>>, vector<9x9x128xf32>
    %c0_8 = arith.constant 0 : index
    %3 = memref.load %arg2[%c0_8] : memref<64xf32, #tpu.memory_space<smem>>
    %4 = vector.broadcast %3 : f32 to vector<9x9x128xf32>
    %5 = arith.mulf %2, %4 : vector<9x9x128xf32>
    %c1 = arith.constant 1 : index
    %c0_9 = arith.constant 0 : index
    %c0_10 = arith.constant 0 : index
    %6 = vector.load %arg4[%c1, %c0_9, %c0_10] : memref<16x9x128xf32, #tpu.memory_space<vmem>>, vector<9x9x128xf32>
    %c8 = arith.constant 8 : index
    %7 = memref.load %arg2[%c8] : memref<64xf32, #tpu.memory_space<smem>>
    %8 = vector.broadcast %7 : f32 to vector<9x9x128xf32>
    %9 = arith.mulf %6, %8 : vector<9x9x128xf32>
    %10 = arith.addf %5, %9 : vector<9x9x128xf32>
    %c2 = arith.constant 2 : index
    %c0_11 = arith.constant 0 : index
    %c0_12 = arith.constant 0 : index
    %11 = vector.load %arg4[%c2, %c0_11, %c0_12] : memref<16x9x128xf32, #tpu.memory_space<vmem>>, vector<9x9x128xf32>
    %c16 = arith.constant 16 : index
    %12 = memref.load %arg2[%c16] : memref<64xf32, #tpu.memory_space<smem>>
    %13 = vector.broadcast %12 : f32 to vector<9x9x128xf32>
    %14 = arith.mulf %11, %13 : vector<9x9x128xf32>
    %15 = arith.addf %10, %14 : vector<9x9x128xf32>
    %c3 = arith.constant 3 : index
    %c0_13 = arith.constant 0 : index
    %c0_14 = arith.constant 0 : index
    %16 = vector.load %arg4[%c3, %c0_13, %c0_14] : memref<16x9x128xf32, #tpu.memory_space<vmem>>, vector<9x9x128xf32>
    %c24 = arith.constant 24 : index
    %17 = memref.load %arg2[%c24] : memref<64xf32, #tpu.memory_space<smem>>
    %18 = vector.broadcast %17 : f32 to vector<9x9x128xf32>
    %19 = arith.mulf %16, %18 : vector<9x9x128xf32>
    %20 = arith.addf %15, %19 : vector<9x9x128xf32>
    %c4 = arith.constant 4 : index
    %c0_15 = arith.constant 0 : index
    %c0_16 = arith.constant 0 : index
    %21 = vector.load %arg4[%c4, %c0_15, %c0_16] : memref<16x9x128xf32, #tpu.memory_space<vmem>>, vector<9x9x128xf32>
    %c32 = arith.constant 32 : index
    %22 = memref.load %arg2[%c32] : memref<64xf32, #tpu.memory_space<smem>>
    %23 = vector.broadcast %22 : f32 to vector<9x9x128xf32>
    %24 = arith.mulf %21, %23 : vector<9x9x128xf32>
    %25 = arith.addf %20, %24 : vector<9x9x128xf32>
    %c5 = arith.constant 5 : index
    %c0_17 = arith.constant 0 : index
    %c0_18 = arith.constant 0 : index
    %26 = vector.load %arg4[%c5, %c0_17, %c0_18] : memref<16x9x128xf32, #tpu.memory_space<vmem>>, vector<9x9x128xf32>
    %c40 = arith.constant 40 : index
    %27 = memref.load %arg2[%c40] : memref<64xf32, #tpu.memory_space<smem>>
    %28 = vector.broadcast %27 : f32 to vector<9x9x128xf32>
    %29 = arith.mulf %26, %28 : vector<9x9x128xf32>
    %30 = arith.addf %25, %29 : vector<9x9x128xf32>
    %c6 = arith.constant 6 : index
    %c0_19 = arith.constant 0 : index
    %c0_20 = arith.constant 0 : index
    %31 = vector.load %arg4[%c6, %c0_19, %c0_20] : memref<16x9x128xf32, #tpu.memory_space<vmem>>, vector<9x9x128xf32>
    %c48 = arith.constant 48 : index
    %32 = memref.load %arg2[%c48] : memref<64xf32, #tpu.memory_space<smem>>
    %33 = vector.broadcast %32 : f32 to vector<9x9x128xf32>
    %34 = arith.mulf %31, %33 : vector<9x9x128xf32>
    %35 = arith.addf %30, %34 : vector<9x9x128xf32>
    %c7 = arith.constant 7 : index
    %c0_21 = arith.constant 0 : index
    %c0_22 = arith.constant 0 : index
    %36 = vector.load %arg4[%c7, %c0_21, %c0_22] : memref<16x9x128xf32, #tpu.memory_space<vmem>>, vector<9x9x128xf32>
    %c56 = arith.constant 56 : index
    %37 = memref.load %arg2[%c56] : memref<64xf32, #tpu.memory_space<smem>>
    %38 = vector.broadcast %37 : f32 to vector<9x9x128xf32>
    %39 = arith.mulf %36, %38 : vector<9x9x128xf32>
    %40 = arith.addf %35, %39 : vector<9x9x128xf32>
    %c0_23 = arith.constant 0 : index
    %c1_24 = arith.constant 1 : index
    %c0_25 = arith.constant 0 : index
    %41 = vector.load %arg1[%c0_23, %c1_24, %c0_25] : memref<16x16x128xf32, #tpu.memory_space<vmem>>, vector<16x9x128xf32>
    %c0_26 = arith.constant 0 : index
    %c0_27 = arith.constant 0 : index
    %c0_28 = arith.constant 0 : index
    %42 = vector.load %arg4[%c0_26, %c0_27, %c0_28] : memref<16x9x128xf32, #tpu.memory_space<vmem>>, vector<16x9x128xf32>
    tpu.vector_store %arg4[%c0_26, %c0_27, %c0_28], %41 {strides = array<i32>} : memref<16x9x128xf32, #tpu.memory_space<vmem>>, vector<16x9x128xf32>,
    %c0_29 = arith.constant 0 : index
    %c0_30 = arith.constant 0 : index
    %c0_31 = arith.constant 0 : index
    %43 = vector.load %arg4[%c0_29, %c0_30, %c0_31] : memref<16x9x128xf32, #tpu.memory_space<vmem>>, vector<9x9x128xf32>
    %c1_32 = arith.constant 1 : index
    %44 = memref.load %arg2[%c1_32] : memref<64xf32, #tpu.memory_space<smem>>
    %45 = vector.broadcast %44 : f32 to vector<9x9x128xf32>
    %46 = arith.mulf %43, %45 : vector<9x9x128xf32>
    %47 = arith.addf %40, %46 : vector<9x9x128xf32>
    %c1_33 = arith.constant 1 : index
    %c0_34 = arith.constant 0 : index
    %c0_35 = arith.constant 0 : index
    %48 = vector.load %arg4[%c1_33, %c0_34, %c0_35] : memref<16x9x128xf32, #tpu.memory_space<vmem>>, vector<9x9x128xf32>
    %c9 = arith.constant 9 : index
    %49 = memref.load %arg2[%c9] : memref<64xf32, #tpu.memory_space<smem>>
    %50 = vector.broadcast %49 : f32 to vector<9x9x128xf32>
    %51 = arith.mulf %48, %50 : vector<9x9x128xf32>
    %52 = arith.addf %47, %51 : vector<9x9x128xf32>
    %c2_36 = arith.constant 2 : index
    %c0_37 = arith.constant 0 : index
    %c0_38 = arith.constant 0 : index
    %53 = vector.load %arg4[%c2_36, %c0_37, %c0_38] : memref<16x9x128xf32, #tpu.memory_space<vmem>>, vector<9x9x128xf32>
    %c17 = arith.constant 17 : index
    %54 = memref.load %arg2[%c17] : memref<64xf32, #tpu.memory_space<smem>>
    %55 = vector.broadcast %54 : f32 to vector<9x9x128xf32>
    %56 = arith.mulf %53, %55 : vector<9x9x128xf32>
    %57 = arith.addf %52, %56 : vector<9x9x128xf32>
    %c3_39 = arith.constant 3 : index
    %c0_40 = arith.constant 0 : index
    %c0_41 = arith.constant 0 : index
    %58 = vector.load %arg4[%c3_39, %c0_40, %c0_41] : memref<16x9x128xf32, #tpu.memory_space<vmem>>, vector<9x9x128xf32>
    %c25 = arith.constant 25 : index
    %59 = memref.load %arg2[%c25] : memref<64xf32, #tpu.memory_space<smem>>
    %60 = vector.broadcast %59 : f32 to vector<9x9x128xf32>
    %61 = arith.mulf %58, %60 : vector<9x9x128xf32>
    %62 = arith.addf %57, %61 : vector<9x9x128xf32>
    %c4_42 = arith.constant 4 : index
    %c0_43 = arith.constant 0 : index
    %c0_44 = arith.constant 0 : index
    %63 = vector.load %arg4[%c4_42, %c0_43, %c0_44] : memref<16x9x128xf32, #tpu.memory_space<vmem>>, vector<9x9x128xf32>
    %c33 = arith.constant 33 : index
    %64 = memref.load %arg2[%c33] : memref<64xf32, #tpu.memory_space<smem>>
    %65 = vector.broadcast %64 : f32 to vector<9x9x128xf32>
    %66 = arith.mulf %63, %65 : vector<9x9x128xf32>
    %67 = arith.addf %62, %66 : vector<9x9x128xf32>
    %c5_45 = arith.constant 5 : index
    %c0_46 = arith.constant 0 : index
    %c0_47 = arith.constant 0 : index
    %68 = vector.load %arg4[%c5_45, %c0_46, %c0_47] : memref<16x9x128xf32, #tpu.memory_space<vmem>>, vector<9x9x128xf32>
    %c41 = arith.constant 41 : index
    %69 = memref.load %arg2[%c41] : memref<64xf32, #tpu.memory_space<smem>>
    %70 = vector.broadcast %69 : f32 to vector<9x9x128xf32>
    %71 = arith.mulf %68, %70 : vector<9x9x128xf32>
    %72 = arith.addf %67, %71 : vector<9x9x128xf32>
    %c6_48 = arith.constant 6 : index
    %c0_49 = arith.constant 0 : index
    %c0_50 = arith.constant 0 : index
    %73 = vector.load %arg4[%c6_48, %c0_49, %c0_50] : memref<16x9x128xf32, #tpu.memory_space<vmem>>, vector<9x9x128xf32>
    %c49 = arith.constant 49 : index
    %74 = memref.load %arg2[%c49] : memref<64xf32, #tpu.memory_space<smem>>
    %75 = vector.broadcast %74 : f32 to vector<9x9x128xf32>
    %76 = arith.mulf %73, %75 : vector<9x9x128xf32>
    %77 = arith.addf %72, %76 : vector<9x9x128xf32>
    %c7_51 = arith.constant 7 : index
    %c0_52 = arith.constant 0 : index
    %c0_53 = arith.constant 0 : index
    %78 = vector.load %arg4[%c7_51, %c0_52, %c0_53] : memref<16x9x128xf32, #tpu.memory_space<vmem>>, vector<9x9x128xf32>
    %c57 = arith.constant 57 : index
    %79 = memref.load %arg2[%c57] : memref<64xf32, #tpu.memory_space<smem>>
    %80 = vector.broadcast %79 : f32 to vector<9x9x128xf32>
    %81 = arith.mulf %78, %80 : vector<9x9x128xf32>
    %82 = arith.addf %77, %81 : vector<9x9x128xf32>
    %c0_54 = arith.constant 0 : index
    %c2_55 = arith.constant 2 : index
    %c0_56 = arith.constant 0 : index
    %83 = vector.load %arg1[%c0_54, %c2_55, %c0_56] : memref<16x16x128xf32, #tpu.memory_space<vmem>>, vector<16x9x128xf32>
    %c0_57 = arith.constant 0 : index
    %c0_58 = arith.constant 0 : index
    %c0_59 = arith.constant 0 : index
    %84 = vector.load %arg4[%c0_57, %c0_58, %c0_59] : memref<16x9x128xf32, #tpu.memory_space<vmem>>, vector<16x9x128xf32>
    tpu.vector_store %arg4[%c0_57, %c0_58, %c0_59], %83 {strides = array<i32>} : memref<16x9x128xf32, #tpu.memory_space<vmem>>, vector<16x9x128xf32>,
    %c0_60 = arith.constant 0 : index
    %c0_61 = arith.constant 0 : index
    %c0_62 = arith.constant 0 : index
    %85 = vector.load %arg4[%c0_60, %c0_61, %c0_62] : memref<16x9x128xf32, #tpu.memory_space<vmem>>, vector<9x9x128xf32>
    %c2_63 = arith.constant 2 : index
    %86 = memref.load %arg2[%c2_63] : memref<64xf32, #tpu.memory_space<smem>>
    %87 = vector.broadcast %86 : f32 to vector<9x9x128xf32>
    %88 = arith.mulf %85, %87 : vector<9x9x128xf32>
    %89 = arith.addf %82, %88 : vector<9x9x128xf32>
    %c1_64 = arith.constant 1 : index
    %c0_65 = arith.constant 0 : index
    %c0_66 = arith.constant 0 : index
    %90 = vector.load %arg4[%c1_64, %c0_65, %c0_66] : memref<16x9x128xf32, #tpu.memory_space<vmem>>, vector<9x9x128xf32>
    %c10 = arith.constant 10 : index
    %91 = memref.load %arg2[%c10] : memref<64xf32, #tpu.memory_space<smem>>
    %92 = vector.broadcast %91 : f32 to vector<9x9x128xf32>
    %93 = arith.mulf %90, %92 : vector<9x9x128xf32>
    %94 = arith.addf %89, %93 : vector<9x9x128xf32>
    %c2_67 = arith.constant 2 : index
    %c0_68 = arith.constant 0 : index
    %c0_69 = arith.constant 0 : index
    %95 = vector.load %arg4[%c2_67, %c0_68, %c0_69] : memref<16x9x128xf32, #tpu.memory_space<vmem>>, vector<9x9x128xf32>
    %c18 = arith.constant 18 : index
    %96 = memref.load %arg2[%c18] : memref<64xf32, #tpu.memory_space<smem>>
    %97 = vector.broadcast %96 : f32 to vector<9x9x128xf32>
    %98 = arith.mulf %95, %97 : vector<9x9x128xf32>
    %99 = arith.addf %94, %98 : vector<9x9x128xf32>
    %c3_70 = arith.constant 3 : index
    %c0_71 = arith.constant 0 : index
    %c0_72 = arith.constant 0 : index
    %100 = vector.load %arg4[%c3_70, %c0_71, %c0_72] : memref<16x9x128xf32, #tpu.memory_space<vmem>>, vector<9x9x128xf32>
    %c26 = arith.constant 26 : index
    %101 = memref.load %arg2[%c26] : memref<64xf32, #tpu.memory_space<smem>>
    %102 = vector.broadcast %101 : f32 to vector<9x9x128xf32>
    %103 = arith.mulf %100, %102 : vector<9x9x128xf32>
    %104 = arith.addf %99, %103 : vector<9x9x128xf32>
    %c4_73 = arith.constant 4 : index
    %c0_74 = arith.constant 0 : index
    %c0_75 = arith.constant 0 : index
    %105 = vector.load %arg4[%c4_73, %c0_74, %c0_75] : memref<16x9x128xf32, #tpu.memory_space<vmem>>, vector<9x9x128xf32>
    %c34 = arith.constant 34 : index
    %106 = memref.load %arg2[%c34] : memref<64xf32, #tpu.memory_space<smem>>
    %107 = vector.broadcast %106 : f32 to vector<9x9x128xf32>
    %108 = arith.mulf %105, %107 : vector<9x9x128xf32>
    %109 = arith.addf %104, %108 : vector<9x9x128xf32>
    %c5_76 = arith.constant 5 : index
    %c0_77 = arith.constant 0 : index
    %c0_78 = arith.constant 0 : index
    %110 = vector.load %arg4[%c5_76, %c0_77, %c0_78] : memref<16x9x128xf32, #tpu.memory_space<vmem>>, vector<9x9x128xf32>
    %c42 = arith.constant 42 : index
    %111 = memref.load %arg2[%c42] : memref<64xf32, #tpu.memory_space<smem>>
    %112 = vector.broadcast %111 : f32 to vector<9x9x128xf32>
    %113 = arith.mulf %110, %112 : vector<9x9x128xf32>
    %114 = arith.addf %109, %113 : vector<9x9x128xf32>
    %c6_79 = arith.constant 6 : index
    %c0_80 = arith.constant 0 : index
    %c0_81 = arith.constant 0 : index
    %115 = vector.load %arg4[%c6_79, %c0_80, %c0_81] : memref<16x9x128xf32, #tpu.memory_space<vmem>>, vector<9x9x128xf32>
    %c50 = arith.constant 50 : index
    %116 = memref.load %arg2[%c50] : memref<64xf32, #tpu.memory_space<smem>>
    %117 = vector.broadcast %116 : f32 to vector<9x9x128xf32>
    %118 = arith.mulf %115, %117 : vector<9x9x128xf32>
    %119 = arith.addf %114, %118 : vector<9x9x128xf32>
    %c7_82 = arith.constant 7 : index
    %c0_83 = arith.constant 0 : index
    %c0_84 = arith.constant 0 : index
    %120 = vector.load %arg4[%c7_82, %c0_83, %c0_84] : memref<16x9x128xf32, #tpu.memory_space<vmem>>, vector<9x9x128xf32>
    %c58 = arith.constant 58 : index
    %121 = memref.load %arg2[%c58] : memref<64xf32, #tpu.memory_space<smem>>
    %122 = vector.broadcast %121 : f32 to vector<9x9x128xf32>
    %123 = arith.mulf %120, %122 : vector<9x9x128xf32>
    %124 = arith.addf %119, %123 : vector<9x9x128xf32>
    %c0_85 = arith.constant 0 : index
    %c3_86 = arith.constant 3 : index
    %c0_87 = arith.constant 0 : index
    %125 = vector.load %arg1[%c0_85, %c3_86, %c0_87] : memref<16x16x128xf32, #tpu.memory_space<vmem>>, vector<16x9x128xf32>
    %c0_88 = arith.constant 0 : index
    %c0_89 = arith.constant 0 : index
    %c0_90 = arith.constant 0 : index
    %126 = vector.load %arg4[%c0_88, %c0_89, %c0_90] : memref<16x9x128xf32, #tpu.memory_space<vmem>>, vector<16x9x128xf32>
    tpu.vector_store %arg4[%c0_88, %c0_89, %c0_90], %125 {strides = array<i32>} : memref<16x9x128xf32, #tpu.memory_space<vmem>>, vector<16x9x128xf32>,
    %c0_91 = arith.constant 0 : index
    %c0_92 = arith.constant 0 : index
    %c0_93 = arith.constant 0 : index
    %127 = vector.load %arg4[%c0_91, %c0_92, %c0_93] : memref<16x9x128xf32, #tpu.memory_space<vmem>>, vector<9x9x128xf32>
    %c3_94 = arith.constant 3 : index
    %128 = memref.load %arg2[%c3_94] : memref<64xf32, #tpu.memory_space<smem>>
    %129 = vector.broadcast %128 : f32 to vector<9x9x128xf32>
    %130 = arith.mulf %127, %129 : vector<9x9x128xf32>
    %131 = arith.addf %124, %130 : vector<9x9x128xf32>
    %c1_95 = arith.constant 1 : index
    %c0_96 = arith.constant 0 : index
    %c0_97 = arith.constant 0 : index
    %132 = vector.load %arg4[%c1_95, %c0_96, %c0_97] : memref<16x9x128xf32, #tpu.memory_space<vmem>>, vector<9x9x128xf32>
    %c11 = arith.constant 11 : index
    %133 = memref.load %arg2[%c11] : memref<64xf32, #tpu.memory_space<smem>>
    %134 = vector.broadcast %133 : f32 to vector<9x9x128xf32>
    %135 = arith.mulf %132, %134 : vector<9x9x128xf32>
    %136 = arith.addf %131, %135 : vector<9x9x128xf32>
    %c2_98 = arith.constant 2 : index
    %c0_99 = arith.constant 0 : index
    %c0_100 = arith.constant 0 : index
    %137 = vector.load %arg4[%c2_98, %c0_99, %c0_100] : memref<16x9x128xf32, #tpu.memory_space<vmem>>, vector<9x9x128xf32>
    %c19 = arith.constant 19 : index
    %138 = memref.load %arg2[%c19] : memref<64xf32, #tpu.memory_space<smem>>
    %139 = vector.broadcast %138 : f32 to vector<9x9x128xf32>
    %140 = arith.mulf %137, %139 : vector<9x9x128xf32>
    %141 = arith.addf %136, %140 : vector<9x9x128xf32>
    %c3_101 = arith.constant 3 : index
    %c0_102 = arith.constant 0 : index
    %c0_103 = arith.constant 0 : index
    %142 = vector.load %arg4[%c3_101, %c0_102, %c0_103] : memref<16x9x128xf32, #tpu.memory_space<vmem>>, vector<9x9x128xf32>
    %c27 = arith.constant 27 : index
    %143 = memref.load %arg2[%c27] : memref<64xf32, #tpu.memory_space<smem>>
    %144 = vector.broadcast %143 : f32 to vector<9x9x128xf32>
    %145 = arith.mulf %142, %144 : vector<9x9x128xf32>
    %146 = arith.addf %141, %145 : vector<9x9x128xf32>
    %c4_104 = arith.constant 4 : index
    %c0_105 = arith.constant 0 : index
    %c0_106 = arith.constant 0 : index
    %147 = vector.load %arg4[%c4_104, %c0_105, %c0_106] : memref<16x9x128xf32, #tpu.memory_space<vmem>>, vector<9x9x128xf32>
    %c35 = arith.constant 35 : index
    %148 = memref.load %arg2[%c35] : memref<64xf32, #tpu.memory_space<smem>>
    %149 = vector.broadcast %148 : f32 to vector<9x9x128xf32>
    %150 = arith.mulf %147, %149 : vector<9x9x128xf32>
    %151 = arith.addf %146, %150 : vector<9x9x128xf32>
    %c5_107 = arith.constant 5 : index
    %c0_108 = arith.constant 0 : index
    %c0_109 = arith.constant 0 : index
    %152 = vector.load %arg4[%c5_107, %c0_108, %c0_109] : memref<16x9x128xf32, #tpu.memory_space<vmem>>, vector<9x9x128xf32>
    %c43 = arith.constant 43 : index
    %153 = memref.load %arg2[%c43] : memref<64xf32, #tpu.memory_space<smem>>
    %154 = vector.broadcast %153 : f32 to vector<9x9x128xf32>
    %155 = arith.mulf %152, %154 : vector<9x9x128xf32>
    %156 = arith.addf %151, %155 : vector<9x9x128xf32>
    %c6_110 = arith.constant 6 : index
    %c0_111 = arith.constant 0 : index
    %c0_112 = arith.constant 0 : index
    %157 = vector.load %arg4[%c6_110, %c0_111, %c0_112] : memref<16x9x128xf32, #tpu.memory_space<vmem>>, vector<9x9x128xf32>
    %c51 = arith.constant 51 : index
    %158 = memref.load %arg2[%c51] : memref<64xf32, #tpu.memory_space<smem>>
    %159 = vector.broadcast %158 : f32 to vector<9x9x128xf32>
    %160 = arith.mulf %157, %159 : vector<9x9x128xf32>
    %161 = arith.addf %156, %160 : vector<9x9x128xf32>
    %c7_113 = arith.constant 7 : index
    %c0_114 = arith.constant 0 : index
    %c0_115 = arith.constant 0 : index
    %162 = vector.load %arg4[%c7_113, %c0_114, %c0_115] : memref<16x9x128xf32, #tpu.memory_space<vmem>>, vector<9x9x128xf32>
    %c59 = arith.constant 59 : index
    %163 = memref.load %arg2[%c59] : memref<64xf32, #tpu.memory_space<smem>>
    %164 = vector.broadcast %163 : f32 to vector<9x9x128xf32>
    %165 = arith.mulf %162, %164 : vector<9x9x128xf32>
    %166 = arith.addf %161, %165 : vector<9x9x128xf32>
    %c0_116 = arith.constant 0 : index
    %c4_117 = arith.constant 4 : index
    %c0_118 = arith.constant 0 : index
    %167 = vector.load %arg1[%c0_116, %c4_117, %c0_118] : memref<16x16x128xf32, #tpu.memory_space<vmem>>, vector<16x9x128xf32>
    %c0_119 = arith.constant 0 : index
    %c0_120 = arith.constant 0 : index
    %c0_121 = arith.constant 0 : index
    %168 = vector.load %arg4[%c0_119, %c0_120, %c0_121] : memref<16x9x128xf32, #tpu.memory_space<vmem>>, vector<16x9x128xf32>
    tpu.vector_store %arg4[%c0_119, %c0_120, %c0_121], %167 {strides = array<i32>} : memref<16x9x128xf32, #tpu.memory_space<vmem>>, vector<16x9x128xf32>,
    %c0_122 = arith.constant 0 : index
    %c0_123 = arith.constant 0 : index
    %c0_124 = arith.constant 0 : index
    %169 = vector.load %arg4[%c0_122, %c0_123, %c0_124] : memref<16x9x128xf32, #tpu.memory_space<vmem>>, vector<9x9x128xf32>
    %c4_125 = arith.constant 4 : index
    %170 = memref.load %arg2[%c4_125] : memref<64xf32, #tpu.memory_space<smem>>
    %171 = vector.broadcast %170 : f32 to vector<9x9x128xf32>
    %172 = arith.mulf %169, %171 : vector<9x9x128xf32>
    %173 = arith.addf %166, %172 : vector<9x9x128xf32>
    %c1_126 = arith.constant 1 : index
    %c0_127 = arith.constant 0 : index
    %c0_128 = arith.constant 0 : index
    %174 = vector.load %arg4[%c1_126, %c0_127, %c0_128] : memref<16x9x128xf32, #tpu.memory_space<vmem>>, vector<9x9x128xf32>
    %c12 = arith.constant 12 : index
    %175 = memref.load %arg2[%c12] : memref<64xf32, #tpu.memory_space<smem>>
    %176 = vector.broadcast %175 : f32 to vector<9x9x128xf32>
    %177 = arith.mulf %174, %176 : vector<9x9x128xf32>
    %178 = arith.addf %173, %177 : vector<9x9x128xf32>
    %c2_129 = arith.constant 2 : index
    %c0_130 = arith.constant 0 : index
    %c0_131 = arith.constant 0 : index
    %179 = vector.load %arg4[%c2_129, %c0_130, %c0_131] : memref<16x9x128xf32, #tpu.memory_space<vmem>>, vector<9x9x128xf32>
    %c20 = arith.constant 20 : index
    %180 = memref.load %arg2[%c20] : memref<64xf32, #tpu.memory_space<smem>>
    %181 = vector.broadcast %180 : f32 to vector<9x9x128xf32>
    %182 = arith.mulf %179, %181 : vector<9x9x128xf32>
    %183 = arith.addf %178, %182 : vector<9x9x128xf32>
    %c3_132 = arith.constant 3 : index
    %c0_133 = arith.constant 0 : index
    %c0_134 = arith.constant 0 : index
    %184 = vector.load %arg4[%c3_132, %c0_133, %c0_134] : memref<16x9x128xf32, #tpu.memory_space<vmem>>, vector<9x9x128xf32>
    %c28 = arith.constant 28 : index
    %185 = memref.load %arg2[%c28] : memref<64xf32, #tpu.memory_space<smem>>
    %186 = vector.broadcast %185 : f32 to vector<9x9x128xf32>
    %187 = arith.mulf %184, %186 : vector<9x9x128xf32>
    %188 = arith.addf %183, %187 : vector<9x9x128xf32>
    %c4_135 = arith.constant 4 : index
    %c0_136 = arith.constant 0 : index
    %c0_137 = arith.constant 0 : index
    %189 = vector.load %arg4[%c4_135, %c0_136, %c0_137] : memref<16x9x128xf32, #tpu.memory_space<vmem>>, vector<9x9x128xf32>
    %c36 = arith.constant 36 : index
    %190 = memref.load %arg2[%c36] : memref<64xf32, #tpu.memory_space<smem>>
    %191 = vector.broadcast %190 : f32 to vector<9x9x128xf32>
    %192 = arith.mulf %189, %191 : vector<9x9x128xf32>
    %193 = arith.addf %188, %192 : vector<9x9x128xf32>
    %c5_138 = arith.constant 5 : index
    %c0_139 = arith.constant 0 : index
    %c0_140 = arith.constant 0 : index
    %194 = vector.load %arg4[%c5_138, %c0_139, %c0_140] : memref<16x9x128xf32, #tpu.memory_space<vmem>>, vector<9x9x128xf32>
    %c44 = arith.constant 44 : index
    %195 = memref.load %arg2[%c44] : memref<64xf32, #tpu.memory_space<smem>>
    %196 = vector.broadcast %195 : f32 to vector<9x9x128xf32>
    %197 = arith.mulf %194, %196 : vector<9x9x128xf32>
    %198 = arith.addf %193, %197 : vector<9x9x128xf32>
    %c6_141 = arith.constant 6 : index
    %c0_142 = arith.constant 0 : index
    %c0_143 = arith.constant 0 : index
    %199 = vector.load %arg4[%c6_141, %c0_142, %c0_143] : memref<16x9x128xf32, #tpu.memory_space<vmem>>, vector<9x9x128xf32>
    %c52 = arith.constant 52 : index
    %200 = memref.load %arg2[%c52] : memref<64xf32, #tpu.memory_space<smem>>
    %201 = vector.broadcast %200 : f32 to vector<9x9x128xf32>
    %202 = arith.mulf %199, %201 : vector<9x9x128xf32>
    %203 = arith.addf %198, %202 : vector<9x9x128xf32>
    %c7_144 = arith.constant 7 : index
    %c0_145 = arith.constant 0 : index
    %c0_146 = arith.constant 0 : index
    %204 = vector.load %arg4[%c7_144, %c0_145, %c0_146] : memref<16x9x128xf32, #tpu.memory_space<vmem>>, vector<9x9x128xf32>
    %c60 = arith.constant 60 : index
    %205 = memref.load %arg2[%c60] : memref<64xf32, #tpu.memory_space<smem>>
    %206 = vector.broadcast %205 : f32 to vector<9x9x128xf32>
    %207 = arith.mulf %204, %206 : vector<9x9x128xf32>
    %208 = arith.addf %203, %207 : vector<9x9x128xf32>
    %c0_147 = arith.constant 0 : index
    %c5_148 = arith.constant 5 : index
    %c0_149 = arith.constant 0 : index
    %209 = vector.load %arg1[%c0_147, %c5_148, %c0_149] : memref<16x16x128xf32, #tpu.memory_space<vmem>>, vector<16x9x128xf32>
    %c0_150 = arith.constant 0 : index
    %c0_151 = arith.constant 0 : index
    %c0_152 = arith.constant 0 : index
    %210 = vector.load %arg4[%c0_150, %c0_151, %c0_152] : memref<16x9x128xf32, #tpu.memory_space<vmem>>, vector<16x9x128xf32>
    tpu.vector_store %arg4[%c0_150, %c0_151, %c0_152], %209 {strides = array<i32>} : memref<16x9x128xf32, #tpu.memory_space<vmem>>, vector<16x9x128xf32>,
    %c0_153 = arith.constant 0 : index
    %c0_154 = arith.constant 0 : index
    %c0_155 = arith.constant 0 : index
    %211 = vector.load %arg4[%c0_153, %c0_154, %c0_155] : memref<16x9x128xf32, #tpu.memory_space<vmem>>, vector<9x9x128xf32>
    %c5_156 = arith.constant 5 : index
    %212 = memref.load %arg2[%c5_156] : memref<64xf32, #tpu.memory_space<smem>>
    %213 = vector.broadcast %212 : f32 to vector<9x9x128xf32>
    %214 = arith.mulf %211, %213 : vector<9x9x128xf32>
    %215 = arith.addf %208, %214 : vector<9x9x128xf32>
    %c1_157 = arith.constant 1 : index
    %c0_158 = arith.constant 0 : index
    %c0_159 = arith.constant 0 : index
    %216 = vector.load %arg4[%c1_157, %c0_158, %c0_159] : memref<16x9x128xf32, #tpu.memory_space<vmem>>, vector<9x9x128xf32>
    %c13 = arith.constant 13 : index
    %217 = memref.load %arg2[%c13] : memref<64xf32, #tpu.memory_space<smem>>
    %218 = vector.broadcast %217 : f32 to vector<9x9x128xf32>
    %219 = arith.mulf %216, %218 : vector<9x9x128xf32>
    %220 = arith.addf %215, %219 : vector<9x9x128xf32>
    %c2_160 = arith.constant 2 : index
    %c0_161 = arith.constant 0 : index
    %c0_162 = arith.constant 0 : index
    %221 = vector.load %arg4[%c2_160, %c0_161, %c0_162] : memref<16x9x128xf32, #tpu.memory_space<vmem>>, vector<9x9x128xf32>
    %c21 = arith.constant 21 : index
    %222 = memref.load %arg2[%c21] : memref<64xf32, #tpu.memory_space<smem>>
    %223 = vector.broadcast %222 : f32 to vector<9x9x128xf32>
    %224 = arith.mulf %221, %223 : vector<9x9x128xf32>
    %225 = arith.addf %220, %224 : vector<9x9x128xf32>
    %c3_163 = arith.constant 3 : index
    %c0_164 = arith.constant 0 : index
    %c0_165 = arith.constant 0 : index
    %226 = vector.load %arg4[%c3_163, %c0_164, %c0_165] : memref<16x9x128xf32, #tpu.memory_space<vmem>>, vector<9x9x128xf32>
    %c29 = arith.constant 29 : index
    %227 = memref.load %arg2[%c29] : memref<64xf32, #tpu.memory_space<smem>>
    %228 = vector.broadcast %227 : f32 to vector<9x9x128xf32>
    %229 = arith.mulf %226, %228 : vector<9x9x128xf32>
    %230 = arith.addf %225, %229 : vector<9x9x128xf32>
    %c4_166 = arith.constant 4 : index
    %c0_167 = arith.constant 0 : index
    %c0_168 = arith.constant 0 : index
    %231 = vector.load %arg4[%c4_166, %c0_167, %c0_168] : memref<16x9x128xf32, #tpu.memory_space<vmem>>, vector<9x9x128xf32>
    %c37 = arith.constant 37 : index
    %232 = memref.load %arg2[%c37] : memref<64xf32, #tpu.memory_space<smem>>
    %233 = vector.broadcast %232 : f32 to vector<9x9x128xf32>
    %234 = arith.mulf %231, %233 : vector<9x9x128xf32>
    %235 = arith.addf %230, %234 : vector<9x9x128xf32>
    %c5_169 = arith.constant 5 : index
    %c0_170 = arith.constant 0 : index
    %c0_171 = arith.constant 0 : index
    %236 = vector.load %arg4[%c5_169, %c0_170, %c0_171] : memref<16x9x128xf32, #tpu.memory_space<vmem>>, vector<9x9x128xf32>
    %c45 = arith.constant 45 : index
    %237 = memref.load %arg2[%c45] : memref<64xf32, #tpu.memory_space<smem>>
    %238 = vector.broadcast %237 : f32 to vector<9x9x128xf32>
    %239 = arith.mulf %236, %238 : vector<9x9x128xf32>
    %240 = arith.addf %235, %239 : vector<9x9x128xf32>
    %c6_172 = arith.constant 6 : index
    %c0_173 = arith.constant 0 : index
    %c0_174 = arith.constant 0 : index
    %241 = vector.load %arg4[%c6_172, %c0_173, %c0_174] : memref<16x9x128xf32, #tpu.memory_space<vmem>>, vector<9x9x128xf32>
    %c53 = arith.constant 53 : index
    %242 = memref.load %arg2[%c53] : memref<64xf32, #tpu.memory_space<smem>>
    %243 = vector.broadcast %242 : f32 to vector<9x9x128xf32>
    %244 = arith.mulf %241, %243 : vector<9x9x128xf32>
    %245 = arith.addf %240, %244 : vector<9x9x128xf32>
    %c7_175 = arith.constant 7 : index
    %c0_176 = arith.constant 0 : index
    %c0_177 = arith.constant 0 : index
    %246 = vector.load %arg4[%c7_175, %c0_176, %c0_177] : memref<16x9x128xf32, #tpu.memory_space<vmem>>, vector<9x9x128xf32>
    %c61 = arith.constant 61 : index
    %247 = memref.load %arg2[%c61] : memref<64xf32, #tpu.memory_space<smem>>
    %248 = vector.broadcast %247 : f32 to vector<9x9x128xf32>
    %249 = arith.mulf %246, %248 : vector<9x9x128xf32>
    %250 = arith.addf %245, %249 : vector<9x9x128xf32>
    %c0_178 = arith.constant 0 : index
    %c6_179 = arith.constant 6 : index
    %c0_180 = arith.constant 0 : index
    %251 = vector.load %arg1[%c0_178, %c6_179, %c0_180] : memref<16x16x128xf32, #tpu.memory_space<vmem>>, vector<16x9x128xf32>
    %c0_181 = arith.constant 0 : index
    %c0_182 = arith.constant 0 : index
    %c0_183 = arith.constant 0 : index
    %252 = vector.load %arg4[%c0_181, %c0_182, %c0_183] : memref<16x9x128xf32, #tpu.memory_space<vmem>>, vector<16x9x128xf32>
    tpu.vector_store %arg4[%c0_181, %c0_182, %c0_183], %251 {strides = array<i32>} : memref<16x9x128xf32, #tpu.memory_space<vmem>>, vector<16x9x128xf32>,
    %c0_184 = arith.constant 0 : index
    %c0_185 = arith.constant 0 : index
    %c0_186 = arith.constant 0 : index
    %253 = vector.load %arg4[%c0_184, %c0_185, %c0_186] : memref<16x9x128xf32, #tpu.memory_space<vmem>>, vector<9x9x128xf32>
    %c6_187 = arith.constant 6 : index
    %254 = memref.load %arg2[%c6_187] : memref<64xf32, #tpu.memory_space<smem>>
    %255 = vector.broadcast %254 : f32 to vector<9x9x128xf32>
    %256 = arith.mulf %253, %255 : vector<9x9x128xf32>
    %257 = arith.addf %250, %256 : vector<9x9x128xf32>
    %c1_188 = arith.constant 1 : index
    %c0_189 = arith.constant 0 : index
    %c0_190 = arith.constant 0 : index
    %258 = vector.load %arg4[%c1_188, %c0_189, %c0_190] : memref<16x9x128xf32, #tpu.memory_space<vmem>>, vector<9x9x128xf32>
    %c14 = arith.constant 14 : index
    %259 = memref.load %arg2[%c14] : memref<64xf32, #tpu.memory_space<smem>>
    %260 = vector.broadcast %259 : f32 to vector<9x9x128xf32>
    %261 = arith.mulf %258, %260 : vector<9x9x128xf32>
    %262 = arith.addf %257, %261 : vector<9x9x128xf32>
    %c2_191 = arith.constant 2 : index
    %c0_192 = arith.constant 0 : index
    %c0_193 = arith.constant 0 : index
    %263 = vector.load %arg4[%c2_191, %c0_192, %c0_193] : memref<16x9x128xf32, #tpu.memory_space<vmem>>, vector<9x9x128xf32>
    %c22 = arith.constant 22 : index
    %264 = memref.load %arg2[%c22] : memref<64xf32, #tpu.memory_space<smem>>
    %265 = vector.broadcast %264 : f32 to vector<9x9x128xf32>
    %266 = arith.mulf %263, %265 : vector<9x9x128xf32>
    %267 = arith.addf %262, %266 : vector<9x9x128xf32>
    %c3_194 = arith.constant 3 : index
    %c0_195 = arith.constant 0 : index
    %c0_196 = arith.constant 0 : index
    %268 = vector.load %arg4[%c3_194, %c0_195, %c0_196] : memref<16x9x128xf32, #tpu.memory_space<vmem>>, vector<9x9x128xf32>
    %c30 = arith.constant 30 : index
    %269 = memref.load %arg2[%c30] : memref<64xf32, #tpu.memory_space<smem>>
    %270 = vector.broadcast %269 : f32 to vector<9x9x128xf32>
    %271 = arith.mulf %268, %270 : vector<9x9x128xf32>
    %272 = arith.addf %267, %271 : vector<9x9x128xf32>
    %c4_197 = arith.constant 4 : index
    %c0_198 = arith.constant 0 : index
    %c0_199 = arith.constant 0 : index
    %273 = vector.load %arg4[%c4_197, %c0_198, %c0_199] : memref<16x9x128xf32, #tpu.memory_space<vmem>>, vector<9x9x128xf32>
    %c38 = arith.constant 38 : index
    %274 = memref.load %arg2[%c38] : memref<64xf32, #tpu.memory_space<smem>>
    %275 = vector.broadcast %274 : f32 to vector<9x9x128xf32>
    %276 = arith.mulf %273, %275 : vector<9x9x128xf32>
    %277 = arith.addf %272, %276 : vector<9x9x128xf32>
    %c5_200 = arith.constant 5 : index
    %c0_201 = arith.constant 0 : index
    %c0_202 = arith.constant 0 : index
    %278 = vector.load %arg4[%c5_200, %c0_201, %c0_202] : memref<16x9x128xf32, #tpu.memory_space<vmem>>, vector<9x9x128xf32>
    %c46 = arith.constant 46 : index
    %279 = memref.load %arg2[%c46] : memref<64xf32, #tpu.memory_space<smem>>
    %280 = vector.broadcast %279 : f32 to vector<9x9x128xf32>
    %281 = arith.mulf %278, %280 : vector<9x9x128xf32>
    %282 = arith.addf %277, %281 : vector<9x9x128xf32>
    %c6_203 = arith.constant 6 : index
    %c0_204 = arith.constant 0 : index
    %c0_205 = arith.constant 0 : index
    %283 = vector.load %arg4[%c6_203, %c0_204, %c0_205] : memref<16x9x128xf32, #tpu.memory_space<vmem>>, vector<9x9x128xf32>
    %c54 = arith.constant 54 : index
    %284 = memref.load %arg2[%c54] : memref<64xf32, #tpu.memory_space<smem>>
    %285 = vector.broadcast %284 : f32 to vector<9x9x128xf32>
    %286 = arith.mulf %283, %285 : vector<9x9x128xf32>
    %287 = arith.addf %282, %286 : vector<9x9x128xf32>
    %c7_206 = arith.constant 7 : index
    %c0_207 = arith.constant 0 : index
    %c0_208 = arith.constant 0 : index
    %288 = vector.load %arg4[%c7_206, %c0_207, %c0_208] : memref<16x9x128xf32, #tpu.memory_space<vmem>>, vector<9x9x128xf32>
    %c62 = arith.constant 62 : index
    %289 = memref.load %arg2[%c62] : memref<64xf32, #tpu.memory_space<smem>>
    %290 = vector.broadcast %289 : f32 to vector<9x9x128xf32>
    %291 = arith.mulf %288, %290 : vector<9x9x128xf32>
    %292 = arith.addf %287, %291 : vector<9x9x128xf32>
    %c0_209 = arith.constant 0 : index
    %c7_210 = arith.constant 7 : index
    %c0_211 = arith.constant 0 : index
    %293 = vector.load %arg1[%c0_209, %c7_210, %c0_211] : memref<16x16x128xf32, #tpu.memory_space<vmem>>, vector<16x9x128xf32>
    %c0_212 = arith.constant 0 : index
    %c0_213 = arith.constant 0 : index
    %c0_214 = arith.constant 0 : index
    %294 = vector.load %arg4[%c0_212, %c0_213, %c0_214] : memref<16x9x128xf32, #tpu.memory_space<vmem>>, vector<16x9x128xf32>
    tpu.vector_store %arg4[%c0_212, %c0_213, %c0_214], %293 {strides = array<i32>} : memref<16x9x128xf32, #tpu.memory_space<vmem>>, vector<16x9x128xf32>,
    %c0_215 = arith.constant 0 : index
    %c0_216 = arith.constant 0 : index
    %c0_217 = arith.constant 0 : index
    %295 = vector.load %arg4[%c0_215, %c0_216, %c0_217] : memref<16x9x128xf32, #tpu.memory_space<vmem>>, vector<9x9x128xf32>
    %c7_218 = arith.constant 7 : index
    %296 = memref.load %arg2[%c7_218] : memref<64xf32, #tpu.memory_space<smem>>
    %297 = vector.broadcast %296 : f32 to vector<9x9x128xf32>
    %298 = arith.mulf %295, %297 : vector<9x9x128xf32>
    %299 = arith.addf %292, %298 : vector<9x9x128xf32>
    %c1_219 = arith.constant 1 : index
    %c0_220 = arith.constant 0 : index
    %c0_221 = arith.constant 0 : index
    %300 = vector.load %arg4[%c1_219, %c0_220, %c0_221] : memref<16x9x128xf32, #tpu.memory_space<vmem>>, vector<9x9x128xf32>
    %c15 = arith.constant 15 : index
    %301 = memref.load %arg2[%c15] : memref<64xf32, #tpu.memory_space<smem>>
    %302 = vector.broadcast %301 : f32 to vector<9x9x128xf32>
    %303 = arith.mulf %300, %302 : vector<9x9x128xf32>
    %304 = arith.addf %299, %303 : vector<9x9x128xf32>
    %c2_222 = arith.constant 2 : index
    %c0_223 = arith.constant 0 : index
    %c0_224 = arith.constant 0 : index
    %305 = vector.load %arg4[%c2_222, %c0_223, %c0_224] : memref<16x9x128xf32, #tpu.memory_space<vmem>>, vector<9x9x128xf32>
    %c23 = arith.constant 23 : index
    %306 = memref.load %arg2[%c23] : memref<64xf32, #tpu.memory_space<smem>>
    %307 = vector.broadcast %306 : f32 to vector<9x9x128xf32>
    %308 = arith.mulf %305, %307 : vector<9x9x128xf32>
    %309 = arith.addf %304, %308 : vector<9x9x128xf32>
    %c3_225 = arith.constant 3 : index
    %c0_226 = arith.constant 0 : index
    %c0_227 = arith.constant 0 : index
    %310 = vector.load %arg4[%c3_225, %c0_226, %c0_227] : memref<16x9x128xf32, #tpu.memory_space<vmem>>, vector<9x9x128xf32>
    %c31 = arith.constant 31 : index
    %311 = memref.load %arg2[%c31] : memref<64xf32, #tpu.memory_space<smem>>
    %312 = vector.broadcast %311 : f32 to vector<9x9x128xf32>
    %313 = arith.mulf %310, %312 : vector<9x9x128xf32>
    %314 = arith.addf %309, %313 : vector<9x9x128xf32>
    %c4_228 = arith.constant 4 : index
    %c0_229 = arith.constant 0 : index
    %c0_230 = arith.constant 0 : index
    %315 = vector.load %arg4[%c4_228, %c0_229, %c0_230] : memref<16x9x128xf32, #tpu.memory_space<vmem>>, vector<9x9x128xf32>
    %c39 = arith.constant 39 : index
    %316 = memref.load %arg2[%c39] : memref<64xf32, #tpu.memory_space<smem>>
    %317 = vector.broadcast %316 : f32 to vector<9x9x128xf32>
    %318 = arith.mulf %315, %317 : vector<9x9x128xf32>
    %319 = arith.addf %314, %318 : vector<9x9x128xf32>
    %c5_231 = arith.constant 5 : index
    %c0_232 = arith.constant 0 : index
    %c0_233 = arith.constant 0 : index
    %320 = vector.load %arg4[%c5_231, %c0_232, %c0_233] : memref<16x9x128xf32, #tpu.memory_space<vmem>>, vector<9x9x128xf32>
    %c47 = arith.constant 47 : index
    %321 = memref.load %arg2[%c47] : memref<64xf32, #tpu.memory_space<smem>>
    %322 = vector.broadcast %321 : f32 to vector<9x9x128xf32>
    %323 = arith.mulf %320, %322 : vector<9x9x128xf32>
    %324 = arith.addf %319, %323 : vector<9x9x128xf32>
    %c6_234 = arith.constant 6 : index
    %c0_235 = arith.constant 0 : index
    %c0_236 = arith.constant 0 : index
    %325 = vector.load %arg4[%c6_234, %c0_235, %c0_236] : memref<16x9x128xf32, #tpu.memory_space<vmem>>, vector<9x9x128xf32>
    %c55 = arith.constant 55 : index
    %326 = memref.load %arg2[%c55] : memref<64xf32, #tpu.memory_space<smem>>
    %327 = vector.broadcast %326 : f32 to vector<9x9x128xf32>
    %328 = arith.mulf %325, %327 : vector<9x9x128xf32>
    %329 = arith.addf %324, %328 : vector<9x9x128xf32>
    %c7_237 = arith.constant 7 : index
    %c0_238 = arith.constant 0 : index
    %c0_239 = arith.constant 0 : index
    %330 = vector.load %arg4[%c7_237, %c0_238, %c0_239] : memref<16x9x128xf32, #tpu.memory_space<vmem>>, vector<9x9x128xf32>
    %c63 = arith.constant 63 : index
    %331 = memref.load %arg2[%c63] : memref<64xf32, #tpu.memory_space<smem>>
    %332 = vector.broadcast %331 : f32 to vector<9x9x128xf32>
    %333 = arith.mulf %330, %332 : vector<9x9x128xf32>
    %334 = arith.addf %329, %333 : vector<9x9x128xf32>
    %c0_240 = arith.constant 0 : index
    %c0_241 = arith.constant 0 : index
    %c0_242 = arith.constant 0 : index
    %335 = vector.load %arg3[%c0_240, %c0_241, %c0_242] : memref<9x9x128xf32, #tpu.memory_space<vmem>>, vector<9x9x128xf32>
    tpu.vector_store %arg3[%c0_240, %c0_241, %c0_242], %334 {strides = array<i32>} : memref<9x9x128xf32, #tpu.memory_space<vmem>>, vector<9x9x128xf32>,
    return
  }
  func.func @transform_0(%arg0: i32) -> (i32, i32, i32) {
    %c0_i32 = arith.constant 0 : i32
    %c0_i32_0 = arith.constant 0 : i32
    %c0_i32_1 = arith.constant 0 : i32
    return %c0_i32, %c0_i32_0, %arg0 : i32, i32, i32
  }
  func.func @transform_1(%arg0: i32) -> i32 {
    %c0_i32 = arith.constant 0 : i32
    %c0_i32_0 = arith.constant 0 : i32
    return %c0_i32 : i32
  }
  func.func @transform_2(%arg0: i32) -> (i32, i32, i32) {
    %c0_i32 = arith.constant 0 : i32
    %c0_i32_0 = arith.constant 0 : i32
    %c0_i32_1 = arith.constant 0 : i32
    return %c0_i32, %c0_i32_0, %arg0 : i32, i32, i32
  }
}

</mosaic_0001>

<llo_original>
// kernel: tpu_custom_call.1
$region0: #{tpu_custom_call.1}
  #allocation0 [shape = 'u32[]', space=smem, size = 0x4, offset = 0x4, fixed_abs, tag = 'smem constant byte address 0x4 - core index']
  #allocation1 [shape = 'u32[72,128]{1,0:T(1,128)}', space=vmem, size = 0x9000, scoped, tag = 'internal scratch']
  #allocation2 [shape = 'f32[16,9,128]{2,1,0:T(8,128)}', space=vmem, size = 0x20000, scoped, tag = 'scratch operand']
  %s0 = inlined_call_operand.hbm [shape: f32[16,16,128], index: 0, kind: input, shape index: {}]
  %s1 = inlined_call_operand.hbm [shape: f32[64], index: 1, kind: input, shape index: {}]
  %s2 = inlined_call_operand.hbm [shape: f32[9,9,128], index: 2, kind: output, shape index: {}]
  %s3 = sld [smem:[#allocation0]]
  $region26: #{tpu_custom_call.1} parent=0
    _
  %s5 = ssub.s32 1, %s3
  %s6 = scalar_select 0, %s5, %s3
  $region1: #{tpu_custom_call.1} parent=0
    #allocation3 [shape = 'u8[131072]{0}', space=vmem, size = 0x20000, scoped, tag = 'input window, operand 0, single buffered']
    #allocation4 [shape = 's32[1]{0}', space=sflag, size = 0x4, scoped, tag = 'scoped memory for tpu_custom_call.1']
    #allocation5 [shape = 's32[1]{0}', space=sflag, size = 0x4, scoped, tag = 'scoped memory for tpu_custom_call.1']
    #allocation6 [shape = 's32[1]{0}', space=sflag, size = 0x4, scoped, tag = 'scoped memory for tpu_custom_call.1']
    #allocation7 [shape = 'u8[512]{0}', space=smem, size = 0x200, scoped, tag = 'input window, operand 1, single buffered']
    #allocation8 [shape = 'u8[73728]{0}', space=vmem, size = 0x12000, scoped, tag = 'output window, operand 0, single buffered']
    %7 = vsyncpa [#allocation4], 0
    %8 = vsyncpa [#allocation6], 0
    %9 = vsyncpa [#allocation5], 0
    // Predicated region
    $region2: #{tpu_custom_call.1} parent=1 // pred_check
      _
    $region3: #{tpu_custom_call.1} parent=1 // pred_check_branch
      %11 = sbr.rel (0) target = $region5
    $region4: #{tpu_custom_call.1} parent=1 // pred_region
      %13 = vsyncadd [#allocation4], 0
      %s14 = sshll.u32 %s0, 4
      %s15 = int_to_ptr.hbm [resolvable:$true] %s14
      %s16 = sshll.u32 [#allocation3], 4
      %s17 = int_to_ptr.vmem [resolvable:$true] %s16
      %22 = dma.hbm_to_vmem [thread:$0]  %s15, 4096, %s17, [#allocation4], 128, 128, 8
    $region5: #{tpu_custom_call.1} parent=1 // pred_fallthru
      _
    // Predicated region
    $region6: #{tpu_custom_call.1} parent=1 // pred_check
      _
    $region7: #{tpu_custom_call.1} parent=1 // pred_check_branch
      %24 = sbr.rel (0) target = $region9
    $region8: #{tpu_custom_call.1} parent=1 // pred_region
      %26 = vsyncadd [#allocation6], 0
      %s28 = sshll.u32 %s1, 4
      %s29 = int_to_ptr.hbm [resolvable:$true] %s28
      %31 = dma.hbm_to_smem %s29, 16, [#allocation7], [#allocation6]
    $region9: #{tpu_custom_call.1} parent=1 // pred_fallthru
      _
    // Predicated region
    $region10: #{tpu_custom_call.1} parent=1 // pred_check
      _
    $region11: #{tpu_custom_call.1} parent=1 // pred_check_branch
      %33 = sbr.rel (0) target = $region13
    $region12: #{tpu_custom_call.1} parent=1 // pred_region
      %35 = dma.done [#allocation4], 4096
    $region13: #{tpu_custom_call.1} parent=1 // pred_fallthru
      _
    // Predicated region
    $region14: #{tpu_custom_call.1} parent=1 // pred_check
      _
    $region15: #{tpu_custom_call.1} parent=1 // pred_check_branch
      %37 = sbr.rel (0) target = $region17
    $region16: #{tpu_custom_call.1} parent=1 // pred_region
      %39 = dma.done [#allocation6], 16
    $region17: #{tpu_custom_call.1} parent=1 // pred_fallthru
      _
    %40 = sfence
    %v41 = vld [vmem:[#allocation3] sm:$0xff]
    %v42 = vld [vmem:[#allocation3 + $0x8] sm:$0x1]
    %v43 = vld [vmem:[#allocation3 + $0x10] sm:$0xff]
    %v44 = vld [vmem:[#allocation3 + $0x18] sm:$0x1]
    %v45 = vld [vmem:[#allocation3 + $0x20] sm:$0xff]
    %v46 = vld [vmem:[#allocation3 + $0x28] sm:$0x1]
    %v47 = vld [vmem:[#allocation3 + $0x30] sm:$0xff]
    %v48 = vld [vmem:[#allocation3 + $0x38] sm:$0x1]
    %v49 = vld [vmem:[#allocation3 + $0x40] sm:$0xff]
    %v50 = vld [vmem:[#allocation3 + $0x48] sm:$0x1]
    %v51 = vld [vmem:[#allocation3 + $0x50] sm:$0xff]
    %v52 = vld [vmem:[#allocation3 + $0x58] sm:$0x1]
    %v53 = vld [vmem:[#allocation3 + $0x60] sm:$0xff]
    %v54 = vld [vmem:[#allocation3 + $0x68] sm:$0x1]
    %v55 = vld [vmem:[#allocation3 + $0x70] sm:$0xff]
    %v56 = vld [vmem:[#allocation3 + $0x78] sm:$0x1]
    %v57 = vld [vmem:[#allocation3 + $0x80] sm:$0xff]
    %v58 = vld [vmem:[#allocation3 + $0x88] sm:$0x1]
    %v59 = vld [vmem:[#allocation3 + $0x90] sm:$0xff]
    %v60 = vld [vmem:[#allocation3 + $0x98] sm:$0x1]
    %v61 = vld [vmem:[#allocation3 + $0xa0] sm:$0xff]
    %v62 = vld [vmem:[#allocation3 + $0xa8] sm:$0x1]
    %v63 = vld [vmem:[#allocation3 + $0xb0] sm:$0xff]
    %v64 = vld [vmem:[#allocation3 + $0xb8] sm:$0x1]
    %v65 = vld [vmem:[#allocation3 + $0xc0] sm:$0xff]
    %v66 = vld [vmem:[#allocation3 + $0xc8] sm:$0x1]
    %v67 = vld [vmem:[#allocation3 + $0xd0] sm:$0xff]
    %v68 = vld [vmem:[#allocation3 + $0xd8] sm:$0x1]
    %v69 = vld [vmem:[#allocation3 + $0xe0] sm:$0xff]
    %v70 = vld [vmem:[#allocation3 + $0xe8] sm:$0x1]
    %v71 = vld [vmem:[#allocation3 + $0xf0] sm:$0xff]
    %v72 = vld [vmem:[#allocation3 + $0xf8] sm:$0x1]
    %73 = vst [vmem:[#allocation2] sm:$0xff] %v41
    %74 = vst [vmem:[#allocation2 + $0x8] sm:$0x1] %v42
    %75 = vst [vmem:[#allocation2 + $0x10] sm:$0xff] %v43
    %76 = vst [vmem:[#allocation2 + $0x18] sm:$0x1] %v44
    %77 = vst [vmem:[#allocation2 + $0x20] sm:$0xff] %v45
    %78 = vst [vmem:[#allocation2 + $0x28] sm:$0x1] %v46
    %79 = vst [vmem:[#allocation2 + $0x30] sm:$0xff] %v47
    %80 = vst [vmem:[#allocation2 + $0x38] sm:$0x1] %v48
    %81 = vst [vmem:[#allocation2 + $0x40] sm:$0xff] %v49
    %82 = vst [vmem:[#allocation2 + $0x48] sm:$0x1] %v50
    %83 = vst [vmem:[#allocation2 + $0x50] sm:$0xff] %v51
    %84 = vst [vmem:[#allocation2 + $0x58] sm:$0x1] %v52
    %85 = vst [vmem:[#allocation2 + $0x60] sm:$0xff] %v53
    %86 = vst [vmem:[#allocation2 + $0x68] sm:$0x1] %v54
    %87 = vst [vmem:[#allocation2 + $0x70] sm:$0xff] %v55
    %88 = vst [vmem:[#allocation2 + $0x78] sm:$0x1] %v56
    %89 = vst [vmem:[#allocation2 + $0x80] sm:$0xff] %v57
    %90 = vst [vmem:[#allocation2 + $0x88] sm:$0x1] %v58
    %91 = vst [vmem:[#allocation2 + $0x90] sm:$0xff] %v59
    %92 = vst [vmem:[#allocation2 + $0x98] sm:$0x1] %v60
    %93 = vst [vmem:[#allocation2 + $0xa0] sm:$0xff] %v61
    %94 = vst [vmem:[#allocation2 + $0xa8] sm:$0x1] %v62
    %95 = vst [vmem:[#allocation2 + $0xb0] sm:$0xff] %v63
    %96 = vst [vmem:[#allocation2 + $0xb8] sm:$0x1] %v64
    %97 = vst [vmem:[#allocation2 + $0xc0] sm:$0xff] %v65
    %98 = vst [vmem:[#allocation2 + $0xc8] sm:$0x1] %v66
    %99 = vst [vmem:[#allocation2 + $0xd0] sm:$0xff] %v67
    %100 = vst [vmem:[#allocation2 + $0xd8] sm:$0x1] %v68
    %101 = vst [vmem:[#allocation2 + $0xe0] sm:$0xff] %v69
    %102 = vst [vmem:[#allocation2 + $0xe8] sm:$0x1] %v70
    %103 = vst [vmem:[#allocation2 + $0xf0] sm:$0xff] %v71
    %104 = vst [vmem:[#allocation2 + $0xf8] sm:$0x1] %v72
    %v105 = vld [vmem:[#allocation2] sm:$0xff]
    %v106 = vld [vmem:[#allocation2 + $0x8] sm:$0x1]
    %v107 = vld [vmem:[#allocation2 + $0x10] sm:$0xff]
    %v108 = vld [vmem:[#allocation2 + $0x18] sm:$0x1]
    %v109 = vld [vmem:[#allocation2 + $0x20] sm:$0xff]
    %v110 = vld [vmem:[#allocation2 + $0x28] sm:$0x1]
    %v111 = vld [vmem:[#allocation2 + $0x30] sm:$0xff]
    %v112 = vld [vmem:[#allocation2 + $0x38] sm:$0x1]
    %v113 = vld [vmem:[#allocation2 + $0x40] sm:$0xff]
    %v114 = vld [vmem:[#allocation2 + $0x48] sm:$0x1]
    %v115 = vld [vmem:[#allocation2 + $0x50] sm:$0xff]
    %v116 = vld [vmem:[#allocation2 + $0x58] sm:$0x1]
    %v117 = vld [vmem:[#allocation2 + $0x60] sm:$0xff]
    %v118 = vld [vmem:[#allocation2 + $0x68] sm:$0x1]
    %v119 = vld [vmem:[#allocation2 + $0x70] sm:$0xff]
    %v120 = vld [vmem:[#allocation2 + $0x78] sm:$0x1]
    %v121 = vld [vmem:[#allocation2 + $0x80] sm:$0xff]
    %v122 = vld [vmem:[#allocation2 + $0x88] sm:$0x1]
    %s123 = sld [smem:[#allocation7]]
    %v124 = vstv %s123
    %v125 = vmul.f32 %v105, %v124
    %v126 = vmul.f32 %v106, %v124
    %v127 = vmul.f32 %v107, %v124
    %v128 = vmul.f32 %v108, %v124
    %v129 = vmul.f32 %v109, %v124
    %v130 = vmul.f32 %v110, %v124
    %v131 = vmul.f32 %v111, %v124
    %v132 = vmul.f32 %v112, %v124
    %v133 = vmul.f32 %v113, %v124
    %v134 = vmul.f32 %v114, %v124
    %v135 = vmul.f32 %v115, %v124
    %v136 = vmul.f32 %v116, %v124
    %v137 = vmul.f32 %v117, %v124
    %v138 = vmul.f32 %v118, %v124
    %v139 = vmul.f32 %v119, %v124
    %v140 = vmul.f32 %v120, %v124
    %v141 = vmul.f32 %v121, %v124
    %v142 = vmul.f32 %v122, %v124
    %s143 = scalar_lea.vmem [#allocation2], 16
    %v144 = vld [vmem:[%s143] sm:$0xff]
    %v145 = vld [vmem:[%s143 + $0x8] sm:$0x1]
    %v146 = vld [vmem:[%s143 + $0x10] sm:$0xff]
    %v147 = vld [vmem:[%s143 + $0x18] sm:$0x1]
    %v148 = vld [vmem:[%s143 + $0x20] sm:$0xff]
    %v149 = vld [vmem:[%s143 + $0x28] sm:$0x1]
    %v150 = vld [vmem:[%s143 + $0x30] sm:$0xff]
    %v151 = vld [vmem:[%s143 + $0x38] sm:$0x1]
    %v152 = vld [vmem:[%s143 + $0x40] sm:$0xff]
    %v153 = vld [vmem:[%s143 + $0x48] sm:$0x1]
    %v154 = vld [vmem:[%s143 + $0x50] sm:$0xff]
    %v155 = vld [vmem:[%s143 + $0x58] sm:$0x1]
    %v156 = vld [vmem:[%s143 + $0x60] sm:$0xff]
    %v157 = vld [vmem:[%s143 + $0x68] sm:$0x1]
    %v158 = vld [vmem:[%s143 + $0x70] sm:$0xff]
    %v159 = vld [vmem:[%s143 + $0x78] sm:$0x1]
    %v160 = vld [vmem:[%s143 + $0x80] sm:$0xff]
    %v161 = vld [vmem:[%s143 + $0x88] sm:$0x1]
    %s162 = sld [smem:[#allocation7 + $0x8]]
    %v163 = vstv %s162
    %v164 = vmul.f32 %v144, %v163
    %v165 = vmul.f32 %v145, %v163
    %v166 = vmul.f32 %v146, %v163
    %v167 = vmul.f32 %v147, %v163
    %v168 = vmul.f32 %v148, %v163
    %v169 = vmul.f32 %v149, %v163
    %v170 = vmul.f32 %v150, %v163
    %v171 = vmul.f32 %v151, %v163
    %v172 = vmul.f32 %v152, %v163
    %v173 = vmul.f32 %v153, %v163
    %v174 = vmul.f32 %v154, %v163
    %v175 = vmul.f32 %v155, %v163
    %v176 = vmul.f32 %v156, %v163
    %v177 = vmul.f32 %v157, %v163
    %v178 = vmul.f32 %v158, %v163
    %v179 = vmul.f32 %v159, %v163
    %v180 = vmul.f32 %v160, %v163
    %v181 = vmul.f32 %v161, %v163
    %v182 = vadd.f32 %v125, %v164
    %v183 = vadd.f32 %v126, %v165
    %v184 = vadd.f32 %v127, %v166
    %v185 = vadd.f32 %v128, %v167
    %v186 = vadd.f32 %v129, %v168
    %v187 = vadd.f32 %v130, %v169
    %v188 = vadd.f32 %v131, %v170
    %v189 = vadd.f32 %v132, %v171
    %v190 = vadd.f32 %v133, %v172
    %v191 = vadd.f32 %v134, %v173
    %v192 = vadd.f32 %v135, %v174
    %v193 = vadd.f32 %v136, %v175
    %v194 = vadd.f32 %v137, %v176
    %v195 = vadd.f32 %v138, %v177
    %v196 = vadd.f32 %v139, %v178
    %v197 = vadd.f32 %v140, %v179
    %v198 = vadd.f32 %v141, %v180
    %v199 = vadd.f32 %v142, %v181
    %s200 = scalar_lea.vmem [#allocation2], 32
    %v201 = vld [vmem:[%s200] sm:$0xff]
    %v202 = vld [vmem:[%s200 + $0x8] sm:$0x1]
    %v203 = vld [vmem:[%s200 + $0x10] sm:$0xff]
    %v204 = vld [vmem:[%s200 + $0x18] sm:$0x1]
    %v205 = vld [vmem:[%s200 + $0x20] sm:$0xff]
    %v206 = vld [vmem:[%s200 + $0x28] sm:$0x1]
    %v207 = vld [vmem:[%s200 + $0x30] sm:$0xff]
    %v208 = vld [vmem:[%s200 + $0x38] sm:$0x1]
    %v209 = vld [vmem:[%s200 + $0x40] sm:$0xff]
    %v210 = vld [vmem:[%s200 + $0x48] sm:$0x1]
    %v211 = vld [vmem:[%s200 + $0x50] sm:$0xff]
    %v212 = vld [vmem:[%s200 + $0x58] sm:$0x1]
    %v213 = vld [vmem:[%s200 + $0x60] sm:$0xff]
    %v214 = vld [vmem:[%s200 + $0x68] sm:$0x1]
    %v215 = vld [vmem:[%s200 + $0x70] sm:$0xff]
    %v216 = vld [vmem:[%s200 + $0x78] sm:$0x1]
    %v217 = vld [vmem:[%s200 + $0x80] sm:$0xff]
    %v218 = vld [vmem:[%s200 + $0x88] sm:$0x1]
    %s219 = sld [smem:[#allocation7 + $0x10]]
    %v220 = vstv %s219
    %v221 = vmul.f32 %v201, %v220
    %v222 = vmul.f32 %v202, %v220
    %v223 = vmul.f32 %v203, %v220
    %v224 = vmul.f32 %v204, %v220
    %v225 = vmul.f32 %v205, %v220
    %v226 = vmul.f32 %v206, %v220
    %v227 = vmul.f32 %v207, %v220
    %v228 = vmul.f32 %v208, %v220
    %v229 = vmul.f32 %v209, %v220
    %v230 = vmul.f32 %v210, %v220
    %v231 = vmul.f32 %v211, %v220
    %v232 = vmul.f32 %v212, %v220
    %v233 = vmul.f32 %v213, %v220
    %v234 = vmul.f32 %v214, %v220
    %v235 = vmul.f32 %v215, %v220
    %v236 = vmul.f32 %v216, %v220
    %v237 = vmul.f32 %v217, %v220
    %v238 = vmul.f32 %v218, %v220
    %v239 = vadd.f32 %v182, %v221
    %v240 = vadd.f32 %v183, %v222
    %v241 = vadd.f32 %v184, %v223
    %v242 = vadd.f32 %v185, %v224
    %v243 = vadd.f32 %v186, %v225
    %v244 = vadd.f32 %v187, %v226
    %v245 = vadd.f32 %v188, %v227
    %v246 = vadd.f32 %v189, %v228
    %v247 = vadd.f32 %v190, %v229
    %v248 = vadd.f32 %v191, %v230
    %v249 = vadd.f32 %v192, %v231
    %v250 = vadd.f32 %v193, %v232
    %v251 = vadd.f32 %v194, %v233
    %v252 = vadd.f32 %v195, %v234
    %v253 = vadd.f32 %v196, %v235
    %v254 = vadd.f32 %v197, %v236
    %v255 = vadd.f32 %v198, %v237
    %v256 = vadd.f32 %v199, %v238
    %s257 = scalar_lea.vmem [#allocation2], 48
    %v258 = vld [vmem:[%s257] sm:$0xff]
    %v259 = vld [vmem:[%s257 + $0x8] sm:$0x1]
    %v260 = vld [vmem:[%s257 + $0x10] sm:$0xff]
    %v261 = vld [vmem:[%s257 + $0x18] sm:$0x1]
    %v262 = vld [vmem:[%s257 + $0x20] sm:$0xff]
    %v263 = vld [vmem:[%s257 + $0x28] sm:$0x1]
    %v264 = vld [vmem:[%s257 + $0x30] sm:$0xff]
    %v265 = vld [vmem:[%s257 + $0x38] sm:$0x1]
    %v266 = vld [vmem:[%s257 + $0x40] sm:$0xff]
    %v267 = vld [vmem:[%s257 + $0x48] sm:$0x1]
    %v268 = vld [vmem:[%s257 + $0x50] sm:$0xff]
    %v269 = vld [vmem:[%s257 + $0x58] sm:$0x1]
    %v270 = vld [vmem:[%s257 + $0x60] sm:$0xff]
    %v271 = vld [vmem:[%s257 + $0x68] sm:$0x1]
    %v272 = vld [vmem:[%s257 + $0x70] sm:$0xff]
    %v273 = vld [vmem:[%s257 + $0x78] sm:$0x1]
    %v274 = vld [vmem:[%s257 + $0x80] sm:$0xff]
    %v275 = vld [vmem:[%s257 + $0x88] sm:$0x1]
    %s276 = sld [smem:[#allocation7 + $0x18]]
    %v277 = vstv %s276
    %v278 = vmul.f32 %v258, %v277
    %v279 = vmul.f32 %v259, %v277
    %v280 = vmul.f32 %v260, %v277
    %v281 = vmul.f32 %v261, %v277
    %v282 = vmul.f32 %v262, %v277
    %v283 = vmul.f32 %v263, %v277
    %v284 = vmul.f32 %v264, %v277
    %v285 = vmul.f32 %v265, %v277
    %v286 = vmul.f32 %v266, %v277
    %v287 = vmul.f32 %v267, %v277
    %v288 = vmul.f32 %v268, %v277
    %v289 = vmul.f32 %v269, %v277
    %v290 = vmul.f32 %v270, %v277
    %v291 = vmul.f32 %v271, %v277
    %v292 = vmul.f32 %v272, %v277
    %v293 = vmul.f32 %v273, %v277
    %v294 = vmul.f32 %v274, %v277
    %v295 = vmul.f32 %v275, %v277
    %v296 = vadd.f32 %v239, %v278
    %v297 = vadd.f32 %v240, %v279
    %v298 = vadd.f32 %v241, %v280
    %v299 = vadd.f32 %v242, %v281
    %v300 = vadd.f32 %v243, %v282
    %v301 = vadd.f32 %v244, %v283
    %v302 = vadd.f32 %v245, %v284
    %v303 = vadd.f32 %v246, %v285
    %v304 = vadd.f32 %v247, %v286
    %v305 = vadd.f32 %v248, %v287
    %v306 = vadd.f32 %v249, %v288
    %v307 = vadd.f32 %v250, %v289
    %v308 = vadd.f32 %v251, %v290
    %v309 = vadd.f32 %v252, %v291
    %v310 = vadd.f32 %v253, %v292
    %v311 = vadd.f32 %v254, %v293
    %v312 = vadd.f32 %v255, %v294
    %v313 = vadd.f32 %v256, %v295
    %s314 = scalar_lea.vmem [#allocation2], 64
    %v315 = vld [vmem:[%s314] sm:$0xff]
    %v316 = vld [vmem:[%s314 + $0x8] sm:$0x1]
    %v317 = vld [vmem:[%s314 + $0x10] sm:$0xff]
    %v318 = vld [vmem:[%s314 + $0x18] sm:$0x1]
    %v319 = vld [vmem:[%s314 + $0x20] sm:$0xff]
    %v320 = vld [vmem:[%s314 + $0x28] sm:$0x1]
    %v321 = vld [vmem:[%s314 + $0x30] sm:$0xff]
    %v322 = vld [vmem:[%s314 + $0x38] sm:$0x1]
    %v323 = vld [vmem:[%s314 + $0x40] sm:$0xff]
    %v324 = vld [vmem:[%s314 + $0x48] sm:$0x1]
    %v325 = vld [vmem:[%s314 + $0x50] sm:$0xff]
    %v326 = vld [vmem:[%s314 + $0x58] sm:$0x1]
    %v327 = vld [vmem:[%s314 + $0x60] sm:$0xff]
    %v328 = vld [vmem:[%s314 + $0x68] sm:$0x1]
    %v329 = vld [vmem:[%s314 + $0x70] sm:$0xff]
    %v330 = vld [vmem:[%s314 + $0x78] sm:$0x1]
    %v331 = vld [vmem:[%s314 + $0x80] sm:$0xff]
    %v332 = vld [vmem:[%s314 + $0x88] sm:$0x1]
    %s333 = sld [smem:[#allocation7 + $0x20]]
    %v334 = vstv %s333
    %v335 = vmul.f32 %v315, %v334
    %v336 = vmul.f32 %v316, %v334
    %v337 = vmul.f32 %v317, %v334
    %v338 = vmul.f32 %v318, %v334
    %v339 = vmul.f32 %v319, %v334
    %v340 = vmul.f32 %v320, %v334
    %v341 = vmul.f32 %v321, %v334
    %v342 = vmul.f32 %v322, %v334
    %v343 = vmul.f32 %v323, %v334
    %v344 = vmul.f32 %v324, %v334
    %v345 = vmul.f32 %v325, %v334
    %v346 = vmul.f32 %v326, %v334
    %v347 = vmul.f32 %v327, %v334
    %v348 = vmul.f32 %v328, %v334
    %v349 = vmul.f32 %v329, %v334
    %v350 = vmul.f32 %v330, %v334
    %v351 = vmul.f32 %v331, %v334
    %v352 = vmul.f32 %v332, %v334
    %v353 = vadd.f32 %v296, %v335
    %v354 = vadd.f32 %v297, %v336
    %v355 = vadd.f32 %v298, %v337
    %v356 = vadd.f32 %v299, %v338
    %v357 = vadd.f32 %v300, %v339
    %v358 = vadd.f32 %v301, %v340
    %v359 = vadd.f32 %v302, %v341
    %v360 = vadd.f32 %v303, %v342
    %v361 = vadd.f32 %v304, %v343
    %v362 = vadd.f32 %v305, %v344
    %v363 = vadd.f32 %v306, %v345
    %v364 = vadd.f32 %v307, %v346
    %v365 = vadd.f32 %v308, %v347
    %v366 = vadd.f32 %v309, %v348
    %v367 = vadd.f32 %v310, %v349
    %v368 = vadd.f32 %v311, %v350
    %v369 = vadd.f32 %v312, %v351
    %v370 = vadd.f32 %v313, %v352
    %s371 = scalar_lea.vmem [#allocation2], 80
    %v372 = vld [vmem:[%s371] sm:$0xff]
    %v373 = vld [vmem:[%s371 + $0x8] sm:$0x1]
    %v374 = vld [vmem:[%s371 + $0x10] sm:$0xff]
    %v375 = vld [vmem:[%s371 + $0x18] sm:$0x1]
    %v376 = vld [vmem:[%s371 + $0x20] sm:$0xff]
    %v377 = vld [vmem:[%s371 + $0x28] sm:$0x1]
    %v378 = vld [vmem:[%s371 + $0x30] sm:$0xff]
    %v379 = vld [vmem:[%s371 + $0x38] sm:$0x1]
    %v380 = vld [vmem:[%s371 + $0x40] sm:$0xff]
    %v381 = vld [vmem:[%s371 + $0x48] sm:$0x1]
    %v382 = vld [vmem:[%s371 + $0x50] sm:$0xff]
    %v383 = vld [vmem:[%s371 + $0x58] sm:$0x1]
    %v384 = vld [vmem:[%s371 + $0x60] sm:$0xff]
    %v385 = vld [vmem:[%s371 + $0x68] sm:$0x1]
    %v386 = vld [vmem:[%s371 + $0x70] sm:$0xff]
    %v387 = vld [vmem:[%s371 + $0x78] sm:$0x1]
    %v388 = vld [vmem:[%s371 + $0x80] sm:$0xff]
    %v389 = vld [vmem:[%s371 + $0x88] sm:$0x1]
    %s390 = sld [smem:[#allocation7 + $0x28]]
    %v391 = vstv %s390
    %v392 = vmul.f32 %v372, %v391
    %v393 = vmul.f32 %v373, %v391
    %v394 = vmul.f32 %v374, %v391
    %v395 = vmul.f32 %v375, %v391
    %v396 = vmul.f32 %v376, %v391
    %v397 = vmul.f32 %v377, %v391
    %v398 = vmul.f32 %v378, %v391
    %v399 = vmul.f32 %v379, %v391
    %v400 = vmul.f32 %v380, %v391
    %v401 = vmul.f32 %v381, %v391
    %v402 = vmul.f32 %v382, %v391
    %v403 = vmul.f32 %v383, %v391
    %v404 = vmul.f32 %v384, %v391
    %v405 = vmul.f32 %v385, %v391
    %v406 = vmul.f32 %v386, %v391
    %v407 = vmul.f32 %v387, %v391
    %v408 = vmul.f32 %v388, %v391
    %v409 = vmul.f32 %v389, %v391
    %v410 = vadd.f32 %v353, %v392
    %v411 = vadd.f32 %v354, %v393
    %v412 = vadd.f32 %v355, %v394
    %v413 = vadd.f32 %v356, %v395
    %v414 = vadd.f32 %v357, %v396
    %v415 = vadd.f32 %v358, %v397
    %v416 = vadd.f32 %v359, %v398
    %v417 = vadd.f32 %v360, %v399
    %v418 = vadd.f32 %v361, %v400
    %v419 = vadd.f32 %v362, %v401
    %v420 = vadd.f32 %v363, %v402
    %v421 = vadd.f32 %v364, %v403
    %v422 = vadd.f32 %v365, %v404
    %v423 = vadd.f32 %v366, %v405
    %v424 = vadd.f32 %v367, %v406
    %v425 = vadd.f32 %v368, %v407
    %v426 = vadd.f32 %v369, %v408
    %v427 = vadd.f32 %v370, %v409
    %s428 = scalar_lea.vmem [#allocation2], 96
    %v429 = vld [vmem:[%s428] sm:$0xff]
    %v430 = vld [vmem:[%s428 + $0x8] sm:$0x1]
    %v431 = vld [vmem:[%s428 + $0x10] sm:$0xff]
    %v432 = vld [vmem:[%s428 + $0x18] sm:$0x1]
    %v433 = vld [vmem:[%s428 + $0x20] sm:$0xff]
    %v434 = vld [vmem:[%s428 + $0x28] sm:$0x1]
    %v435 = vld [vmem:[%s428 + $0x30] sm:$0xff]
    %v436 = vld [vmem:[%s428 + $0x38] sm:$0x1]
    %v437 = vld [vmem:[%s428 + $0x40] sm:$0xff]
    %v438 = vld [vmem:[%s428 + $0x48] sm:$0x1]
    %v439 = vld [vmem:[%s428 + $0x50] sm:$0xff]
    %v440 = vld [vmem:[%s428 + $0x58] sm:$0x1]
    %v441 = vld [vmem:[%s428 + $0x60] sm:$0xff]
    %v442 = vld [vmem:[%s428 + $0x68] sm:$0x1]
    %v443 = vld [vmem:[%s428 + $0x70] sm:$0xff]
    %v444 = vld [vmem:[%s428 + $0x78] sm:$0x1]
    %v445 = vld [vmem:[%s428 + $0x80] sm:$0xff]
    %v446 = vld [vmem:[%s428 + $0x88] sm:$0x1]
    %s447 = sld [smem:[#allocation7 + $0x30]]
    %v448 = vstv %s447
    %v449 = vmul.f32 %v429, %v448
    %v450 = vmul.f32 %v430, %v448
    %v451 = vmul.f32 %v431, %v448
    %v452 = vmul.f32 %v432, %v448
    %v453 = vmul.f32 %v433, %v448
    %v454 = vmul.f32 %v434, %v448
    %v455 = vmul.f32 %v435, %v448
    %v456 = vmul.f32 %v436, %v448
    %v457 = vmul.f32 %v437, %v448
    %v458 = vmul.f32 %v438, %v448
    %v459 = vmul.f32 %v439, %v448
    %v460 = vmul.f32 %v440, %v448
    %v461 = vmul.f32 %v441, %v448
    %v462 = vmul.f32 %v442, %v448
    %v463 = vmul.f32 %v443, %v448
    %v464 = vmul.f32 %v444, %v448
    %v465 = vmul.f32 %v445, %v448
    %v466 = vmul.f32 %v446, %v448
    %v467 = vadd.f32 %v410, %v449
    %v468 = vadd.f32 %v411, %v450
    %v469 = vadd.f32 %v412, %v451
    %v470 = vadd.f32 %v413, %v452
    %v471 = vadd.f32 %v414, %v453
    %v472 = vadd.f32 %v415, %v454
    %v473 = vadd.f32 %v416, %v455
    %v474 = vadd.f32 %v417, %v456
    %v475 = vadd.f32 %v418, %v457
    %v476 = vadd.f32 %v419, %v458
    %v477 = vadd.f32 %v420, %v459
    %v478 = vadd.f32 %v421, %v460
    %v479 = vadd.f32 %v422, %v461
    %v480 = vadd.f32 %v423, %v462
    %v481 = vadd.f32 %v424, %v463
    %v482 = vadd.f32 %v425, %v464
    %v483 = vadd.f32 %v426, %v465
    %v484 = vadd.f32 %v427, %v466
    %s485 = scalar_lea.vmem [#allocation2], 112
    %v486 = vld [vmem:[%s485] sm:$0xff]
    %v487 = vld [vmem:[%s485 + $0x8] sm:$0x1]
    %v488 = vld [vmem:[%s485 + $0x10] sm:$0xff]
    %v489 = vld [vmem:[%s485 + $0x18] sm:$0x1]
    %v490 = vld [vmem:[%s485 + $0x20] sm:$0xff]
    %v491 = vld [vmem:[%s485 + $0x28] sm:$0x1]
    %v492 = vld [vmem:[%s485 + $0x30] sm:$0xff]
    %v493 = vld [vmem:[%s485 + $0x38] sm:$0x1]
    %v494 = vld [vmem:[%s485 + $0x40] sm:$0xff]
    %v495 = vld [vmem:[%s485 + $0x48] sm:$0x1]
    %v496 = vld [vmem:[%s485 + $0x50] sm:$0xff]
    %v497 = vld [vmem:[%s485 + $0x58] sm:$0x1]
    %v498 = vld [vmem:[%s485 + $0x60] sm:$0xff]
    %v499 = vld [vmem:[%s485 + $0x68] sm:$0x1]
    %v500 = vld [vmem:[%s485 + $0x70] sm:$0xff]
    %v501 = vld [vmem:[%s485 + $0x78] sm:$0x1]
    %v502 = vld [vmem:[%s485 + $0x80] sm:$0xff]
    %v503 = vld [vmem:[%s485 + $0x88] sm:$0x1]
    %s504 = sld [smem:[#allocation7 + $0x38]]
    %v505 = vstv %s504
    %v506 = vmul.f32 %v486, %v505
    %v507 = vmul.f32 %v487, %v505
    %v508 = vmul.f32 %v488, %v505
    %v509 = vmul.f32 %v489, %v505
    %v510 = vmul.f32 %v490, %v505
    %v511 = vmul.f32 %v491, %v505
    %v512 = vmul.f32 %v492, %v505
    %v513 = vmul.f32 %v493, %v505
    %v514 = vmul.f32 %v494, %v505
    %v515 = vmul.f32 %v495, %v505
    %v516 = vmul.f32 %v496, %v505
    %v517 = vmul.f32 %v497, %v505
    %v518 = vmul.f32 %v498, %v505
    %v519 = vmul.f32 %v499, %v505
    %v520 = vmul.f32 %v500, %v505
    %v521 = vmul.f32 %v501, %v505
    %v522 = vmul.f32 %v502, %v505
    %v523 = vmul.f32 %v503, %v505
    %v524 = vadd.f32 %v467, %v506
    %v525 = vadd.f32 %v468, %v507
    %v526 = vadd.f32 %v469, %v508
    %v527 = vadd.f32 %v470, %v509
    %v528 = vadd.f32 %v471, %v510
    %v529 = vadd.f32 %v472, %v511
    %v530 = vadd.f32 %v473, %v512
    %v531 = vadd.f32 %v474, %v513
    %v532 = vadd.f32 %v475, %v514
    %v533 = vadd.f32 %v476, %v515
    %v534 = vadd.f32 %v477, %v516
    %v535 = vadd.f32 %v478, %v517
    %v536 = vadd.f32 %v479, %v518
    %v537 = vadd.f32 %v480, %v519
    %v538 = vadd.f32 %v481, %v520
    %v539 = vadd.f32 %v482, %v521
    %v540 = vadd.f32 %v483, %v522
    %v541 = vadd.f32 %v484, %v523
    %v542 = vld [vmem:[#allocation3 + $0x1] sm:$0xff]
    %v543 = vld [vmem:[#allocation3 + $0x9] sm:$0x1]
    %v544 = vld [vmem:[#allocation3 + $0x11] sm:$0xff]
    %v545 = vld [vmem:[#allocation3 + $0x19] sm:$0x1]
    %v546 = vld [vmem:[#allocation3 + $0x21] sm:$0xff]
    %v547 = vld [vmem:[#allocation3 + $0x29] sm:$0x1]
    %v548 = vld [vmem:[#allocation3 + $0x31] sm:$0xff]
    %v549 = vld [vmem:[#allocation3 + $0x39] sm:$0x1]
    %v550 = vld [vmem:[#allocation3 + $0x41] sm:$0xff]
    %v551 = vld [vmem:[#allocation3 + $0x49] sm:$0x1]
    %v552 = vld [vmem:[#allocation3 + $0x51] sm:$0xff]
    %v553 = vld [vmem:[#allocation3 + $0x59] sm:$0x1]
    %v554 = vld [vmem:[#allocation3 + $0x61] sm:$0xff]
    %v555 = vld [vmem:[#allocation3 + $0x69] sm:$0x1]
    %v556 = vld [vmem:[#allocation3 + $0x71] sm:$0xff]
    %v557 = vld [vmem:[#allocation3 + $0x79] sm:$0x1]
    %v558 = vld [vmem:[#allocation3 + $0x81] sm:$0xff]
    %v559 = vld [vmem:[#allocation3 + $0x89] sm:$0x1]
    %v560 = vld [vmem:[#allocation3 + $0x91] sm:$0xff]
    %v561 = vld [vmem:[#allocation3 + $0x99] sm:$0x1]
    %v562 = vld [vmem:[#allocation3 + $0xa1] sm:$0xff]
    %v563 = vld [vmem:[#allocation3 + $0xa9] sm:$0x1]
    %v564 = vld [vmem:[#allocation3 + $0xb1] sm:$0xff]
    %v565 = vld [vmem:[#allocation3 + $0xb9] sm:$0x1]
    %v566 = vld [vmem:[#allocation3 + $0xc1] sm:$0xff]
    %v567 = vld [vmem:[#allocation3 + $0xc9] sm:$0x1]
    %v568 = vld [vmem:[#allocation3 + $0xd1] sm:$0xff]
    %v569 = vld [vmem:[#allocation3 + $0xd9] sm:$0x1]
    %v570 = vld [vmem:[#allocation3 + $0xe1] sm:$0xff]
    %v571 = vld [vmem:[#allocation3 + $0xe9] sm:$0x1]
    %v572 = vld [vmem:[#allocation3 + $0xf1] sm:$0xff]
    %v573 = vld [vmem:[#allocation3 + $0xf9] sm:$0x1]
    %574 = vst [vmem:[#allocation2] sm:$0xff] %v542
    %575 = vst [vmem:[#allocation2 + $0x8] sm:$0x1] %v543
    %576 = vst [vmem:[#allocation2 + $0x10] sm:$0xff] %v544
    %577 = vst [vmem:[#allocation2 + $0x18] sm:$0x1] %v545
    %578 = vst [vmem:[#allocation2 + $0x20] sm:$0xff] %v546
    %579 = vst [vmem:[#allocation2 + $0x28] sm:$0x1] %v547
    %580 = vst [vmem:[#allocation2 + $0x30] sm:$0xff] %v548
    %581 = vst [vmem:[#allocation2 + $0x38] sm:$0x1] %v549
    %582 = vst [vmem:[#allocation2 + $0x40] sm:$0xff] %v550
    %583 = vst [vmem:[#allocation2 + $0x48] sm:$0x1] %v551
    %584 = vst [vmem:[#allocation2 + $0x50] sm:$0xff] %v552
    %585 = vst [vmem:[#allocation2 + $0x58] sm:$0x1] %v553
    %586 = vst [vmem:[#allocation2 + $0x60] sm:$0xff] %v554
    %587 = vst [vmem:[#allocation2 + $0x68] sm:$0x1] %v555
    %588 = vst [vmem:[#allocation2 + $0x70] sm:$0xff] %v556
    %589 = vst [vmem:[#allocation2 + $0x78] sm:$0x1] %v557
    %590 = vst [vmem:[#allocation2 + $0x80] sm:$0xff] %v558
    %591 = vst [vmem:[#allocation2 + $0x88] sm:$0x1] %v559
    %592 = vst [vmem:[#allocation2 + $0x90] sm:$0xff] %v560
    %593 = vst [vmem:[#allocation2 + $0x98] sm:$0x1] %v561
    %594 = vst [vmem:[#allocation2 + $0xa0] sm:$0xff] %v562
    %595 = vst [vmem:[#allocation2 + $0xa8] sm:$0x1] %v563
    %596 = vst [vmem:[#allocation2 + $0xb0] sm:$0xff] %v564
    %597 = vst [vmem:[#allocation2 + $0xb8] sm:$0x1] %v565
    %598 = vst [vmem:[#allocation2 + $0xc0] sm:$0xff] %v566
    %599 = vst [vmem:[#allocation2 + $0xc8] sm:$0x1] %v567
    %600 = vst [vmem:[#allocation2 + $0xd0] sm:$0xff] %v568
    %601 = vst [vmem:[#allocation2 + $0xd8] sm:$0x1] %v569
    %602 = vst [vmem:[#allocation2 + $0xe0] sm:$0xff] %v570
    %603 = vst [vmem:[#allocation2 + $0xe8] sm:$0x1] %v571
    %604 = vst [vmem:[#allocation2 + $0xf0] sm:$0xff] %v572
    %605 = vst [vmem:[#allocation2 + $0xf8] sm:$0x1] %v573
    %v606 = vld [vmem:[#allocation2] sm:$0xff]
    %v607 = vld [vmem:[#allocation2 + $0x8] sm:$0x1]
    %v608 = vld [vmem:[#allocation2 + $0x10] sm:$0xff]
    %v609 = vld [vmem:[#allocation2 + $0x18] sm:$0x1]
    %v610 = vld [vmem:[#allocation2 + $0x20] sm:$0xff]
    %v611 = vld [vmem:[#allocation2 + $0x28] sm:$0x1]
    %v612 = vld [vmem:[#allocation2 + $0x30] sm:$0xff]
    %v613 = vld [vmem:[#allocation2 + $0x38] sm:$0x1]
    %v614 = vld [vmem:[#allocation2 + $0x40] sm:$0xff]
    %v615 = vld [vmem:[#allocation2 + $0x48] sm:$0x1]
    %v616 = vld [vmem:[#allocation2 + $0x50] sm:$0xff]
    %v617 = vld [vmem:[#allocation2 + $0x58] sm:$0x1]
    %v618 = vld [vmem:[#allocation2 + $0x60] sm:$0xff]
    %v619 = vld [vmem:[#allocation2 + $0x68] sm:$0x1]
    %v620 = vld [vmem:[#allocation2 + $0x70] sm:$0xff]
    %v621 = vld [vmem:[#allocation2 + $0x78] sm:$0x1]
    %v622 = vld [vmem:[#allocation2 + $0x80] sm:$0xff]
    %v623 = vld [vmem:[#allocation2 + $0x88] sm:$0x1]
    %s624 = sld [smem:[#allocation7 + $0x1]]
    %v625 = vstv %s624
    %v626 = vmul.f32 %v606, %v625
    %v627 = vmul.f32 %v607, %v625
    %v628 = vmul.f32 %v608, %v625
    %v629 = vmul.f32 %v609, %v625
    %v630 = vmul.f32 %v610, %v625
    %v631 = vmul.f32 %v611, %v625
    %v632 = vmul.f32 %v612, %v625
    %v633 = vmul.f32 %v613, %v625
    %v634 = vmul.f32 %v614, %v625
    %v635 = vmul.f32 %v615, %v625
    %v636 = vmul.f32 %v616, %v625
    %v637 = vmul.f32 %v617, %v625
    %v638 = vmul.f32 %v618, %v625
    %v639 = vmul.f32 %v619, %v625
    %v640 = vmul.f32 %v620, %v625
    %v641 = vmul.f32 %v621, %v625
    %v642 = vmul.f32 %v622, %v625
    %v643 = vmul.f32 %v623, %v625
    %v644 = vadd.f32 %v524, %v626
    %v645 = vadd.f32 %v525, %v627
    %v646 = vadd.f32 %v526, %v628
    %v647 = vadd.f32 %v527, %v629
    %v648 = vadd.f32 %v528, %v630
    %v649 = vadd.f32 %v529, %v631
    %v650 = vadd.f32 %v530, %v632
    %v651 = vadd.f32 %v531, %v633
    %v652 = vadd.f32 %v532, %v634
    %v653 = vadd.f32 %v533, %v635
    %v654 = vadd.f32 %v534, %v636
    %v655 = vadd.f32 %v535, %v637
    %v656 = vadd.f32 %v536, %v638
    %v657 = vadd.f32 %v537, %v639
    %v658 = vadd.f32 %v538, %v640
    %v659 = vadd.f32 %v539, %v641
    %v660 = vadd.f32 %v540, %v642
    %v661 = vadd.f32 %v541, %v643
    %v662 = vld [vmem:[%s143] sm:$0xff]
    %v663 = vld [vmem:[%s143 + $0x8] sm:$0x1]
    %v664 = vld [vmem:[%s143 + $0x10] sm:$0xff]
    %v665 = vld [vmem:[%s143 + $0x18] sm:$0x1]
    %v666 = vld [vmem:[%s143 + $0x20] sm:$0xff]
    %v667 = vld [vmem:[%s143 + $0x28] sm:$0x1]
    %v668 = vld [vmem:[%s143 + $0x30] sm:$0xff]
    %v669 = vld [vmem:[%s143 + $0x38] sm:$0x1]
    %v670 = vld [vmem:[%s143 + $0x40] sm:$0xff]
    %v671 = vld [vmem:[%s143 + $0x48] sm:$0x1]
    %v672 = vld [vmem:[%s143 + $0x50] sm:$0xff]
    %v673 = vld [vmem:[%s143 + $0x58] sm:$0x1]
    %v674 = vld [vmem:[%s143 + $0x60] sm:$0xff]
    %v675 = vld [vmem:[%s143 + $0x68] sm:$0x1]
    %v676 = vld [vmem:[%s143 + $0x70] sm:$0xff]
    %v677 = vld [vmem:[%s143 + $0x78] sm:$0x1]
    %v678 = vld [vmem:[%s143 + $0x80] sm:$0xff]
    %v679 = vld [vmem:[%s143 + $0x88] sm:$0x1]
    %s680 = sld [smem:[#allocation7 + $0x9]]
    %v681 = vstv %s680
    %v682 = vmul.f32 %v662, %v681
    %v683 = vmul.f32 %v663, %v681
    %v684 = vmul.f32 %v664, %v681
    %v685 = vmul.f32 %v665, %v681
    %v686 = vmul.f32 %v666, %v681
    %v687 = vmul.f32 %v667, %v681
    %v688 = vmul.f32 %v668, %v681
    %v689 = vmul.f32 %v669, %v681
    %v690 = vmul.f32 %v670, %v681
    %v691 = vmul.f32 %v671, %v681
    %v692 = vmul.f32 %v672, %v681
    %v693 = vmul.f32 %v673, %v681
    %v694 = vmul.f32 %v674, %v681
    %v695 = vmul.f32 %v675, %v681
    %v696 = vmul.f32 %v676, %v681
    %v697 = vmul.f32 %v677, %v681
    %v698 = vmul.f32 %v678, %v681
    %v699 = vmul.f32 %v679, %v681
    %v700 = vadd.f32 %v644, %v682
    %v701 = vadd.f32 %v645, %v683
    %v702 = vadd.f32 %v646, %v684
    %v703 = vadd.f32 %v647, %v685
    %v704 = vadd.f32 %v648, %v686
    %v705 = vadd.f32 %v649, %v687
    %v706 = vadd.f32 %v650, %v688
    %v707 = vadd.f32 %v651, %v689
    %v708 = vadd.f32 %v652, %v690
    %v709 = vadd.f32 %v653, %v691
    %v710 = vadd.f32 %v654, %v692
    %v711 = vadd.f32 %v655, %v693
    %v712 = vadd.f32 %v656, %v694
    %v713 = vadd.f32 %v657, %v695
    %v714 = vadd.f32 %v658, %v696
    %v715 = vadd.f32 %v659, %v697
    %v716 = vadd.f32 %v660, %v698
    %v717 = vadd.f32 %v661, %v699
    %v718 = vld [vmem:[%s200] sm:$0xff]
    %v719 = vld [vmem:[%s200 + $0x8] sm:$0x1]
    %v720 = vld [vmem:[%s200 + $0x10] sm:$0xff]
    %v721 = vld [vmem:[%s200 + $0x18] sm:$0x1]
    %v722 = vld [vmem:[%s200 + $0x20] sm:$0xff]
    %v723 = vld [vmem:[%s200 + $0x28] sm:$0x1]
    %v724 = vld [vmem:[%s200 + $0x30] sm:$0xff]
    %v725 = vld [vmem:[%s200 + $0x38] sm:$0x1]
    %v726 = vld [vmem:[%s200 + $0x40] sm:$0xff]
    %v727 = vld [vmem:[%s200 + $0x48] sm:$0x1]
    %v728 = vld [vmem:[%s200 + $0x50] sm:$0xff]
    %v729 = vld [vmem:[%s200 + $0x58] sm:$0x1]
    %v730 = vld [vmem:[%s200 + $0x60] sm:$0xff]
    %v731 = vld [vmem:[%s200 + $0x68] sm:$0x1]
    %v732 = vld [vmem:[%s200 + $0x70] sm:$0xff]
    %v733 = vld [vmem:[%s200 + $0x78] sm:$0x1]
    %v734 = vld [vmem:[%s200 + $0x80] sm:$0xff]
    %v735 = vld [vmem:[%s200 + $0x88] sm:$0x1]
    %s736 = sld [smem:[#allocation7 + $0x11]]
    %v737 = vstv %s736
    %v738 = vmul.f32 %v718, %v737
    %v739 = vmul.f32 %v719, %v737
    %v740 = vmul.f32 %v720, %v737
    %v741 = vmul.f32 %v721, %v737
    %v742 = vmul.f32 %v722, %v737
    %v743 = vmul.f32 %v723, %v737
    %v744 = vmul.f32 %v724, %v737
    %v745 = vmul.f32 %v725, %v737
    %v746 = vmul.f32 %v726, %v737
    %v747 = vmul.f32 %v727, %v737
    %v748 = vmul.f32 %v728, %v737
    %v749 = vmul.f32 %v729, %v737
    %v750 = vmul.f32 %v730, %v737
    %v751 = vmul.f32 %v731, %v737
    %v752 = vmul.f32 %v732, %v737
    %v753 = vmul.f32 %v733, %v737
    %v754 = vmul.f32 %v734, %v737
    %v755 = vmul.f32 %v735, %v737
    %v756 = vadd.f32 %v700, %v738
    %v757 = vadd.f32 %v701, %v739
    %v758 = vadd.f32 %v702, %v740
    %v759 = vadd.f32 %v703, %v741
    %v760 = vadd.f32 %v704, %v742
    %v761 = vadd.f32 %v705, %v743
    %v762 = vadd.f32 %v706, %v744
    %v763 = vadd.f32 %v707, %v745
    %v764 = vadd.f32 %v708, %v746
    %v765 = vadd.f32 %v709, %v747
    %v766 = vadd.f32 %v710, %v748
    %v767 = vadd.f32 %v711, %v749
    %v768 = vadd.f32 %v712, %v750
    %v769 = vadd.f32 %v713, %v751
    %v770 = vadd.f32 %v714, %v752
    %v771 = vadd.f32 %v715, %v753
    %v772 = vadd.f32 %v716, %v754
    %v773 = vadd.f32 %v717, %v755
    %v774 = vld [vmem:[%s257] sm:$0xff]
    %v775 = vld [vmem:[%s257 + $0x8] sm:$0x1]
    %v776 = vld [vmem:[%s257 + $0x10] sm:$0xff]
    %v777 = vld [vmem:[%s257 + $0x18] sm:$0x1]
    %v778 = vld [vmem:[%s257 + $0x20] sm:$0xff]
    %v779 = vld [vmem:[%s257 + $0x28] sm:$0x1]
    %v780 = vld [vmem:[%s257 + $0x30] sm:$0xff]
    %v781 = vld [vmem:[%s257 + $0x38] sm:$0x1]
    %v782 = vld [vmem:[%s257 + $0x40] sm:$0xff]
    %v783 = vld [vmem:[%s257 + $0x48] sm:$0x1]
    %v784 = vld [vmem:[%s257 + $0x50] sm:$0xff]
    %v785 = vld [vmem:[%s257 + $0x58] sm:$0x1]
    %v786 = vld [vmem:[%s257 + $0x60] sm:$0xff]
    %v787 = vld [vmem:[%s257 + $0x68] sm:$0x1]
    %v788 = vld [vmem:[%s257 + $0x70] sm:$0xff]
    %v789 = vld [vmem:[%s257 + $0x78] sm:$0x1]
    %v790 = vld [vmem:[%s257 + $0x80] sm:$0xff]
    %v791 = vld [vmem:[%s257 + $0x88] sm:$0x1]
    %s792 = sld [smem:[#allocation7 + $0x19]]
    %v793 = vstv %s792
    %v794 = vmul.f32 %v774, %v793
    %v795 = vmul.f32 %v775, %v793
    %v796 = vmul.f32 %v776, %v793
    %v797 = vmul.f32 %v777, %v793
    %v798 = vmul.f32 %v778, %v793
    %v799 = vmul.f32 %v779, %v793
    %v800 = vmul.f32 %v780, %v793
    %v801 = vmul.f32 %v781, %v793
    %v802 = vmul.f32 %v782, %v793
    %v803 = vmul.f32 %v783, %v793
    %v804 = vmul.f32 %v784, %v793
    %v805 = vmul.f32 %v785, %v793
    %v806 = vmul.f32 %v786, %v793
    %v807 = vmul.f32 %v787, %v793
    %v808 = vmul.f32 %v788, %v793
    %v809 = vmul.f32 %v789, %v793
    %v810 = vmul.f32 %v790, %v793
    %v811 = vmul.f32 %v791, %v793
    %v812 = vadd.f32 %v756, %v794
    %v813 = vadd.f32 %v757, %v795
    %v814 = vadd.f32 %v758, %v796
    %v815 = vadd.f32 %v759, %v797
    %v816 = vadd.f32 %v760, %v798
    %v817 = vadd.f32 %v761, %v799
    %v818 = vadd.f32 %v762, %v800
    %v819 = vadd.f32 %v763, %v801
    %v820 = vadd.f32 %v764, %v802
    %v821 = vadd.f32 %v765, %v803
    %v822 = vadd.f32 %v766, %v804
    %v823 = vadd.f32 %v767, %v805
    %v824 = vadd.f32 %v768, %v806
    %v825 = vadd.f32 %v769, %v807
    %v826 = vadd.f32 %v770, %v808
    %v827 = vadd.f32 %v771, %v809
    %v828 = vadd.f32 %v772, %v810
    %v829 = vadd.f32 %v773, %v811
    %v830 = vld [vmem:[%s314] sm:$0xff]
    %v831 = vld [vmem:[%s314 + $0x8] sm:$0x1]
    %v832 = vld [vmem:[%s314 + $0x10] sm:$0xff]
    %v833 = vld [vmem:[%s314 + $0x18] sm:$0x1]
    %v834 = vld [vmem:[%s314 + $0x20] sm:$0xff]
    %v835 = vld [vmem:[%s314 + $0x28] sm:$0x1]
    %v836 = vld [vmem:[%s314 + $0x30] sm:$0xff]
    %v837 = vld [vmem:[%s314 + $0x38] sm:$0x1]
    %v838 = vld [vmem:[%s314 + $0x40] sm:$0xff]
    %v839 = vld [vmem:[%s314 + $0x48] sm:$0x1]
    %v840 = vld [vmem:[%s314 + $0x50] sm:$0xff]
    %v841 = vld [vmem:[%s314 + $0x58] sm:$0x1]
    %v842 = vld [vmem:[%s314 + $0x60] sm:$0xff]
    %v843 = vld [vmem:[%s314 + $0x68] sm:$0x1]
    %v844 = vld [vmem:[%s314 + $0x70] sm:$0xff]
    %v845 = vld [vmem:[%s314 + $0x78] sm:$0x1]
    %v846 = vld [vmem:[%s314 + $0x80] sm:$0xff]
    %v847 = vld [vmem:[%s314 + $0x88] sm:$0x1]
    %s848 = sld [smem:[#allocation7 + $0x21]]
    %v849 = vstv %s848
    %v850 = vmul.f32 %v830, %v849
    %v851 = vmul.f32 %v831, %v849
    %v852 = vmul.f32 %v832, %v849
    %v853 = vmul.f32 %v833, %v849
    %v854 = vmul.f32 %v834, %v849
    %v855 = vmul.f32 %v835, %v849
    %v856 = vmul.f32 %v836, %v849
    %v857 = vmul.f32 %v837, %v849
    %v858 = vmul.f32 %v838, %v849
    %v859 = vmul.f32 %v839, %v849
    %v860 = vmul.f32 %v840, %v849
    %v861 = vmul.f32 %v841, %v849
    %v862 = vmul.f32 %v842, %v849
    %v863 = vmul.f32 %v843, %v849
    %v864 = vmul.f32 %v844, %v849
    %v865 = vmul.f32 %v845, %v849
    %v866 = vmul.f32 %v846, %v849
    %v867 = vmul.f32 %v847, %v849
    %v868 = vadd.f32 %v812, %v850
    %v869 = vadd.f32 %v813, %v851
    %v870 = vadd.f32 %v814, %v852
    %v871 = vadd.f32 %v815, %v853
    %v872 = vadd.f32 %v816, %v854
    %v873 = vadd.f32 %v817, %v855
    %v874 = vadd.f32 %v818, %v856
    %v875 = vadd.f32 %v819, %v857
    %v876 = vadd.f32 %v820, %v858
    %v877 = vadd.f32 %v821, %v859
    %v878 = vadd.f32 %v822, %v860
    %v879 = vadd.f32 %v823, %v861
    %v880 = vadd.f32 %v824, %v862
    %v881 = vadd.f32 %v825, %v863
    %v882 = vadd.f32 %v826, %v864
    %v883 = vadd.f32 %v827, %v865
    %v884 = vadd.f32 %v828, %v866
    %v885 = vadd.f32 %v829, %v867
    %v886 = vld [vmem:[%s371] sm:$0xff]
    %v887 = vld [vmem:[%s371 + $0x8] sm:$0x1]
    %v888 = vld [vmem:[%s371 + $0x10] sm:$0xff]
    %v889 = vld [vmem:[%s371 + $0x18] sm:$0x1]
    %v890 = vld [vmem:[%s371 + $0x20] sm:$0xff]
    %v891 = vld [vmem:[%s371 + $0x28] sm:$0x1]
    %v892 = vld [vmem:[%s371 + $0x30] sm:$0xff]
    %v893 = vld [vmem:[%s371 + $0x38] sm:$0x1]
    %v894 = vld [vmem:[%s371 + $0x40] sm:$0xff]
    %v895 = vld [vmem:[%s371 + $0x48] sm:$0x1]
    %v896 = vld [vmem:[%s371 + $0x50] sm:$0xff]
    %v897 = vld [vmem:[%s371 + $0x58] sm:$0x1]
    %v898 = vld [vmem:[%s371 + $0x60] sm:$0xff]
    %v899 = vld [vmem:[%s371 + $0x68] sm:$0x1]
    %v900 = vld [vmem:[%s371 + $0x70] sm:$0xff]
    %v901 = vld [vmem:[%s371 + $0x78] sm:$0x1]
    %v902 = vld [vmem:[%s371 + $0x80] sm:$0xff]
    %v903 = vld [vmem:[%s371 + $0x88] sm:$0x1]
    %s904 = sld [smem:[#allocation7 + $0x29]]
    %v905 = vstv %s904
    %v906 = vmul.f32 %v886, %v905
    %v907 = vmul.f32 %v887, %v905
    %v908 = vmul.f32 %v888, %v905
    %v909 = vmul.f32 %v889, %v905
    %v910 = vmul.f32 %v890, %v905
    %v911 = vmul.f32 %v891, %v905
    %v912 = vmul.f32 %v892, %v905
    %v913 = vmul.f32 %v893, %v905
    %v914 = vmul.f32 %v894, %v905
    %v915 = vmul.f32 %v895, %v905
    %v916 = vmul.f32 %v896, %v905
    %v917 = vmul.f32 %v897, %v905
    %v918 = vmul.f32 %v898, %v905
    %v919 = vmul.f32 %v899, %v905
    %v920 = vmul.f32 %v900, %v905
    %v921 = vmul.f32 %v901, %v905
    %v922 = vmul.f32 %v902, %v905
    %v923 = vmul.f32 %v903, %v905
    %v924 = vadd.f32 %v868, %v906
    %v925 = vadd.f32 %v869, %v907
    %v926 = vadd.f32 %v870, %v908
    %v927 = vadd.f32 %v871, %v909
    %v928 = vadd.f32 %v872, %v910
    %v929 = vadd.f32 %v873, %v911
    %v930 = vadd.f32 %v874, %v912
    %v931 = vadd.f32 %v875, %v913
    %v932 = vadd.f32 %v876, %v914
    %v933 = vadd.f32 %v877, %v915
    %v934 = vadd.f32 %v878, %v916
    %v935 = vadd.f32 %v879, %v917
    %v936 = vadd.f32 %v880, %v918
    %v937 = vadd.f32 %v881, %v919
    %v938 = vadd.f32 %v882, %v920
    %v939 = vadd.f32 %v883, %v921
    %v940 = vadd.f32 %v884, %v922
    %v941 = vadd.f32 %v885, %v923
    %v942 = vld [vmem:[%s428] sm:$0xff]
    %v943 = vld [vmem:[%s428 + $0x8] sm:$0x1]
    %v944 = vld [vmem:[%s428 + $0x10] sm:$0xff]
    %v945 = vld [vmem:[%s428 + $0x18] sm:$0x1]
    %v946 = vld [vmem:[%s428 + $0x20] sm:$0xff]
    %v947 = vld [vmem:[%s428 + $0x28] sm:$0x1]
    %v948 = vld [vmem:[%s428 + $0x30] sm:$0xff]
    %v949 = vld [vmem:[%s428 + $0x38] sm:$0x1]
    %v950 = vld [vmem:[%s428 + $0x40] sm:$0xff]
    %v951 = vld [vmem:[%s428 + $0x48] sm:$0x1]
    %v952 = vld [vmem:[%s428 + $0x50] sm:$0xff]
    %v953 = vld [vmem:[%s428 + $0x58] sm:$0x1]
    %v954 = vld [vmem:[%s428 + $0x60] sm:$0xff]
    %v955 = vld [vmem:[%s428 + $0x68] sm:$0x1]
    %v956 = vld [vmem:[%s428 + $0x70] sm:$0xff]
    %v957 = vld [vmem:[%s428 + $0x78] sm:$0x1]
    %v958 = vld [vmem:[%s428 + $0x80] sm:$0xff]
    %v959 = vld [vmem:[%s428 + $0x88] sm:$0x1]
    %s960 = sld [smem:[#allocation7 + $0x31]]
    %v961 = vstv %s960
    %v962 = vmul.f32 %v942, %v961
    %v963 = vmul.f32 %v943, %v961
    %v964 = vmul.f32 %v944, %v961
    %v965 = vmul.f32 %v945, %v961
    %v966 = vmul.f32 %v946, %v961
    %v967 = vmul.f32 %v947, %v961
    %v968 = vmul.f32 %v948, %v961
    %v969 = vmul.f32 %v949, %v961
    %v970 = vmul.f32 %v950, %v961
    %v971 = vmul.f32 %v951, %v961
    %v972 = vmul.f32 %v952, %v961
    %v973 = vmul.f32 %v953, %v961
    %v974 = vmul.f32 %v954, %v961
    %v975 = vmul.f32 %v955, %v961
    %v976 = vmul.f32 %v956, %v961
    %v977 = vmul.f32 %v957, %v961
    %v978 = vmul.f32 %v958, %v961
    %v979 = vmul.f32 %v959, %v961
    %v980 = vadd.f32 %v924, %v962
    %v981 = vadd.f32 %v925, %v963
    %v982 = vadd.f32 %v926, %v964
    %v983 = vadd.f32 %v927, %v965
    %v984 = vadd.f32 %v928, %v966
    %v985 = vadd.f32 %v929, %v967
    %v986 = vadd.f32 %v930, %v968
    %v987 = vadd.f32 %v931, %v969
    %v988 = vadd.f32 %v932, %v970
    %v989 = vadd.f32 %v933, %v971
    %v990 = vadd.f32 %v934, %v972
    %v991 = vadd.f32 %v935, %v973
    %v992 = vadd.f32 %v936, %v974
    %v993 = vadd.f32 %v937, %v975
    %v994 = vadd.f32 %v938, %v976
    %v995 = vadd.f32 %v939, %v977
    %v996 = vadd.f32 %v940, %v978
    %v997 = vadd.f32 %v941, %v979
    %v998 = vld [vmem:[%s485] sm:$0xff]
    %v999 = vld [vmem:[%s485 + $0x8] sm:$0x1]
    %v1000 = vld [vmem:[%s485 + $0x10] sm:$0xff]
    %v1001 = vld [vmem:[%s485 + $0x18] sm:$0x1]
    %v1002 = vld [vmem:[%s485 + $0x20] sm:$0xff]
    %v1003 = vld [vmem:[%s485 + $0x28] sm:$0x1]
    %v1004 = vld [vmem:[%s485 + $0x30] sm:$0xff]
    %v1005 = vld [vmem:[%s485 + $0x38] sm:$0x1]
    %v1006 = vld [vmem:[%s485 + $0x40] sm:$0xff]
    %v1007 = vld [vmem:[%s485 + $0x48] sm:$0x1]
    %v1008 = vld [vmem:[%s485 + $0x50] sm:$0xff]
    %v1009 = vld [vmem:[%s485 + $0x58] sm:$0x1]
    %v1010 = vld [vmem:[%s485 + $0x60] sm:$0xff]
    %v1011 = vld [vmem:[%s485 + $0x68] sm:$0x1]
    %v1012 = vld [vmem:[%s485 + $0x70] sm:$0xff]
    %v1013 = vld [vmem:[%s485 + $0x78] sm:$0x1]
    %v1014 = vld [vmem:[%s485 + $0x80] sm:$0xff]
    %v1015 = vld [vmem:[%s485 + $0x88] sm:$0x1]
    %s1016 = sld [smem:[#allocation7 + $0x39]]
    %v1017 = vstv %s1016
    %v1018 = vmul.f32 %v998, %v1017
    %v1019 = vmul.f32 %v999, %v1017
    %v1020 = vmul.f32 %v1000, %v1017
    %v1021 = vmul.f32 %v1001, %v1017
    %v1022 = vmul.f32 %v1002, %v1017
    %v1023 = vmul.f32 %v1003, %v1017
    %v1024 = vmul.f32 %v1004, %v1017
    %v1025 = vmul.f32 %v1005, %v1017
    %v1026 = vmul.f32 %v1006, %v1017
    %v1027 = vmul.f32 %v1007, %v1017
    %v1028 = vmul.f32 %v1008, %v1017
    %v1029 = vmul.f32 %v1009, %v1017
    %v1030 = vmul.f32 %v1010, %v1017
    %v1031 = vmul.f32 %v1011, %v1017
    %v1032 = vmul.f32 %v1012, %v1017
    %v1033 = vmul.f32 %v1013, %v1017
    %v1034 = vmul.f32 %v1014, %v1017
    %v1035 = vmul.f32 %v1015, %v1017
    %v1036 = vadd.f32 %v980, %v1018
    %v1037 = vadd.f32 %v981, %v1019
    %v1038 = vadd.f32 %v982, %v1020
    %v1039 = vadd.f32 %v983, %v1021
    %v1040 = vadd.f32 %v984, %v1022
    %v1041 = vadd.f32 %v985, %v1023
    %v1042 = vadd.f32 %v986, %v1024
    %v1043 = vadd.f32 %v987, %v1025
    %v1044 = vadd.f32 %v988, %v1026
    %v1045 = vadd.f32 %v989, %v1027
    %v1046 = vadd.f32 %v990, %v1028
    %v1047 = vadd.f32 %v991, %v1029
    %v1048 = vadd.f32 %v992, %v1030
    %v1049 = vadd.f32 %v993, %v1031
    %v1050 = vadd.f32 %v994, %v1032
    %v1051 = vadd.f32 %v995, %v1033
    %v1052 = vadd.f32 %v996, %v1034
    %v1053 = vadd.f32 %v997, %v1035
    %v1054 = vld [vmem:[#allocation3 + $0x2] sm:$0xff]
    %v1055 = vld [vmem:[#allocation3 + $0xa] sm:$0x1]
    %v1056 = vld [vmem:[#allocation3 + $0x12] sm:$0xff]
    %v1057 = vld [vmem:[#allocation3 + $0x1a] sm:$0x1]
    %v1058 = vld [vmem:[#allocation3 + $0x22] sm:$0xff]
    %v1059 = vld [vmem:[#allocation3 + $0x2a] sm:$0x1]
    %v1060 = vld [vmem:[#allocation3 + $0x32] sm:$0xff]
    %v1061 = vld [vmem:[#allocation3 + $0x3a] sm:$0x1]
    %v1062 = vld [vmem:[#allocation3 + $0x42] sm:$0xff]
    %v1063 = vld [vmem:[#allocation3 + $0x4a] sm:$0x1]
    %v1064 = vld [vmem:[#allocation3 + $0x52] sm:$0xff]
    %v1065 = vld [vmem:[#allocation3 + $0x5a] sm:$0x1]
    %v1066 = vld [vmem:[#allocation3 + $0x62] sm:$0xff]
    %v1067 = vld [vmem:[#allocation3 + $0x6a] sm:$0x1]
    %v1068 = vld [vmem:[#allocation3 + $0x72] sm:$0xff]
    %v1069 = vld [vmem:[#allocation3 + $0x7a] sm:$0x1]
    %v1070 = vld [vmem:[#allocation3 + $0x82] sm:$0xff]
    %v1071 = vld [vmem:[#allocation3 + $0x8a] sm:$0x1]
    %v1072 = vld [vmem:[#allocation3 + $0x92] sm:$0xff]
    %v1073 = vld [vmem:[#allocation3 + $0x9a] sm:$0x1]
    %v1074 = vld [vmem:[#allocation3 + $0xa2] sm:$0xff]
    %v1075 = vld [vmem:[#allocation3 + $0xaa] sm:$0x1]
    %v1076 = vld [vmem:[#allocation3 + $0xb2] sm:$0xff]
    %v1077 = vld [vmem:[#allocation3 + $0xba] sm:$0x1]
    %v1078 = vld [vmem:[#allocation3 + $0xc2] sm:$0xff]
    %v1079 = vld [vmem:[#allocation3 + $0xca] sm:$0x1]
    %v1080 = vld [vmem:[#allocation3 + $0xd2] sm:$0xff]
    %v1081 = vld [vmem:[#allocation3 + $0xda] sm:$0x1]
    %v1082 = vld [vmem:[#allocation3 + $0xe2] sm:$0xff]
    %v1083 = vld [vmem:[#allocation3 + $0xea] sm:$0x1]
    %v1084 = vld [vmem:[#allocation3 + $0xf2] sm:$0xff]
    %v1085 = vld [vmem:[#allocation3 + $0xfa] sm:$0x1]
    %1086 = vst [vmem:[#allocation2] sm:$0xff] %v1054
    %1087 = vst [vmem:[#allocation2 + $0x8] sm:$0x1] %v1055
    %1088 = vst [vmem:[#allocation2 + $0x10] sm:$0xff] %v1056
    %1089 = vst [vmem:[#allocation2 + $0x18] sm:$0x1] %v1057
    %1090 = vst [vmem:[#allocation2 + $0x20] sm:$0xff] %v1058
    %1091 = vst [vmem:[#allocation2 + $0x28] sm:$0x1] %v1059
    %1092 = vst [vmem:[#allocation2 + $0x30] sm:$0xff] %v1060
    %1093 = vst [vmem:[#allocation2 + $0x38] sm:$0x1] %v1061
    %1094 = vst [vmem:[#allocation2 + $0x40] sm:$0xff] %v1062
    %1095 = vst [vmem:[#allocation2 + $0x48] sm:$0x1] %v1063
    %1096 = vst [vmem:[#allocation2 + $0x50] sm:$0xff] %v1064
    %1097 = vst [vmem:[#allocation2 + $0x58] sm:$0x1] %v1065
    %1098 = vst [vmem:[#allocation2 + $0x60] sm:$0xff] %v1066
    %1099 = vst [vmem:[#allocation2 + $0x68] sm:$0x1] %v1067
    %1100 = vst [vmem:[#allocation2 + $0x70] sm:$0xff] %v1068
    %1101 = vst [vmem:[#allocation2 + $0x78] sm:$0x1] %v1069
    %1102 = vst [vmem:[#allocation2 + $0x80] sm:$0xff] %v1070
    %1103 = vst [vmem:[#allocation2 + $0x88] sm:$0x1] %v1071
    %1104 = vst [vmem:[#allocation2 + $0x90] sm:$0xff] %v1072
    %1105 = vst [vmem:[#allocation2 + $0x98] sm:$0x1] %v1073
    %1106 = vst [vmem:[#allocation2 + $0xa0] sm:$0xff] %v1074
    %1107 = vst [vmem:[#allocation2 + $0xa8] sm:$0x1] %v1075
    %1108 = vst [vmem:[#allocation2 + $0xb0] sm:$0xff] %v1076
    %1109 = vst [vmem:[#allocation2 + $0xb8] sm:$0x1] %v1077
    %1110 = vst [vmem:[#allocation2 + $0xc0] sm:$0xff] %v1078
    %1111 = vst [vmem:[#allocation2 + $0xc8] sm:$0x1] %v1079
    %1112 = vst [vmem:[#allocation2 + $0xd0] sm:$0xff] %v1080
    %1113 = vst [vmem:[#allocation2 + $0xd8] sm:$0x1] %v1081
    %1114 = vst [vmem:[#allocation2 + $0xe0] sm:$0xff] %v1082
    %1115 = vst [vmem:[#allocation2 + $0xe8] sm:$0x1] %v1083
    %1116 = vst [vmem:[#allocation2 + $0xf0] sm:$0xff] %v1084
    %1117 = vst [vmem:[#allocation2 + $0xf8] sm:$0x1] %v1085
    %v1118 = vld [vmem:[#allocation2] sm:$0xff]
    %v1119 = vld [vmem:[#allocation2 + $0x8] sm:$0x1]
    %v1120 = vld [vmem:[#allocation2 + $0x10] sm:$0xff]
    %v1121 = vld [vmem:[#allocation2 + $0x18] sm:$0x1]
    %v1122 = vld [vmem:[#allocation2 + $0x20] sm:$0xff]
    %v1123 = vld [vmem:[#allocation2 + $0x28] sm:$0x1]
    %v1124 = vld [vmem:[#allocation2 + $0x30] sm:$0xff]
    %v1125 = vld [vmem:[#allocation2 + $0x38] sm:$0x1]
    %v1126 = vld [vmem:[#allocation2 + $0x40] sm:$0xff]
    %v1127 = vld [vmem:[#allocation2 + $0x48] sm:$0x1]
    %v1128 = vld [vmem:[#allocation2 + $0x50] sm:$0xff]
    %v1129 = vld [vmem:[#allocation2 + $0x58] sm:$0x1]
    %v1130 = vld [vmem:[#allocation2 + $0x60] sm:$0xff]
    %v1131 = vld [vmem:[#allocation2 + $0x68] sm:$0x1]
    %v1132 = vld [vmem:[#allocation2 + $0x70] sm:$0xff]
    %v1133 = vld [vmem:[#allocation2 + $0x78] sm:$0x1]
    %v1134 = vld [vmem:[#allocation2 + $0x80] sm:$0xff]
    %v1135 = vld [vmem:[#allocation2 + $0x88] sm:$0x1]
    %s1136 = sld [smem:[#allocation7 + $0x2]]
    %v1137 = vstv %s1136
    %v1138 = vmul.f32 %v1118, %v1137
    %v1139 = vmul.f32 %v1119, %v1137
    %v1140 = vmul.f32 %v1120, %v1137
    %v1141 = vmul.f32 %v1121, %v1137
    %v1142 = vmul.f32 %v1122, %v1137
    %v1143 = vmul.f32 %v1123, %v1137
    %v1144 = vmul.f32 %v1124, %v1137
    %v1145 = vmul.f32 %v1125, %v1137
    %v1146 = vmul.f32 %v1126, %v1137
    %v1147 = vmul.f32 %v1127, %v1137
    %v1148 = vmul.f32 %v1128, %v1137
    %v1149 = vmul.f32 %v1129, %v1137
    %v1150 = vmul.f32 %v1130, %v1137
    %v1151 = vmul.f32 %v1131, %v1137
    %v1152 = vmul.f32 %v1132, %v1137
    %v1153 = vmul.f32 %v1133, %v1137
    %v1154 = vmul.f32 %v1134, %v1137
    %v1155 = vmul.f32 %v1135, %v1137
    %v1156 = vadd.f32 %v1036, %v1138
    %v1157 = vadd.f32 %v1037, %v1139
    %v1158 = vadd.f32 %v1038, %v1140
    %v1159 = vadd.f32 %v1039, %v1141
    %v1160 = vadd.f32 %v1040, %v1142
    %v1161 = vadd.f32 %v1041, %v1143
    %v1162 = vadd.f32 %v1042, %v1144
    %v1163 = vadd.f32 %v1043, %v1145
    %v1164 = vadd.f32 %v1044, %v1146
    %v1165 = vadd.f32 %v1045, %v1147
    %v1166 = vadd.f32 %v1046, %v1148
    %v1167 = vadd.f32 %v1047, %v1149
    %v1168 = vadd.f32 %v1048, %v1150
    %v1169 = vadd.f32 %v1049, %v1151
    %v1170 = vadd.f32 %v1050, %v1152
    %v1171 = vadd.f32 %v1051, %v1153
    %v1172 = vadd.f32 %v1052, %v1154
    %v1173 = vadd.f32 %v1053, %v1155
    %v1174 = vld [vmem:[%s143] sm:$0xff]
    %v1175 = vld [vmem:[%s143 + $0x8] sm:$0x1]
    %v1176 = vld [vmem:[%s143 + $0x10] sm:$0xff]
    %v1177 = vld [vmem:[%s143 + $0x18] sm:$0x1]
    %v1178 = vld [vmem:[%s143 + $0x20] sm:$0xff]
    %v1179 = vld [vmem:[%s143 + $0x28] sm:$0x1]
    %v1180 = vld [vmem:[%s143 + $0x30] sm:$0xff]
    %v1181 = vld [vmem:[%s143 + $0x38] sm:$0x1]
    %v1182 = vld [vmem:[%s143 + $0x40] sm:$0xff]
    %v1183 = vld [vmem:[%s143 + $0x48] sm:$0x1]
    %v1184 = vld [vmem:[%s143 + $0x50] sm:$0xff]
    %v1185 = vld [vmem:[%s143 + $0x58] sm:$0x1]
    %v1186 = vld [vmem:[%s143 + $0x60] sm:$0xff]
    %v1187 = vld [vmem:[%s143 + $0x68] sm:$0x1]
    %v1188 = vld [vmem:[%s143 + $0x70] sm:$0xff]
    %v1189 = vld [vmem:[%s143 + $0x78] sm:$0x1]
    %v1190 = vld [vmem:[%s143 + $0x80] sm:$0xff]
    %v1191 = vld [vmem:[%s143 + $0x88] sm:$0x1]
    %s1192 = sld [smem:[#allocation7 + $0xa]]
    %v1193 = vstv %s1192
    %v1194 = vmul.f32 %v1174, %v1193
    %v1195 = vmul.f32 %v1175, %v1193
    %v1196 = vmul.f32 %v1176, %v1193
    %v1197 = vmul.f32 %v1177, %v1193
    %v1198 = vmul.f32 %v1178, %v1193
    %v1199 = vmul.f32 %v1179, %v1193
    %v1200 = vmul.f32 %v1180, %v1193
    %v1201 = vmul.f32 %v1181, %v1193
    %v1202 = vmul.f32 %v1182, %v1193
    %v1203 = vmul.f32 %v1183, %v1193
    %v1204 = vmul.f32 %v1184, %v1193
    %v1205 = vmul.f32 %v1185, %v1193
    %v1206 = vmul.f32 %v1186, %v1193
    %v1207 = vmul.f32 %v1187, %v1193
    %v1208 = vmul.f32 %v1188, %v1193
    %v1209 = vmul.f32 %v1189, %v1193
    %v1210 = vmul.f32 %v1190, %v1193
    %v1211 = vmul.f32 %v1191, %v1193
    %v1212 = vadd.f32 %v1156, %v1194
    %v1213 = vadd.f32 %v1157, %v1195
    %v1214 = vadd.f32 %v1158, %v1196
    %v1215 = vadd.f32 %v1159, %v1197
    %v1216 = vadd.f32 %v1160, %v1198
    %v1217 = vadd.f32 %v1161, %v1199
    %v1218 = vadd.f32 %v1162, %v1200
    %v1219 = vadd.f32 %v1163, %v1201
    %v1220 = vadd.f32 %v1164, %v1202
    %v1221 = vadd.f32 %v1165, %v1203
    %v1222 = vadd.f32 %v1166, %v1204
    %v1223 = vadd.f32 %v1167, %v1205
    %v1224 = vadd.f32 %v1168, %v1206
    %v1225 = vadd.f32 %v1169, %v1207
    %v1226 = vadd.f32 %v1170, %v1208
    %v1227 = vadd.f32 %v1171, %v1209
    %v1228 = vadd.f32 %v1172, %v1210
    %v1229 = vadd.f32 %v1173, %v1211
    %v1230 = vld [vmem:[%s200] sm:$0xff]
    %v1231 = vld [vmem:[%s200 + $0x8] sm:$0x1]
    %v1232 = vld [vmem:[%s200 + $0x10] sm:$0xff]
    %v1233 = vld [vmem:[%s200 + $0x18] sm:$0x1]
    %v1234 = vld [vmem:[%s200 + $0x20] sm:$0xff]
    %v1235 = vld [vmem:[%s200 + $0x28] sm:$0x1]
    %v1236 = vld [vmem:[%s200 + $0x30] sm:$0xff]
    %v1237 = vld [vmem:[%s200 + $0x38] sm:$0x1]
    %v1238 = vld [vmem:[%s200 + $0x40] sm:$0xff]
    %v1239 = vld [vmem:[%s200 + $0x48] sm:$0x1]
    %v1240 = vld [vmem:[%s200 + $0x50] sm:$0xff]
    %v1241 = vld [vmem:[%s200 + $0x58] sm:$0x1]
    %v1242 = vld [vmem:[%s200 + $0x60] sm:$0xff]
    %v1243 = vld [vmem:[%s200 + $0x68] sm:$0x1]
    %v1244 = vld [vmem:[%s200 + $0x70] sm:$0xff]
    %v1245 = vld [vmem:[%s200 + $0x78] sm:$0x1]
    %v1246 = vld [vmem:[%s200 + $0x80] sm:$0xff]
    %v1247 = vld [vmem:[%s200 + $0x88] sm:$0x1]
    %s1248 = sld [smem:[#allocation7 + $0x12]]
    %v1249 = vstv %s1248
    %v1250 = vmul.f32 %v1230, %v1249
    %v1251 = vmul.f32 %v1231, %v1249
    %v1252 = vmul.f32 %v1232, %v1249
    %v1253 = vmul.f32 %v1233, %v1249
    %v1254 = vmul.f32 %v1234, %v1249
    %v1255 = vmul.f32 %v1235, %v1249
    %v1256 = vmul.f32 %v1236, %v1249
    %v1257 = vmul.f32 %v1237, %v1249
    %v1258 = vmul.f32 %v1238, %v1249
    %v1259 = vmul.f32 %v1239, %v1249
    %v1260 = vmul.f32 %v1240, %v1249
    %v1261 = vmul.f32 %v1241, %v1249
    %v1262 = vmul.f32 %v1242, %v1249
    %v1263 = vmul.f32 %v1243, %v1249
    %v1264 = vmul.f32 %v1244, %v1249
    %v1265 = vmul.f32 %v1245, %v1249
    %v1266 = vmul.f32 %v1246, %v1249
    %v1267 = vmul.f32 %v1247, %v1249
    %v1268 = vadd.f32 %v1212, %v1250
    %v1269 = vadd.f32 %v1213, %v1251
    %v1270 = vadd.f32 %v1214, %v1252
    %v1271 = vadd.f32 %v1215, %v1253
    %v1272 = vadd.f32 %v1216, %v1254
    %v1273 = vadd.f32 %v1217, %v1255
    %v1274 = vadd.f32 %v1218, %v1256
    %v1275 = vadd.f32 %v1219, %v1257
    %v1276 = vadd.f32 %v1220, %v1258
    %v1277 = vadd.f32 %v1221, %v1259
    %v1278 = vadd.f32 %v1222, %v1260
    %v1279 = vadd.f32 %v1223, %v1261
    %v1280 = vadd.f32 %v1224, %v1262
    %v1281 = vadd.f32 %v1225, %v1263
    %v1282 = vadd.f32 %v1226, %v1264
    %v1283 = vadd.f32 %v1227, %v1265
    %v1284 = vadd.f32 %v1228, %v1266
    %v1285 = vadd.f32 %v1229, %v1267
    %v1286 = vld [vmem:[%s257] sm:$0xff]
    %v1287 = vld [vmem:[%s257 + $0x8] sm:$0x1]
    %v1288 = vld [vmem:[%s257 + $0x10] sm:$0xff]
    %v1289 = vld [vmem:[%s257 + $0x18] sm:$0x1]
    %v1290 = vld [vmem:[%s257 + $0x20] sm:$0xff]
    %v1291 = vld [vmem:[%s257 + $0x28] sm:$0x1]
    %v1292 = vld [vmem:[%s257 + $0x30] sm:$0xff]
    %v1293 = vld [vmem:[%s257 + $0x38] sm:$0x1]
    %v1294 = vld [vmem:[%s257 + $0x40] sm:$0xff]
    %v1295 = vld [vmem:[%s257 + $0x48] sm:$0x1]
    %v1296 = vld [vmem:[%s257 + $0x50] sm:$0xff]
    %v1297 = vld [vmem:[%s257 + $0x58] sm:$0x1]
    %v1298 = vld [vmem:[%s257 + $0x60] sm:$0xff]
    %v1299 = vld [vmem:[%s257 + $0x68] sm:$0x1]
    %v1300 = vld [vmem:[%s257 + $0x70] sm:$0xff]
    %v1301 = vld [vmem:[%s257 + $0x78] sm:$0x1]
    %v1302 = vld [vmem:[%s257 + $0x80] sm:$0xff]
    %v1303 = vld [vmem:[%s257 + $0x88] sm:$0x1]
    %s1304 = sld [smem:[#allocation7 + $0x1a]]
    %v1305 = vstv %s1304
    %v1306 = vmul.f32 %v1286, %v1305
    %v1307 = vmul.f32 %v1287, %v1305
    %v1308 = vmul.f32 %v1288, %v1305
    %v1309 = vmul.f32 %v1289, %v1305
    %v1310 = vmul.f32 %v1290, %v1305
    %v1311 = vmul.f32 %v1291, %v1305
    %v1312 = vmul.f32 %v1292, %v1305
    %v1313 = vmul.f32 %v1293, %v1305
    %v1314 = vmul.f32 %v1294, %v1305
    %v1315 = vmul.f32 %v1295, %v1305
    %v1316 = vmul.f32 %v1296, %v1305
    %v1317 = vmul.f32 %v1297, %v1305
    %v1318 = vmul.f32 %v1298, %v1305
    %v1319 = vmul.f32 %v1299, %v1305
    %v1320 = vmul.f32 %v1300, %v1305
    %v1321 = vmul.f32 %v1301, %v1305
    %v1322 = vmul.f32 %v1302, %v1305
    %v1323 = vmul.f32 %v1303, %v1305
    %v1324 = vadd.f32 %v1268, %v1306
    %v1325 = vadd.f32 %v1269, %v1307
    %v1326 = vadd.f32 %v1270, %v1308
    %v1327 = vadd.f32 %v1271, %v1309
    %v1328 = vadd.f32 %v1272, %v1310
    %v1329 = vadd.f32 %v1273, %v1311
    %v1330 = vadd.f32 %v1274, %v1312
    %v1331 = vadd.f32 %v1275, %v1313
    %v1332 = vadd.f32 %v1276, %v1314
    %v1333 = vadd.f32 %v1277, %v1315
    %v1334 = vadd.f32 %v1278, %v1316
    %v1335 = vadd.f32 %v1279, %v1317
    %v1336 = vadd.f32 %v1280, %v1318
    %v1337 = vadd.f32 %v1281, %v1319
    %v1338 = vadd.f32 %v1282, %v1320
    %v1339 = vadd.f32 %v1283, %v1321
    %v1340 = vadd.f32 %v1284, %v1322
    %v1341 = vadd.f32 %v1285, %v1323
    %v1342 = vld [vmem:[%s314] sm:$0xff]
    %v1343 = vld [vmem:[%s314 + $0x8] sm:$0x1]
    %v1344 = vld [vmem:[%s314 + $0x10] sm:$0xff]
    %v1345 = vld [vmem:[%s314 + $0x18] sm:$0x1]
    %v1346 = vld [vmem:[%s314 + $0x20] sm:$0xff]
    %v1347 = vld [vmem:[%s314 + $0x28] sm:$0x1]
    %v1348 = vld [vmem:[%s314 + $0x30] sm:$0xff]
    %v1349 = vld [vmem:[%s314 + $0x38] sm:$0x1]
    %v1350 = vld [vmem:[%s314 + $0x40] sm:$0xff]
    %v1351 = vld [vmem:[%s314 + $0x48] sm:$0x1]
    %v1352 = vld [vmem:[%s314 + $0x50] sm:$0xff]
    %v1353 = vld [vmem:[%s314 + $0x58] sm:$0x1]
    %v1354 = vld [vmem:[%s314 + $0x60] sm:$0xff]
    %v1355 = vld [vmem:[%s314 + $0x68] sm:$0x1]
    %v1356 = vld [vmem:[%s314 + $0x70] sm:$0xff]
    %v1357 = vld [vmem:[%s314 + $0x78] sm:$0x1]
    %v1358 = vld [vmem:[%s314 + $0x80] sm:$0xff]
    %v1359 = vld [vmem:[%s314 + $0x88] sm:$0x1]
    %s1360 = sld [smem:[#allocation7 + $0x22]]
    %v1361 = vstv %s1360
    %v1362 = vmul.f32 %v1342, %v1361
    %v1363 = vmul.f32 %v1343, %v1361
    %v1364 = vmul.f32 %v1344, %v1361
    %v1365 = vmul.f32 %v1345, %v1361
    %v1366 = vmul.f32 %v1346, %v1361
    %v1367 = vmul.f32 %v1347, %v1361
    %v1368 = vmul.f32 %v1348, %v1361
    %v1369 = vmul.f32 %v1349, %v1361
    %v1370 = vmul.f32 %v1350, %v1361
    %v1371 = vmul.f32 %v1351, %v1361
    %v1372 = vmul.f32 %v1352, %v1361
    %v1373 = vmul.f32 %v1353, %v1361
    %v1374 = vmul.f32 %v1354, %v1361
    %v1375 = vmul.f32 %v1355, %v1361
    %v1376 = vmul.f32 %v1356, %v1361
    %v1377 = vmul.f32 %v1357, %v1361
    %v1378 = vmul.f32 %v1358, %v1361
    %v1379 = vmul.f32 %v1359, %v1361
    %v1380 = vadd.f32 %v1324, %v1362
    %v1381 = vadd.f32 %v1325, %v1363
    %v1382 = vadd.f32 %v1326, %v1364
    %v1383 = vadd.f32 %v1327, %v1365
    %v1384 = vadd.f32 %v1328, %v1366
    %v1385 = vadd.f32 %v1329, %v1367
    %v1386 = vadd.f32 %v1330, %v1368
    %v1387 = vadd.f32 %v1331, %v1369
    %v1388 = vadd.f32 %v1332, %v1370
    %v1389 = vadd.f32 %v1333, %v1371
    %v1390 = vadd.f32 %v1334, %v1372
    %v1391 = vadd.f32 %v1335, %v1373
    %v1392 = vadd.f32 %v1336, %v1374
    %v1393 = vadd.f32 %v1337, %v1375
    %v1394 = vadd.f32 %v1338, %v1376
    %v1395 = vadd.f32 %v1339, %v1377
    %v1396 = vadd.f32 %v1340, %v1378
    %v1397 = vadd.f32 %v1341, %v1379
    %v1398 = vld [vmem:[%s371] sm:$0xff]
    %v1399 = vld [vmem:[%s371 + $0x8] sm:$0x1]
    %v1400 = vld [vmem:[%s371 + $0x10] sm:$0xff]
    %v1401 = vld [vmem:[%s371 + $0x18] sm:$0x1]
    %v1402 = vld [vmem:[%s371 + $0x20] sm:$0xff]
    %v1403 = vld [vmem:[%s371 + $0x28] sm:$0x1]
    %v1404 = vld [vmem:[%s371 + $0x30] sm:$0xff]
    %v1405 = vld [vmem:[%s371 + $0x38] sm:$0x1]
    %v1406 = vld [vmem:[%s371 + $0x40] sm:$0xff]
    %v1407 = vld [vmem:[%s371 + $0x48] sm:$0x1]
    %v1408 = vld [vmem:[%s371 + $0x50] sm:$0xff]
    %v1409 = vld [vmem:[%s371 + $0x58] sm:$0x1]
    %v1410 = vld [vmem:[%s371 + $0x60] sm:$0xff]
    %v1411 = vld [vmem:[%s371 + $0x68] sm:$0x1]
    %v1412 = vld [vmem:[%s371 + $0x70] sm:$0xff]
    %v1413 = vld [vmem:[%s371 + $0x78] sm:$0x1]
    %v1414 = vld [vmem:[%s371 + $0x80] sm:$0xff]
    %v1415 = vld [vmem:[%s371 + $0x88] sm:$0x1]
    %s1416 = sld [smem:[#allocation7 + $0x2a]]
    %v1417 = vstv %s1416
    %v1418 = vmul.f32 %v1398, %v1417
    %v1419 = vmul.f32 %v1399, %v1417
    %v1420 = vmul.f32 %v1400, %v1417
    %v1421 = vmul.f32 %v1401, %v1417
    %v1422 = vmul.f32 %v1402, %v1417
    %v1423 = vmul.f32 %v1403, %v1417
    %v1424 = vmul.f32 %v1404, %v1417
    %v1425 = vmul.f32 %v1405, %v1417
    %v1426 = vmul.f32 %v1406, %v1417
    %v1427 = vmul.f32 %v1407, %v1417
    %v1428 = vmul.f32 %v1408, %v1417
    %v1429 = vmul.f32 %v1409, %v1417
    %v1430 = vmul.f32 %v1410, %v1417
    %v1431 = vmul.f32 %v1411, %v1417
    %v1432 = vmul.f32 %v1412, %v1417
    %v1433 = vmul.f32 %v1413, %v1417
    %v1434 = vmul.f32 %v1414, %v1417
    %v1435 = vmul.f32 %v1415, %v1417
    %v1436 = vadd.f32 %v1380, %v1418
    %v1437 = vadd.f32 %v1381, %v1419
    %v1438 = vadd.f32 %v1382, %v1420
    %v1439 = vadd.f32 %v1383, %v1421
    %v1440 = vadd.f32 %v1384, %v1422
    %v1441 = vadd.f32 %v1385, %v1423
    %v1442 = vadd.f32 %v1386, %v1424
    %v1443 = vadd.f32 %v1387, %v1425
    %v1444 = vadd.f32 %v1388, %v1426
    %v1445 = vadd.f32 %v1389, %v1427
    %v1446 = vadd.f32 %v1390, %v1428
    %v1447 = vadd.f32 %v1391, %v1429
    %v1448 = vadd.f32 %v1392, %v1430
    %v1449 = vadd.f32 %v1393, %v1431
    %v1450 = vadd.f32 %v1394, %v1432
    %v1451 = vadd.f32 %v1395, %v1433
    %v1452 = vadd.f32 %v1396, %v1434
    %v1453 = vadd.f32 %v1397, %v1435
    %v1454 = vld [vmem:[%s428] sm:$0xff]
    %v1455 = vld [vmem:[%s428 + $0x8] sm:$0x1]
    %v1456 = vld [vmem:[%s428 + $0x10] sm:$0xff]
    %v1457 = vld [vmem:[%s428 + $0x18] sm:$0x1]
    %v1458 = vld [vmem:[%s428 + $0x20] sm:$0xff]
    %v1459 = vld [vmem:[%s428 + $0x28] sm:$0x1]
    %v1460 = vld [vmem:[%s428 + $0x30] sm:$0xff]
    %v1461 = vld [vmem:[%s428 + $0x38] sm:$0x1]
    %v1462 = vld [vmem:[%s428 + $0x40] sm:$0xff]
    %v1463 = vld [vmem:[%s428 + $0x48] sm:$0x1]
    %v1464 = vld [vmem:[%s428 + $0x50] sm:$0xff]
    %v1465 = vld [vmem:[%s428 + $0x58] sm:$0x1]
    %v1466 = vld [vmem:[%s428 + $0x60] sm:$0xff]
    %v1467 = vld [vmem:[%s428 + $0x68] sm:$0x1]
    %v1468 = vld [vmem:[%s428 + $0x70] sm:$0xff]
    %v1469 = vld [vmem:[%s428 + $0x78] sm:$0x1]
    %v1470 = vld [vmem:[%s428 + $0x80] sm:$0xff]
    %v1471 = vld [vmem:[%s428 + $0x88] sm:$0x1]
    %s1472 = sld [smem:[#allocation7 + $0x32]]
    %v1473 = vstv %s1472
    %v1474 = vmul.f32 %v1454, %v1473
    %v1475 = vmul.f32 %v1455, %v1473
    %v1476 = vmul.f32 %v1456, %v1473
    %v1477 = vmul.f32 %v1457, %v1473
    %v1478 = vmul.f32 %v1458, %v1473
    %v1479 = vmul.f32 %v1459, %v1473
    %v1480 = vmul.f32 %v1460, %v1473
    %v1481 = vmul.f32 %v1461, %v1473
    %v1482 = vmul.f32 %v1462, %v1473
    %v1483 = vmul.f32 %v1463, %v1473
    %v1484 = vmul.f32 %v1464, %v1473
    %v1485 = vmul.f32 %v1465, %v1473
    %v1486 = vmul.f32 %v1466, %v1473
    %v1487 = vmul.f32 %v1467, %v1473
    %v1488 = vmul.f32 %v1468, %v1473
    %v1489 = vmul.f32 %v1469, %v1473
    %v1490 = vmul.f32 %v1470, %v1473
    %v1491 = vmul.f32 %v1471, %v1473
    %v1492 = vadd.f32 %v1436, %v1474
    %v1493 = vadd.f32 %v1437, %v1475
    %v1494 = vadd.f32 %v1438, %v1476
    %v1495 = vadd.f32 %v1439, %v1477
    %v1496 = vadd.f32 %v1440, %v1478
    %v1497 = vadd.f32 %v1441, %v1479
    %v1498 = vadd.f32 %v1442, %v1480
    %v1499 = vadd.f32 %v1443, %v1481
    %v1500 = vadd.f32 %v1444, %v1482
    %v1501 = vadd.f32 %v1445, %v1483
    %v1502 = vadd.f32 %v1446, %v1484
    %v1503 = vadd.f32 %v1447, %v1485
    %v1504 = vadd.f32 %v1448, %v1486
    %v1505 = vadd.f32 %v1449, %v1487
    %v1506 = vadd.f32 %v1450, %v1488
    %v1507 = vadd.f32 %v1451, %v1489
    %v1508 = vadd.f32 %v1452, %v1490
    %v1509 = vadd.f32 %v1453, %v1491
    %v1510 = vld [vmem:[%s485] sm:$0xff]
    %v1511 = vld [vmem:[%s485 + $0x8] sm:$0x1]
    %v1512 = vld [vmem:[%s485 + $0x10] sm:$0xff]
    %v1513 = vld [vmem:[%s485 + $0x18] sm:$0x1]
    %v1514 = vld [vmem:[%s485 + $0x20] sm:$0xff]
    %v1515 = vld [vmem:[%s485 + $0x28] sm:$0x1]
    %v1516 = vld [vmem:[%s485 + $0x30] sm:$0xff]
    %v1517 = vld [vmem:[%s485 + $0x38] sm:$0x1]
    %v1518 = vld [vmem:[%s485 + $0x40] sm:$0xff]
    %v1519 = vld [vmem:[%s485 + $0x48] sm:$0x1]
    %v1520 = vld [vmem:[%s485 + $0x50] sm:$0xff]
    %v1521 = vld [vmem:[%s485 + $0x58] sm:$0x1]
    %v1522 = vld [vmem:[%s485 + $0x60] sm:$0xff]
    %v1523 = vld [vmem:[%s485 + $0x68] sm:$0x1]
    %v1524 = vld [vmem:[%s485 + $0x70] sm:$0xff]
    %v1525 = vld [vmem:[%s485 + $0x78] sm:$0x1]
    %v1526 = vld [vmem:[%s485 + $0x80] sm:$0xff]
    %v1527 = vld [vmem:[%s485 + $0x88] sm:$0x1]
    %s1528 = sld [smem:[#allocation7 + $0x3a]]
    %v1529 = vstv %s1528
    %v1530 = vmul.f32 %v1510, %v1529
    %v1531 = vmul.f32 %v1511, %v1529
    %v1532 = vmul.f32 %v1512, %v1529
    %v1533 = vmul.f32 %v1513, %v1529
    %v1534 = vmul.f32 %v1514, %v1529
    %v1535 = vmul.f32 %v1515, %v1529
    %v1536 = vmul.f32 %v1516, %v1529
    %v1537 = vmul.f32 %v1517, %v1529
    %v1538 = vmul.f32 %v1518, %v1529
    %v1539 = vmul.f32 %v1519, %v1529
    %v1540 = vmul.f32 %v1520, %v1529
    %v1541 = vmul.f32 %v1521, %v1529
    %v1542 = vmul.f32 %v1522, %v1529
    %v1543 = vmul.f32 %v1523, %v1529
    %v1544 = vmul.f32 %v1524, %v1529
    %v1545 = vmul.f32 %v1525, %v1529
    %v1546 = vmul.f32 %v1526, %v1529
    %v1547 = vmul.f32 %v1527, %v1529
    %v1548 = vadd.f32 %v1492, %v1530
    %v1549 = vadd.f32 %v1493, %v1531
    %v1550 = vadd.f32 %v1494, %v1532
    %v1551 = vadd.f32 %v1495, %v1533
    %v1552 = vadd.f32 %v1496, %v1534
    %v1553 = vadd.f32 %v1497, %v1535
    %v1554 = vadd.f32 %v1498, %v1536
    %v1555 = vadd.f32 %v1499, %v1537
    %v1556 = vadd.f32 %v1500, %v1538
    %v1557 = vadd.f32 %v1501, %v1539
    %v1558 = vadd.f32 %v1502, %v1540
    %v1559 = vadd.f32 %v1503, %v1541
    %v1560 = vadd.f32 %v1504, %v1542
    %v1561 = vadd.f32 %v1505, %v1543
    %v1562 = vadd.f32 %v1506, %v1544
    %v1563 = vadd.f32 %v1507, %v1545
    %v1564 = vadd.f32 %v1508, %v1546
    %v1565 = vadd.f32 %v1509, %v1547
    %v1566 = vld [vmem:[#allocation3 + $0x3] sm:$0xff]
    %v1567 = vld [vmem:[#allocation3 + $0xb] sm:$0x1]
    %v1568 = vld [vmem:[#allocation3 + $0x13] sm:$0xff]
    %v1569 = vld [vmem:[#allocation3 + $0x1b] sm:$0x1]
    %v1570 = vld [vmem:[#allocation3 + $0x23] sm:$0xff]
    %v1571 = vld [vmem:[#allocation3 + $0x2b] sm:$0x1]
    %v1572 = vld [vmem:[#allocation3 + $0x33] sm:$0xff]
    %v1573 = vld [vmem:[#allocation3 + $0x3b] sm:$0x1]
    %v1574 = vld [vmem:[#allocation3 + $0x43] sm:$0xff]
    %v1575 = vld [vmem:[#allocation3 + $0x4b] sm:$0x1]
    %v1576 = vld [vmem:[#allocation3 + $0x53] sm:$0xff]
    %v1577 = vld [vmem:[#allocation3 + $0x5b] sm:$0x1]
    %v1578 = vld [vmem:[#allocation3 + $0x63] sm:$0xff]
    %v1579 = vld [vmem:[#allocation3 + $0x6b] sm:$0x1]
    %v1580 = vld [vmem:[#allocation3 + $0x73] sm:$0xff]
    %v1581 = vld [vmem:[#allocation3 + $0x7b] sm:$0x1]
    %v1582 = vld [vmem:[#allocation3 + $0x83] sm:$0xff]
    %v1583 = vld [vmem:[#allocation3 + $0x8b] sm:$0x1]
    %v1584 = vld [vmem:[#allocation3 + $0x93] sm:$0xff]
    %v1585 = vld [vmem:[#allocation3 + $0x9b] sm:$0x1]
    %v1586 = vld [vmem:[#allocation3 + $0xa3] sm:$0xff]
    %v1587 = vld [vmem:[#allocation3 + $0xab] sm:$0x1]
    %v1588 = vld [vmem:[#allocation3 + $0xb3] sm:$0xff]
    %v1589 = vld [vmem:[#allocation3 + $0xbb] sm:$0x1]
    %v1590 = vld [vmem:[#allocation3 + $0xc3] sm:$0xff]
    %v1591 = vld [vmem:[#allocation3 + $0xcb] sm:$0x1]
    %v1592 = vld [vmem:[#allocation3 + $0xd3] sm:$0xff]
    %v1593 = vld [vmem:[#allocation3 + $0xdb] sm:$0x1]
    %v1594 = vld [vmem:[#allocation3 + $0xe3] sm:$0xff]
    %v1595 = vld [vmem:[#allocation3 + $0xeb] sm:$0x1]
    %v1596 = vld [vmem:[#allocation3 + $0xf3] sm:$0xff]
    %v1597 = vld [vmem:[#allocation3 + $0xfb] sm:$0x1]
    %1598 = vst [vmem:[#allocation2] sm:$0xff] %v1566
    %1599 = vst [vmem:[#allocation2 + $0x8] sm:$0x1] %v1567
    %1600 = vst [vmem:[#allocation2 + $0x10] sm:$0xff] %v1568
    %1601 = vst [vmem:[#allocation2 + $0x18] sm:$0x1] %v1569
    %1602 = vst [vmem:[#allocation2 + $0x20] sm:$0xff] %v1570
    %1603 = vst [vmem:[#allocation2 + $0x28] sm:$0x1] %v1571
    %1604 = vst [vmem:[#allocation2 + $0x30] sm:$0xff] %v1572
    %1605 = vst [vmem:[#allocation2 + $0x38] sm:$0x1] %v1573
    %1606 = vst [vmem:[#allocation2 + $0x40] sm:$0xff] %v1574
    %1607 = vst [vmem:[#allocation2 + $0x48] sm:$0x1] %v1575
    %1608 = vst [vmem:[#allocation2 + $0x50] sm:$0xff] %v1576
    %1609 = vst [vmem:[#allocation2 + $0x58] sm:$0x1] %v1577
    %1610 = vst [vmem:[#allocation2 + $0x60] sm:$0xff] %v1578
    %1611 = vst [vmem:[#allocation2 + $0x68] sm:$0x1] %v1579
    %1612 = vst [vmem:[#allocation2 + $0x70] sm:$0xff] %v1580
    %1613 = vst [vmem:[#allocation2 + $0x78] sm:$0x1] %v1581
    %1614 = vst [vmem:[#allocation2 + $0x80] sm:$0xff] %v1582
    %1615 = vst [vmem:[#allocation2 + $0x88] sm:$0x1] %v1583
    %1616 = vst [vmem:[#allocation2 + $0x90] sm:$0xff] %v1584
    %1617 = vst [vmem:[#allocation2 + $0x98] sm:$0x1] %v1585
    %1618 = vst [vmem:[#allocation2 + $0xa0] sm:$0xff] %v1586
    %1619 = vst [vmem:[#allocation2 + $0xa8] sm:$0x1] %v1587
    %1620 = vst [vmem:[#allocation2 + $0xb0] sm:$0xff] %v1588
    %1621 = vst [vmem:[#allocation2 + $0xb8] sm:$0x1] %v1589
    %1622 = vst [vmem:[#allocation2 + $0xc0] sm:$0xff] %v1590
    %1623 = vst [vmem:[#allocation2 + $0xc8] sm:$0x1] %v1591
    %1624 = vst [vmem:[#allocation2 + $0xd0] sm:$0xff] %v1592
    %1625 = vst [vmem:[#allocation2 + $0xd8] sm:$0x1] %v1593
    %1626 = vst [vmem:[#allocation2 + $0xe0] sm:$0xff] %v1594
    %1627 = vst [vmem:[#allocation2 + $0xe8] sm:$0x1] %v1595
    %1628 = vst [vmem:[#allocation2 + $0xf0] sm:$0xff] %v1596
    %1629 = vst [vmem:[#allocation2 + $0xf8] sm:$0x1] %v1597
    %v1630 = vld [vmem:[#allocation2] sm:$0xff]
    %v1631 = vld [vmem:[#allocation2 + $0x8] sm:$0x1]
    %v1632 = vld [vmem:[#allocation2 + $0x10] sm:$0xff]
    %v1633 = vld [vmem:[#allocation2 + $0x18] sm:$0x1]
    %v1634 = vld [vmem:[#allocation2 + $0x20] sm:$0xff]
    %v1635 = vld [vmem:[#allocation2 + $0x28] sm:$0x1]
    %v1636 = vld [vmem:[#allocation2 + $0x30] sm:$0xff]
    %v1637 = vld [vmem:[#allocation2 + $0x38] sm:$0x1]
    %v1638 = vld [vmem:[#allocation2 + $0x40] sm:$0xff]
    %v1639 = vld [vmem:[#allocation2 + $0x48] sm:$0x1]
    %v1640 = vld [vmem:[#allocation2 + $0x50] sm:$0xff]
    %v1641 = vld [vmem:[#allocation2 + $0x58] sm:$0x1]
    %v1642 = vld [vmem:[#allocation2 + $0x60] sm:$0xff]
    %v1643 = vld [vmem:[#allocation2 + $0x68] sm:$0x1]
    %v1644 = vld [vmem:[#allocation2 + $0x70] sm:$0xff]
    %v1645 = vld [vmem:[#allocation2 + $0x78] sm:$0x1]
    %v1646 = vld [vmem:[#allocation2 + $0x80] sm:$0xff]
    %v1647 = vld [vmem:[#allocation2 + $0x88] sm:$0x1]
    %s1648 = sld [smem:[#allocation7 + $0x3]]
    %v1649 = vstv %s1648
    %v1650 = vmul.f32 %v1630, %v1649
    %v1651 = vmul.f32 %v1631, %v1649
    %v1652 = vmul.f32 %v1632, %v1649
    %v1653 = vmul.f32 %v1633, %v1649
    %v1654 = vmul.f32 %v1634, %v1649
    %v1655 = vmul.f32 %v1635, %v1649
    %v1656 = vmul.f32 %v1636, %v1649
    %v1657 = vmul.f32 %v1637, %v1649
    %v1658 = vmul.f32 %v1638, %v1649
    %v1659 = vmul.f32 %v1639, %v1649
    %v1660 = vmul.f32 %v1640, %v1649
    %v1661 = vmul.f32 %v1641, %v1649
    %v1662 = vmul.f32 %v1642, %v1649
    %v1663 = vmul.f32 %v1643, %v1649
    %v1664 = vmul.f32 %v1644, %v1649
    %v1665 = vmul.f32 %v1645, %v1649
    %v1666 = vmul.f32 %v1646, %v1649
    %v1667 = vmul.f32 %v1647, %v1649
    %v1668 = vadd.f32 %v1548, %v1650
    %v1669 = vadd.f32 %v1549, %v1651
    %v1670 = vadd.f32 %v1550, %v1652
    %v1671 = vadd.f32 %v1551, %v1653
    %v1672 = vadd.f32 %v1552, %v1654
    %v1673 = vadd.f32 %v1553, %v1655
    %v1674 = vadd.f32 %v1554, %v1656
    %v1675 = vadd.f32 %v1555, %v1657
    %v1676 = vadd.f32 %v1556, %v1658
    %v1677 = vadd.f32 %v1557, %v1659
    %v1678 = vadd.f32 %v1558, %v1660
    %v1679 = vadd.f32 %v1559, %v1661
    %v1680 = vadd.f32 %v1560, %v1662
    %v1681 = vadd.f32 %v1561, %v1663
    %v1682 = vadd.f32 %v1562, %v1664
    %v1683 = vadd.f32 %v1563, %v1665
    %v1684 = vadd.f32 %v1564, %v1666
    %v1685 = vadd.f32 %v1565, %v1667
    %v1686 = vld [vmem:[%s143] sm:$0xff]
    %v1687 = vld [vmem:[%s143 + $0x8] sm:$0x1]
    %v1688 = vld [vmem:[%s143 + $0x10] sm:$0xff]
    %v1689 = vld [vmem:[%s143 + $0x18] sm:$0x1]
    %v1690 = vld [vmem:[%s143 + $0x20] sm:$0xff]
    %v1691 = vld [vmem:[%s143 + $0x28] sm:$0x1]
    %v1692 = vld [vmem:[%s143 + $0x30] sm:$0xff]
    %v1693 = vld [vmem:[%s143 + $0x38] sm:$0x1]
    %v1694 = vld [vmem:[%s143 + $0x40] sm:$0xff]
    %v1695 = vld [vmem:[%s143 + $0x48] sm:$0x1]
    %v1696 = vld [vmem:[%s143 + $0x50] sm:$0xff]
    %v1697 = vld [vmem:[%s143 + $0x58] sm:$0x1]
    %v1698 = vld [vmem:[%s143 + $0x60] sm:$0xff]
    %v1699 = vld [vmem:[%s143 + $0x68] sm:$0x1]
    %v1700 = vld [vmem:[%s143 + $0x70] sm:$0xff]
    %v1701 = vld [vmem:[%s143 + $0x78] sm:$0x1]
    %v1702 = vld [vmem:[%s143 + $0x80] sm:$0xff]
    %v1703 = vld [vmem:[%s143 + $0x88] sm:$0x1]
    %s1704 = sld [smem:[#allocation7 + $0xb]]
    %v1705 = vstv %s1704
    %v1706 = vmul.f32 %v1686, %v1705
    %v1707 = vmul.f32 %v1687, %v1705
    %v1708 = vmul.f32 %v1688, %v1705
    %v1709 = vmul.f32 %v1689, %v1705
    %v1710 = vmul.f32 %v1690, %v1705
    %v1711 = vmul.f32 %v1691, %v1705
    %v1712 = vmul.f32 %v1692, %v1705
    %v1713 = vmul.f32 %v1693, %v1705
    %v1714 = vmul.f32 %v1694, %v1705
    %v1715 = vmul.f32 %v1695, %v1705
    %v1716 = vmul.f32 %v1696, %v1705
    %v1717 = vmul.f32 %v1697, %v1705
    %v1718 = vmul.f32 %v1698, %v1705
    %v1719 = vmul.f32 %v1699, %v1705
    %v1720 = vmul.f32 %v1700, %v1705
    %v1721 = vmul.f32 %v1701, %v1705
    %v1722 = vmul.f32 %v1702, %v1705
    %v1723 = vmul.f32 %v1703, %v1705
    %v1724 = vadd.f32 %v1668, %v1706
    %v1725 = vadd.f32 %v1669, %v1707
    %v1726 = vadd.f32 %v1670, %v1708
    %v1727 = vadd.f32 %v1671, %v1709
    %v1728 = vadd.f32 %v1672, %v1710
    %v1729 = vadd.f32 %v1673, %v1711
    %v1730 = vadd.f32 %v1674, %v1712
    %v1731 = vadd.f32 %v1675, %v1713
    %v1732 = vadd.f32 %v1676, %v1714
    %v1733 = vadd.f32 %v1677, %v1715
    %v1734 = vadd.f32 %v1678, %v1716
    %v1735 = vadd.f32 %v1679, %v1717
    %v1736 = vadd.f32 %v1680, %v1718
    %v1737 = vadd.f32 %v1681, %v1719
    %v1738 = vadd.f32 %v1682, %v1720
    %v1739 = vadd.f32 %v1683, %v1721
    %v1740 = vadd.f32 %v1684, %v1722
    %v1741 = vadd.f32 %v1685, %v1723
    %v1742 = vld [vmem:[%s200] sm:$0xff]
    %v1743 = vld [vmem:[%s200 + $0x8] sm:$0x1]
    %v1744 = vld [vmem:[%s200 + $0x10] sm:$0xff]
    %v1745 = vld [vmem:[%s200 + $0x18] sm:$0x1]
    %v1746 = vld [vmem:[%s200 + $0x20] sm:$0xff]
    %v1747 = vld [vmem:[%s200 + $0x28] sm:$0x1]
    %v1748 = vld [vmem:[%s200 + $0x30] sm:$0xff]
    %v1749 = vld [vmem:[%s200 + $0x38] sm:$0x1]
    %v1750 = vld [vmem:[%s200 + $0x40] sm:$0xff]
    %v1751 = vld [vmem:[%s200 + $0x48] sm:$0x1]
    %v1752 = vld [vmem:[%s200 + $0x50] sm:$0xff]
    %v1753 = vld [vmem:[%s200 + $0x58] sm:$0x1]
    %v1754 = vld [vmem:[%s200 + $0x60] sm:$0xff]
    %v1755 = vld [vmem:[%s200 + $0x68] sm:$0x1]
    %v1756 = vld [vmem:[%s200 + $0x70] sm:$0xff]
    %v1757 = vld [vmem:[%s200 + $0x78] sm:$0x1]
    %v1758 = vld [vmem:[%s200 + $0x80] sm:$0xff]
    %v1759 = vld [vmem:[%s200 + $0x88] sm:$0x1]
    %s1760 = sld [smem:[#allocation7 + $0x13]]
    %v1761 = vstv %s1760
    %v1762 = vmul.f32 %v1742, %v1761
    %v1763 = vmul.f32 %v1743, %v1761
    %v1764 = vmul.f32 %v1744, %v1761
    %v1765 = vmul.f32 %v1745, %v1761
    %v1766 = vmul.f32 %v1746, %v1761
    %v1767 = vmul.f32 %v1747, %v1761
    %v1768 = vmul.f32 %v1748, %v1761
    %v1769 = vmul.f32 %v1749, %v1761
    %v1770 = vmul.f32 %v1750, %v1761
    %v1771 = vmul.f32 %v1751, %v1761
    %v1772 = vmul.f32 %v1752, %v1761
    %v1773 = vmul.f32 %v1753, %v1761
    %v1774 = vmul.f32 %v1754, %v1761
    %v1775 = vmul.f32 %v1755, %v1761
    %v1776 = vmul.f32 %v1756, %v1761
    %v1777 = vmul.f32 %v1757, %v1761
    %v1778 = vmul.f32 %v1758, %v1761
    %v1779 = vmul.f32 %v1759, %v1761
    %v1780 = vadd.f32 %v1724, %v1762
    %v1781 = vadd.f32 %v1725, %v1763
    %v1782 = vadd.f32 %v1726, %v1764
    %v1783 = vadd.f32 %v1727, %v1765
    %v1784 = vadd.f32 %v1728, %v1766
    %v1785 = vadd.f32 %v1729, %v1767
    %v1786 = vadd.f32 %v1730, %v1768
    %v1787 = vadd.f32 %v1731, %v1769
    %v1788 = vadd.f32 %v1732, %v1770
    %v1789 = vadd.f32 %v1733, %v1771
    %v1790 = vadd.f32 %v1734, %v1772
    %v1791 = vadd.f32 %v1735, %v1773
    %v1792 = vadd.f32 %v1736, %v1774
    %v1793 = vadd.f32 %v1737, %v1775
    %v1794 = vadd.f32 %v1738, %v1776
    %v1795 = vadd.f32 %v1739, %v1777
    %v1796 = vadd.f32 %v1740, %v1778
    %v1797 = vadd.f32 %v1741, %v1779
    %v1798 = vld [vmem:[%s257] sm:$0xff]
    %v1799 = vld [vmem:[%s257 + $0x8] sm:$0x1]
    %v1800 = vld [vmem:[%s257 + $0x10] sm:$0xff]
    %v1801 = vld [vmem:[%s257 + $0x18] sm:$0x1]
    %v1802 = vld [vmem:[%s257 + $0x20] sm:$0xff]
    %v1803 = vld [vmem:[%s257 + $0x28] sm:$0x1]
    %v1804 = vld [vmem:[%s257 + $0x30] sm:$0xff]
    %v1805 = vld [vmem:[%s257 + $0x38] sm:$0x1]
    %v1806 = vld [vmem:[%s257 + $0x40] sm:$0xff]
    %v1807 = vld [vmem:[%s257 + $0x48] sm:$0x1]
    %v1808 = vld [vmem:[%s257 + $0x50] sm:$0xff]
    %v1809 = vld [vmem:[%s257 + $0x58] sm:$0x1]
    %v1810 = vld [vmem:[%s257 + $0x60] sm:$0xff]
    %v1811 = vld [vmem:[%s257 + $0x68] sm:$0x1]
    %v1812 = vld [vmem:[%s257 + $0x70] sm:$0xff]
    %v1813 = vld [vmem:[%s257 + $0x78] sm:$0x1]
    %v1814 = vld [vmem:[%s257 + $0x80] sm:$0xff]
    %v1815 = vld [vmem:[%s257 + $0x88] sm:$0x1]
    %s1816 = sld [smem:[#allocation7 + $0x1b]]
    %v1817 = vstv %s1816
    %v1818 = vmul.f32 %v1798, %v1817
    %v1819 = vmul.f32 %v1799, %v1817
    %v1820 = vmul.f32 %v1800, %v1817
    %v1821 = vmul.f32 %v1801, %v1817
    %v1822 = vmul.f32 %v1802, %v1817
    %v1823 = vmul.f32 %v1803, %v1817
    %v1824 = vmul.f32 %v1804, %v1817
    %v1825 = vmul.f32 %v1805, %v1817
    %v1826 = vmul.f32 %v1806, %v1817
    %v1827 = vmul.f32 %v1807, %v1817
    %v1828 = vmul.f32 %v1808, %v1817
    %v1829 = vmul.f32 %v1809, %v1817
    %v1830 = vmul.f32 %v1810, %v1817
    %v1831 = vmul.f32 %v1811, %v1817
    %v1832 = vmul.f32 %v1812, %v1817
    %v1833 = vmul.f32 %v1813, %v1817
    %v1834 = vmul.f32 %v1814, %v1817
    %v1835 = vmul.f32 %v1815, %v1817
    %v1836 = vadd.f32 %v1780, %v1818
    %v1837 = vadd.f32 %v1781, %v1819
    %v1838 = vadd.f32 %v1782, %v1820
    %v1839 = vadd.f32 %v1783, %v1821
    %v1840 = vadd.f32 %v1784, %v1822
    %v1841 = vadd.f32 %v1785, %v1823
    %v1842 = vadd.f32 %v1786, %v1824
    %v1843 = vadd.f32 %v1787, %v1825
    %v1844 = vadd.f32 %v1788, %v1826
    %v1845 = vadd.f32 %v1789, %v1827
    %v1846 = vadd.f32 %v1790, %v1828
    %v1847 = vadd.f32 %v1791, %v1829
    %v1848 = vadd.f32 %v1792, %v1830
    %v1849 = vadd.f32 %v1793, %v1831
    %v1850 = vadd.f32 %v1794, %v1832
    %v1851 = vadd.f32 %v1795, %v1833
    %v1852 = vadd.f32 %v1796, %v1834
    %v1853 = vadd.f32 %v1797, %v1835
    %v1854 = vld [vmem:[%s314] sm:$0xff]
    %v1855 = vld [vmem:[%s314 + $0x8] sm:$0x1]
    %v1856 = vld [vmem:[%s314 + $0x10] sm:$0xff]
    %v1857 = vld [vmem:[%s314 + $0x18] sm:$0x1]
    %v1858 = vld [vmem:[%s314 + $0x20] sm:$0xff]
    %v1859 = vld [vmem:[%s314 + $0x28] sm:$0x1]
    %v1860 = vld [vmem:[%s314 + $0x30] sm:$0xff]
    %v1861 = vld [vmem:[%s314 + $0x38] sm:$0x1]
    %v1862 = vld [vmem:[%s314 + $0x40] sm:$0xff]
    %v1863 = vld [vmem:[%s314 + $0x48] sm:$0x1]
    %v1864 = vld [vmem:[%s314 + $0x50] sm:$0xff]
    %v1865 = vld [vmem:[%s314 + $0x58] sm:$0x1]
    %v1866 = vld [vmem:[%s314 + $0x60] sm:$0xff]
    %v1867 = vld [vmem:[%s314 + $0x68] sm:$0x1]
    %v1868 = vld [vmem:[%s314 + $0x70] sm:$0xff]
    %v1869 = vld [vmem:[%s314 + $0x78] sm:$0x1]
    %v1870 = vld [vmem:[%s314 + $0x80] sm:$0xff]
    %v1871 = vld [vmem:[%s314 + $0x88] sm:$0x1]
    %s1872 = sld [smem:[#allocation7 + $0x23]]
    %v1873 = vstv %s1872
    %v1874 = vmul.f32 %v1854, %v1873
    %v1875 = vmul.f32 %v1855, %v1873
    %v1876 = vmul.f32 %v1856, %v1873
    %v1877 = vmul.f32 %v1857, %v1873
    %v1878 = vmul.f32 %v1858, %v1873
    %v1879 = vmul.f32 %v1859, %v1873
    %v1880 = vmul.f32 %v1860, %v1873
    %v1881 = vmul.f32 %v1861, %v1873
    %v1882 = vmul.f32 %v1862, %v1873
    %v1883 = vmul.f32 %v1863, %v1873
    %v1884 = vmul.f32 %v1864, %v1873
    %v1885 = vmul.f32 %v1865, %v1873
    %v1886 = vmul.f32 %v1866, %v1873
    %v1887 = vmul.f32 %v1867, %v1873
    %v1888 = vmul.f32 %v1868, %v1873
    %v1889 = vmul.f32 %v1869, %v1873
    %v1890 = vmul.f32 %v1870, %v1873
    %v1891 = vmul.f32 %v1871, %v1873
    %v1892 = vadd.f32 %v1836, %v1874
    %v1893 = vadd.f32 %v1837, %v1875
    %v1894 = vadd.f32 %v1838, %v1876
    %v1895 = vadd.f32 %v1839, %v1877
    %v1896 = vadd.f32 %v1840, %v1878
    %v1897 = vadd.f32 %v1841, %v1879
    %v1898 = vadd.f32 %v1842, %v1880
    %v1899 = vadd.f32 %v1843, %v1881
    %v1900 = vadd.f32 %v1844, %v1882
    %v1901 = vadd.f32 %v1845, %v1883
    %v1902 = vadd.f32 %v1846, %v1884
    %v1903 = vadd.f32 %v1847, %v1885
    %v1904 = vadd.f32 %v1848, %v1886
    %v1905 = vadd.f32 %v1849, %v1887
    %v1906 = vadd.f32 %v1850, %v1888
    %v1907 = vadd.f32 %v1851, %v1889
    %v1908 = vadd.f32 %v1852, %v1890
    %v1909 = vadd.f32 %v1853, %v1891
    %v1910 = vld [vmem:[%s371] sm:$0xff]
    %v1911 = vld [vmem:[%s371 + $0x8] sm:$0x1]
    %v1912 = vld [vmem:[%s371 + $0x10] sm:$0xff]
    %v1913 = vld [vmem:[%s371 + $0x18] sm:$0x1]
    %v1914 = vld [vmem:[%s371 + $0x20] sm:$0xff]
    %v1915 = vld [vmem:[%s371 + $0x28] sm:$0x1]
    %v1916 = vld [vmem:[%s371 + $0x30] sm:$0xff]
    %v1917 = vld [vmem:[%s371 + $0x38] sm:$0x1]
    %v1918 = vld [vmem:[%s371 + $0x40] sm:$0xff]
    %v1919 = vld [vmem:[%s371 + $0x48] sm:$0x1]
    %v1920 = vld [vmem:[%s371 + $0x50] sm:$0xff]
    %v1921 = vld [vmem:[%s371 + $0x58] sm:$0x1]
    %v1922 = vld [vmem:[%s371 + $0x60] sm:$0xff]
    %v1923 = vld [vmem:[%s371 + $0x68] sm:$0x1]
    %v1924 = vld [vmem:[%s371 + $0x70] sm:$0xff]
    %v1925 = vld [vmem:[%s371 + $0x78] sm:$0x1]
    %v1926 = vld [vmem:[%s371 + $0x80] sm:$0xff]
    %v1927 = vld [vmem:[%s371 + $0x88] sm:$0x1]
    %s1928 = sld [smem:[#allocation7 + $0x2b]]
    %v1929 = vstv %s1928
    %v1930 = vmul.f32 %v1910, %v1929
    %v1931 = vmul.f32 %v1911, %v1929
    %v1932 = vmul.f32 %v1912, %v1929
    %v1933 = vmul.f32 %v1913, %v1929
    %v1934 = vmul.f32 %v1914, %v1929
    %v1935 = vmul.f32 %v1915, %v1929
    %v1936 = vmul.f32 %v1916, %v1929
    %v1937 = vmul.f32 %v1917, %v1929
    %v1938 = vmul.f32 %v1918, %v1929
    %v1939 = vmul.f32 %v1919, %v1929
    %v1940 = vmul.f32 %v1920, %v1929
    %v1941 = vmul.f32 %v1921, %v1929
    %v1942 = vmul.f32 %v1922, %v1929
    %v1943 = vmul.f32 %v1923, %v1929
    %v1944 = vmul.f32 %v1924, %v1929
    %v1945 = vmul.f32 %v1925, %v1929
    %v1946 = vmul.f32 %v1926, %v1929
    %v1947 = vmul.f32 %v1927, %v1929
    %v1948 = vadd.f32 %v1892, %v1930
    %v1949 = vadd.f32 %v1893, %v1931
    %v1950 = vadd.f32 %v1894, %v1932
    %v1951 = vadd.f32 %v1895, %v1933
    %v1952 = vadd.f32 %v1896, %v1934
    %v1953 = vadd.f32 %v1897, %v1935
    %v1954 = vadd.f32 %v1898, %v1936
    %v1955 = vadd.f32 %v1899, %v1937
    %v1956 = vadd.f32 %v1900, %v1938
    %v1957 = vadd.f32 %v1901, %v1939
    %v1958 = vadd.f32 %v1902, %v1940
    %v1959 = vadd.f32 %v1903, %v1941
    %v1960 = vadd.f32 %v1904, %v1942
    %v1961 = vadd.f32 %v1905, %v1943
    %v1962 = vadd.f32 %v1906, %v1944
    %v1963 = vadd.f32 %v1907, %v1945
    %v1964 = vadd.f32 %v1908, %v1946
    %v1965 = vadd.f32 %v1909, %v1947
    %v1966 = vld [vmem:[%s428] sm:$0xff]
    %v1967 = vld [vmem:[%s428 + $0x8] sm:$0x1]
    %v1968 = vld [vmem:[%s428 + $0x10] sm:$0xff]
    %v1969 = vld [vmem:[%s428 + $0x18] sm:$0x1]
    %v1970 = vld [vmem:[%s428 + $0x20] sm:$0xff]
    %v1971 = vld [vmem:[%s428 + $0x28] sm:$0x1]
    %v1972 = vld [vmem:[%s428 + $0x30] sm:$0xff]
    %v1973 = vld [vmem:[%s428 + $0x38] sm:$0x1]
    %v1974 = vld [vmem:[%s428 + $0x40] sm:$0xff]
    %v1975 = vld [vmem:[%s428 + $0x48] sm:$0x1]
    %v1976 = vld [vmem:[%s428 + $0x50] sm:$0xff]
    %v1977 = vld [vmem:[%s428 + $0x58] sm:$0x1]
    %v1978 = vld [vmem:[%s428 + $0x60] sm:$0xff]
    %v1979 = vld [vmem:[%s428 + $0x68] sm:$0x1]
    %v1980 = vld [vmem:[%s428 + $0x70] sm:$0xff]
    %v1981 = vld [vmem:[%s428 + $0x78] sm:$0x1]
    %v1982 = vld [vmem:[%s428 + $0x80] sm:$0xff]
    %v1983 = vld [vmem:[%s428 + $0x88] sm:$0x1]
    %s1984 = sld [smem:[#allocation7 + $0x33]]
    %v1985 = vstv %s1984
    %v1986 = vmul.f32 %v1966, %v1985
    %v1987 = vmul.f32 %v1967, %v1985
    %v1988 = vmul.f32 %v1968, %v1985
    %v1989 = vmul.f32 %v1969, %v1985
    %v1990 = vmul.f32 %v1970, %v1985
    %v1991 = vmul.f32 %v1971, %v1985
    %v1992 = vmul.f32 %v1972, %v1985
    %v1993 = vmul.f32 %v1973, %v1985
    %v1994 = vmul.f32 %v1974, %v1985
    %v1995 = vmul.f32 %v1975, %v1985
    %v1996 = vmul.f32 %v1976, %v1985
    %v1997 = vmul.f32 %v1977, %v1985
    %v1998 = vmul.f32 %v1978, %v1985
    %v1999 = vmul.f32 %v1979, %v1985
    %v2000 = vmul.f32 %v1980, %v1985
    %v2001 = vmul.f32 %v1981, %v1985
    %v2002 = vmul.f32 %v1982, %v1985
    %v2003 = vmul.f32 %v1983, %v1985
    %v2004 = vadd.f32 %v1948, %v1986
    %v2005 = vadd.f32 %v1949, %v1987
    %v2006 = vadd.f32 %v1950, %v1988
    %v2007 = vadd.f32 %v1951, %v1989
    %v2008 = vadd.f32 %v1952, %v1990
    %v2009 = vadd.f32 %v1953, %v1991
    %v2010 = vadd.f32 %v1954, %v1992
    %v2011 = vadd.f32 %v1955, %v1993
    %v2012 = vadd.f32 %v1956, %v1994
    %v2013 = vadd.f32 %v1957, %v1995
    %v2014 = vadd.f32 %v1958, %v1996
    %v2015 = vadd.f32 %v1959, %v1997
    %v2016 = vadd.f32 %v1960, %v1998
    %v2017 = vadd.f32 %v1961, %v1999
    %v2018 = vadd.f32 %v1962, %v2000
    %v2019 = vadd.f32 %v1963, %v2001
    %v2020 = vadd.f32 %v1964, %v2002
    %v2021 = vadd.f32 %v1965, %v2003
    %v2022 = vld [vmem:[%s485] sm:$0xff]
    %v2023 = vld [vmem:[%s485 + $0x8] sm:$0x1]
    %v2024 = vld [vmem:[%s485 + $0x10] sm:$0xff]
    %v2025 = vld [vmem:[%s485 + $0x18] sm:$0x1]
    %v2026 = vld [vmem:[%s485 + $0x20] sm:$0xff]
    %v2027 = vld [vmem:[%s485 + $0x28] sm:$0x1]
    %v2028 = vld [vmem:[%s485 + $0x30] sm:$0xff]
    %v2029 = vld [vmem:[%s485 + $0x38] sm:$0x1]
    %v2030 = vld [vmem:[%s485 + $0x40] sm:$0xff]
    %v2031 = vld [vmem:[%s485 + $0x48] sm:$0x1]
    %v2032 = vld [vmem:[%s485 + $0x50] sm:$0xff]
    %v2033 = vld [vmem:[%s485 + $0x58] sm:$0x1]
    %v2034 = vld [vmem:[%s485 + $0x60] sm:$0xff]
    %v2035 = vld [vmem:[%s485 + $0x68] sm:$0x1]
    %v2036 = vld [vmem:[%s485 + $0x70] sm:$0xff]
    %v2037 = vld [vmem:[%s485 + $0x78] sm:$0x1]
    %v2038 = vld [vmem:[%s485 + $0x80] sm:$0xff]
    %v2039 = vld [vmem:[%s485 + $0x88] sm:$0x1]
    %s2040 = sld [smem:[#allocation7 + $0x3b]]
    %v2041 = vstv %s2040
    %v2042 = vmul.f32 %v2022, %v2041
    %v2043 = vmul.f32 %v2023, %v2041
    %v2044 = vmul.f32 %v2024, %v2041
    %v2045 = vmul.f32 %v2025, %v2041
    %v2046 = vmul.f32 %v2026, %v2041
    %v2047 = vmul.f32 %v2027, %v2041
    %v2048 = vmul.f32 %v2028, %v2041
    %v2049 = vmul.f32 %v2029, %v2041
    %v2050 = vmul.f32 %v2030, %v2041
    %v2051 = vmul.f32 %v2031, %v2041
    %v2052 = vmul.f32 %v2032, %v2041
    %v2053 = vmul.f32 %v2033, %v2041
    %v2054 = vmul.f32 %v2034, %v2041
    %v2055 = vmul.f32 %v2035, %v2041
    %v2056 = vmul.f32 %v2036, %v2041
    %v2057 = vmul.f32 %v2037, %v2041
    %v2058 = vmul.f32 %v2038, %v2041
    %v2059 = vmul.f32 %v2039, %v2041
    %v2060 = vadd.f32 %v2004, %v2042
    %v2061 = vadd.f32 %v2005, %v2043
    %v2062 = vadd.f32 %v2006, %v2044
    %v2063 = vadd.f32 %v2007, %v2045
    %v2064 = vadd.f32 %v2008, %v2046
    %v2065 = vadd.f32 %v2009, %v2047
    %v2066 = vadd.f32 %v2010, %v2048
    %v2067 = vadd.f32 %v2011, %v2049
    %v2068 = vadd.f32 %v2012, %v2050
    %v2069 = vadd.f32 %v2013, %v2051
    %v2070 = vadd.f32 %v2014, %v2052
    %v2071 = vadd.f32 %v2015, %v2053
    %v2072 = vadd.f32 %v2016, %v2054
    %v2073 = vadd.f32 %v2017, %v2055
    %v2074 = vadd.f32 %v2018, %v2056
    %v2075 = vadd.f32 %v2019, %v2057
    %v2076 = vadd.f32 %v2020, %v2058
    %v2077 = vadd.f32 %v2021, %v2059
    %v2078 = vld [vmem:[#allocation3 + $0x4] sm:$0xff]
    %v2079 = vld [vmem:[#allocation3 + $0xc] sm:$0x1]
    %v2080 = vld [vmem:[#allocation3 + $0x14] sm:$0xff]
    %v2081 = vld [vmem:[#allocation3 + $0x1c] sm:$0x1]
    %v2082 = vld [vmem:[#allocation3 + $0x24] sm:$0xff]
    %v2083 = vld [vmem:[#allocation3 + $0x2c] sm:$0x1]
    %v2084 = vld [vmem:[#allocation3 + $0x34] sm:$0xff]
    %v2085 = vld [vmem:[#allocation3 + $0x3c] sm:$0x1]
    %v2086 = vld [vmem:[#allocation3 + $0x44] sm:$0xff]
    %v2087 = vld [vmem:[#allocation3 + $0x4c] sm:$0x1]
    %v2088 = vld [vmem:[#allocation3 + $0x54] sm:$0xff]
    %v2089 = vld [vmem:[#allocation3 + $0x5c] sm:$0x1]
    %v2090 = vld [vmem:[#allocation3 + $0x64] sm:$0xff]
    %v2091 = vld [vmem:[#allocation3 + $0x6c] sm:$0x1]
    %v2092 = vld [vmem:[#allocation3 + $0x74] sm:$0xff]
    %v2093 = vld [vmem:[#allocation3 + $0x7c] sm:$0x1]
    %v2094 = vld [vmem:[#allocation3 + $0x84] sm:$0xff]
    %v2095 = vld [vmem:[#allocation3 + $0x8c] sm:$0x1]
    %v2096 = vld [vmem:[#allocation3 + $0x94] sm:$0xff]
    %v2097 = vld [vmem:[#allocation3 + $0x9c] sm:$0x1]
    %v2098 = vld [vmem:[#allocation3 + $0xa4] sm:$0xff]
    %v2099 = vld [vmem:[#allocation3 + $0xac] sm:$0x1]
    %v2100 = vld [vmem:[#allocation3 + $0xb4] sm:$0xff]
    %v2101 = vld [vmem:[#allocation3 + $0xbc] sm:$0x1]
    %v2102 = vld [vmem:[#allocation3 + $0xc4] sm:$0xff]
    %v2103 = vld [vmem:[#allocation3 + $0xcc] sm:$0x1]
    %v2104 = vld [vmem:[#allocation3 + $0xd4] sm:$0xff]
    %v2105 = vld [vmem:[#allocation3 + $0xdc] sm:$0x1]
    %v2106 = vld [vmem:[#allocation3 + $0xe4] sm:$0xff]
    %v2107 = vld [vmem:[#allocation3 + $0xec] sm:$0x1]
    %v2108 = vld [vmem:[#allocation3 + $0xf4] sm:$0xff]
    %v2109 = vld [vmem:[#allocation3 + $0xfc] sm:$0x1]
    %2110 = vst [vmem:[#allocation2] sm:$0xff] %v2078
    %2111 = vst [vmem:[#allocation2 + $0x8] sm:$0x1] %v2079
    %2112 = vst [vmem:[#allocation2 + $0x10] sm:$0xff] %v2080
    %2113 = vst [vmem:[#allocation2 + $0x18] sm:$0x1] %v2081
    %2114 = vst [vmem:[#allocation2 + $0x20] sm:$0xff] %v2082
    %2115 = vst [vmem:[#allocation2 + $0x28] sm:$0x1] %v2083
    %2116 = vst [vmem:[#allocation2 + $0x30] sm:$0xff] %v2084
    %2117 = vst [vmem:[#allocation2 + $0x38] sm:$0x1] %v2085
    %2118 = vst [vmem:[#allocation2 + $0x40] sm:$0xff] %v2086
    %2119 = vst [vmem:[#allocation2 + $0x48] sm:$0x1] %v2087
    %2120 = vst [vmem:[#allocation2 + $0x50] sm:$0xff] %v2088
    %2121 = vst [vmem:[#allocation2 + $0x58] sm:$0x1] %v2089
    %2122 = vst [vmem:[#allocation2 + $0x60] sm:$0xff] %v2090
    %2123 = vst [vmem:[#allocation2 + $0x68] sm:$0x1] %v2091
    %2124 = vst [vmem:[#allocation2 + $0x70] sm:$0xff] %v2092
    %2125 = vst [vmem:[#allocation2 + $0x78] sm:$0x1] %v2093
    %2126 = vst [vmem:[#allocation2 + $0x80] sm:$0xff] %v2094
    %2127 = vst [vmem:[#allocation2 + $0x88] sm:$0x1] %v2095
    %2128 = vst [vmem:[#allocation2 + $0x90] sm:$0xff] %v2096
    %2129 = vst [vmem:[#allocation2 + $0x98] sm:$0x1] %v2097
    %2130 = vst [vmem:[#allocation2 + $0xa0] sm:$0xff] %v2098
    %2131 = vst [vmem:[#allocation2 + $0xa8] sm:$0x1] %v2099
    %2132 = vst [vmem:[#allocation2 + $0xb0] sm:$0xff] %v2100
    %2133 = vst [vmem:[#allocation2 + $0xb8] sm:$0x1] %v2101
    %2134 = vst [vmem:[#allocation2 + $0xc0] sm:$0xff] %v2102
    %2135 = vst [vmem:[#allocation2 + $0xc8] sm:$0x1] %v2103
    %2136 = vst [vmem:[#allocation2 + $0xd0] sm:$0xff] %v2104
    %2137 = vst [vmem:[#allocation2 + $0xd8] sm:$0x1] %v2105
    %2138 = vst [vmem:[#allocation2 + $0xe0] sm:$0xff] %v2106
    %2139 = vst [vmem:[#allocation2 + $0xe8] sm:$0x1] %v2107
    %2140 = vst [vmem:[#allocation2 + $0xf0] sm:$0xff] %v2108
    %2141 = vst [vmem:[#allocation2 + $0xf8] sm:$0x1] %v2109
    %v2142 = vld [vmem:[#allocation2] sm:$0xff]
    %v2143 = vld [vmem:[#allocation2 + $0x8] sm:$0x1]
    %v2144 = vld [vmem:[#allocation2 + $0x10] sm:$0xff]
    %v2145 = vld [vmem:[#allocation2 + $0x18] sm:$0x1]
    %v2146 = vld [vmem:[#allocation2 + $0x20] sm:$0xff]
    %v2147 = vld [vmem:[#allocation2 + $0x28] sm:$0x1]
    %v2148 = vld [vmem:[#allocation2 + $0x30] sm:$0xff]
    %v2149 = vld [vmem:[#allocation2 + $0x38] sm:$0x1]
    %v2150 = vld [vmem:[#allocation2 + $0x40] sm:$0xff]
    %v2151 = vld [vmem:[#allocation2 + $0x48] sm:$0x1]
    %v2152 = vld [vmem:[#allocation2 + $0x50] sm:$0xff]
    %v2153 = vld [vmem:[#allocation2 + $0x58] sm:$0x1]
    %v2154 = vld [vmem:[#allocation2 + $0x60] sm:$0xff]
    %v2155 = vld [vmem:[#allocation2 + $0x68] sm:$0x1]
    %v2156 = vld [vmem:[#allocation2 + $0x70] sm:$0xff]
    %v2157 = vld [vmem:[#allocation2 + $0x78] sm:$0x1]
    %v2158 = vld [vmem:[#allocation2 + $0x80] sm:$0xff]
    %v2159 = vld [vmem:[#allocation2 + $0x88] sm:$0x1]
    %s2160 = sld [smem:[#allocation7 + $0x4]]
    %v2161 = vstv %s2160
    %v2162 = vmul.f32 %v2142, %v2161
    %v2163 = vmul.f32 %v2143, %v2161
    %v2164 = vmul.f32 %v2144, %v2161
    %v2165 = vmul.f32 %v2145, %v2161
    %v2166 = vmul.f32 %v2146, %v2161
    %v2167 = vmul.f32 %v2147, %v2161
    %v2168 = vmul.f32 %v2148, %v2161
    %v2169 = vmul.f32 %v2149, %v2161
    %v2170 = vmul.f32 %v2150, %v2161
    %v2171 = vmul.f32 %v2151, %v2161
    %v2172 = vmul.f32 %v2152, %v2161
    %v2173 = vmul.f32 %v2153, %v2161
    %v2174 = vmul.f32 %v2154, %v2161
    %v2175 = vmul.f32 %v2155, %v2161
    %v2176 = vmul.f32 %v2156, %v2161
    %v2177 = vmul.f32 %v2157, %v2161
    %v2178 = vmul.f32 %v2158, %v2161
    %v2179 = vmul.f32 %v2159, %v2161
    %v2180 = vadd.f32 %v2060, %v2162
    %v2181 = vadd.f32 %v2061, %v2163
    %v2182 = vadd.f32 %v2062, %v2164
    %v2183 = vadd.f32 %v2063, %v2165
    %v2184 = vadd.f32 %v2064, %v2166
    %v2185 = vadd.f32 %v2065, %v2167
    %v2186 = vadd.f32 %v2066, %v2168
    %v2187 = vadd.f32 %v2067, %v2169
    %v2188 = vadd.f32 %v2068, %v2170
    %v2189 = vadd.f32 %v2069, %v2171
    %v2190 = vadd.f32 %v2070, %v2172
    %v2191 = vadd.f32 %v2071, %v2173
    %v2192 = vadd.f32 %v2072, %v2174
    %v2193 = vadd.f32 %v2073, %v2175
    %v2194 = vadd.f32 %v2074, %v2176
    %v2195 = vadd.f32 %v2075, %v2177
    %v2196 = vadd.f32 %v2076, %v2178
    %v2197 = vadd.f32 %v2077, %v2179
    %v2198 = vld [vmem:[%s143] sm:$0xff]
    %v2199 = vld [vmem:[%s143 + $0x8] sm:$0x1]
    %v2200 = vld [vmem:[%s143 + $0x10] sm:$0xff]
    %v2201 = vld [vmem:[%s143 + $0x18] sm:$0x1]
    %v2202 = vld [vmem:[%s143 + $0x20] sm:$0xff]
    %v2203 = vld [vmem:[%s143 + $0x28] sm:$0x1]
    %v2204 = vld [vmem:[%s143 + $0x30] sm:$0xff]
    %v2205 = vld [vmem:[%s143 + $0x38] sm:$0x1]
    %v2206 = vld [vmem:[%s143 + $0x40] sm:$0xff]
    %v2207 = vld [vmem:[%s143 + $0x48] sm:$0x1]
    %v2208 = vld [vmem:[%s143 + $0x50] sm:$0xff]
    %v2209 = vld [vmem:[%s143 + $0x58] sm:$0x1]
    %v2210 = vld [vmem:[%s143 + $0x60] sm:$0xff]
    %v2211 = vld [vmem:[%s143 + $0x68] sm:$0x1]
    %v2212 = vld [vmem:[%s143 + $0x70] sm:$0xff]
    %v2213 = vld [vmem:[%s143 + $0x78] sm:$0x1]
    %v2214 = vld [vmem:[%s143 + $0x80] sm:$0xff]
    %v2215 = vld [vmem:[%s143 + $0x88] sm:$0x1]
    %s2216 = sld [smem:[#allocation7 + $0xc]]
    %v2217 = vstv %s2216
    %v2218 = vmul.f32 %v2198, %v2217
    %v2219 = vmul.f32 %v2199, %v2217
    %v2220 = vmul.f32 %v2200, %v2217
    %v2221 = vmul.f32 %v2201, %v2217
    %v2222 = vmul.f32 %v2202, %v2217
    %v2223 = vmul.f32 %v2203, %v2217
    %v2224 = vmul.f32 %v2204, %v2217
    %v2225 = vmul.f32 %v2205, %v2217
    %v2226 = vmul.f32 %v2206, %v2217
    %v2227 = vmul.f32 %v2207, %v2217
    %v2228 = vmul.f32 %v2208, %v2217
    %v2229 = vmul.f32 %v2209, %v2217
    %v2230 = vmul.f32 %v2210, %v2217
    %v2231 = vmul.f32 %v2211, %v2217
    %v2232 = vmul.f32 %v2212, %v2217
    %v2233 = vmul.f32 %v2213, %v2217
    %v2234 = vmul.f32 %v2214, %v2217
    %v2235 = vmul.f32 %v2215, %v2217
    %v2236 = vadd.f32 %v2180, %v2218
    %v2237 = vadd.f32 %v2181, %v2219
    %v2238 = vadd.f32 %v2182, %v2220
    %v2239 = vadd.f32 %v2183, %v2221
    %v2240 = vadd.f32 %v2184, %v2222
    %v2241 = vadd.f32 %v2185, %v2223
    %v2242 = vadd.f32 %v2186, %v2224
    %v2243 = vadd.f32 %v2187, %v2225
    %v2244 = vadd.f32 %v2188, %v2226
    %v2245 = vadd.f32 %v2189, %v2227
    %v2246 = vadd.f32 %v2190, %v2228
    %v2247 = vadd.f32 %v2191, %v2229
    %v2248 = vadd.f32 %v2192, %v2230
    %v2249 = vadd.f32 %v2193, %v2231
    %v2250 = vadd.f32 %v2194, %v2232
    %v2251 = vadd.f32 %v2195, %v2233
    %v2252 = vadd.f32 %v2196, %v2234
    %v2253 = vadd.f32 %v2197, %v2235
    %v2254 = vld [vmem:[%s200] sm:$0xff]
    %v2255 = vld [vmem:[%s200 + $0x8] sm:$0x1]
    %v2256 = vld [vmem:[%s200 + $0x10] sm:$0xff]
    %v2257 = vld [vmem:[%s200 + $0x18] sm:$0x1]
    %v2258 = vld [vmem:[%s200 + $0x20] sm:$0xff]
    %v2259 = vld [vmem:[%s200 + $0x28] sm:$0x1]
    %v2260 = vld [vmem:[%s200 + $0x30] sm:$0xff]
    %v2261 = vld [vmem:[%s200 + $0x38] sm:$0x1]
    %v2262 = vld [vmem:[%s200 + $0x40] sm:$0xff]
    %v2263 = vld [vmem:[%s200 + $0x48] sm:$0x1]
    %v2264 = vld [vmem:[%s200 + $0x50] sm:$0xff]
    %v2265 = vld [vmem:[%s200 + $0x58] sm:$0x1]
    %v2266 = vld [vmem:[%s200 + $0x60] sm:$0xff]
    %v2267 = vld [vmem:[%s200 + $0x68] sm:$0x1]
    %v2268 = vld [vmem:[%s200 + $0x70] sm:$0xff]
    %v2269 = vld [vmem:[%s200 + $0x78] sm:$0x1]
    %v2270 = vld [vmem:[%s200 + $0x80] sm:$0xff]
    %v2271 = vld [vmem:[%s200 + $0x88] sm:$0x1]
    %s2272 = sld [smem:[#allocation7 + $0x14]]
    %v2273 = vstv %s2272
    %v2274 = vmul.f32 %v2254, %v2273
    %v2275 = vmul.f32 %v2255, %v2273
    %v2276 = vmul.f32 %v2256, %v2273
    %v2277 = vmul.f32 %v2257, %v2273
    %v2278 = vmul.f32 %v2258, %v2273
    %v2279 = vmul.f32 %v2259, %v2273
    %v2280 = vmul.f32 %v2260, %v2273
    %v2281 = vmul.f32 %v2261, %v2273
    %v2282 = vmul.f32 %v2262, %v2273
    %v2283 = vmul.f32 %v2263, %v2273
    %v2284 = vmul.f32 %v2264, %v2273
    %v2285 = vmul.f32 %v2265, %v2273
    %v2286 = vmul.f32 %v2266, %v2273
    %v2287 = vmul.f32 %v2267, %v2273
    %v2288 = vmul.f32 %v2268, %v2273
    %v2289 = vmul.f32 %v2269, %v2273
    %v2290 = vmul.f32 %v2270, %v2273
    %v2291 = vmul.f32 %v2271, %v2273
    %v2292 = vadd.f32 %v2236, %v2274
    %v2293 = vadd.f32 %v2237, %v2275
    %v2294 = vadd.f32 %v2238, %v2276
    %v2295 = vadd.f32 %v2239, %v2277
    %v2296 = vadd.f32 %v2240, %v2278
    %v2297 = vadd.f32 %v2241, %v2279
    %v2298 = vadd.f32 %v2242, %v2280
    %v2299 = vadd.f32 %v2243, %v2281
    %v2300 = vadd.f32 %v2244, %v2282
    %v2301 = vadd.f32 %v2245, %v2283
    %v2302 = vadd.f32 %v2246, %v2284
    %v2303 = vadd.f32 %v2247, %v2285
    %v2304 = vadd.f32 %v2248, %v2286
    %v2305 = vadd.f32 %v2249, %v2287
    %v2306 = vadd.f32 %v2250, %v2288
    %v2307 = vadd.f32 %v2251, %v2289
    %v2308 = vadd.f32 %v2252, %v2290
    %v2309 = vadd.f32 %v2253, %v2291
    %v2310 = vld [vmem:[%s257] sm:$0xff]
    %v2311 = vld [vmem:[%s257 + $0x8] sm:$0x1]
    %v2312 = vld [vmem:[%s257 + $0x10] sm:$0xff]
    %v2313 = vld [vmem:[%s257 + $0x18] sm:$0x1]
    %v2314 = vld [vmem:[%s257 + $0x20] sm:$0xff]
    %v2315 = vld [vmem:[%s257 + $0x28] sm:$0x1]
    %v2316 = vld [vmem:[%s257 + $0x30] sm:$0xff]
    %v2317 = vld [vmem:[%s257 + $0x38] sm:$0x1]
    %v2318 = vld [vmem:[%s257 + $0x40] sm:$0xff]
    %v2319 = vld [vmem:[%s257 + $0x48] sm:$0x1]
    %v2320 = vld [vmem:[%s257 + $0x50] sm:$0xff]
    %v2321 = vld [vmem:[%s257 + $0x58] sm:$0x1]
    %v2322 = vld [vmem:[%s257 + $0x60] sm:$0xff]
    %v2323 = vld [vmem:[%s257 + $0x68] sm:$0x1]
    %v2324 = vld [vmem:[%s257 + $0x70] sm:$0xff]
    %v2325 = vld [vmem:[%s257 + $0x78] sm:$0x1]
    %v2326 = vld [vmem:[%s257 + $0x80] sm:$0xff]
    %v2327 = vld [vmem:[%s257 + $0x88] sm:$0x1]
    %s2328 = sld [smem:[#allocation7 + $0x1c]]
    %v2329 = vstv %s2328
    %v2330 = vmul.f32 %v2310, %v2329
    %v2331 = vmul.f32 %v2311, %v2329
    %v2332 = vmul.f32 %v2312, %v2329
    %v2333 = vmul.f32 %v2313, %v2329
    %v2334 = vmul.f32 %v2314, %v2329
    %v2335 = vmul.f32 %v2315, %v2329
    %v2336 = vmul.f32 %v2316, %v2329
    %v2337 = vmul.f32 %v2317, %v2329
    %v2338 = vmul.f32 %v2318, %v2329
    %v2339 = vmul.f32 %v2319, %v2329
    %v2340 = vmul.f32 %v2320, %v2329
    %v2341 = vmul.f32 %v2321, %v2329
    %v2342 = vmul.f32 %v2322, %v2329
    %v2343 = vmul.f32 %v2323, %v2329
    %v2344 = vmul.f32 %v2324, %v2329
    %v2345 = vmul.f32 %v2325, %v2329
    %v2346 = vmul.f32 %v2326, %v2329
    %v2347 = vmul.f32 %v2327, %v2329
    %v2348 = vadd.f32 %v2292, %v2330
    %v2349 = vadd.f32 %v2293, %v2331
    %v2350 = vadd.f32 %v2294, %v2332
    %v2351 = vadd.f32 %v2295, %v2333
    %v2352 = vadd.f32 %v2296, %v2334
    %v2353 = vadd.f32 %v2297, %v2335
    %v2354 = vadd.f32 %v2298, %v2336
    %v2355 = vadd.f32 %v2299, %v2337
    %v2356 = vadd.f32 %v2300, %v2338
    %v2357 = vadd.f32 %v2301, %v2339
    %v2358 = vadd.f32 %v2302, %v2340
    %v2359 = vadd.f32 %v2303, %v2341
    %v2360 = vadd.f32 %v2304, %v2342
    %v2361 = vadd.f32 %v2305, %v2343
    %v2362 = vadd.f32 %v2306, %v2344
    %v2363 = vadd.f32 %v2307, %v2345
    %v2364 = vadd.f32 %v2308, %v2346
    %v2365 = vadd.f32 %v2309, %v2347
    %v2366 = vld [vmem:[%s314] sm:$0xff]
    %v2367 = vld [vmem:[%s314 + $0x8] sm:$0x1]
    %v2368 = vld [vmem:[%s314 + $0x10] sm:$0xff]
    %v2369 = vld [vmem:[%s314 + $0x18] sm:$0x1]
    %v2370 = vld [vmem:[%s314 + $0x20] sm:$0xff]
    %v2371 = vld [vmem:[%s314 + $0x28] sm:$0x1]
    %v2372 = vld [vmem:[%s314 + $0x30] sm:$0xff]
    %v2373 = vld [vmem:[%s314 + $0x38] sm:$0x1]
    %v2374 = vld [vmem:[%s314 + $0x40] sm:$0xff]
    %v2375 = vld [vmem:[%s314 + $0x48] sm:$0x1]
    %v2376 = vld [vmem:[%s314 + $0x50] sm:$0xff]
    %v2377 = vld [vmem:[%s314 + $0x58] sm:$0x1]
    %v2378 = vld [vmem:[%s314 + $0x60] sm:$0xff]
    %v2379 = vld [vmem:[%s314 + $0x68] sm:$0x1]
    %v2380 = vld [vmem:[%s314 + $0x70] sm:$0xff]
    %v2381 = vld [vmem:[%s314 + $0x78] sm:$0x1]
    %v2382 = vld [vmem:[%s314 + $0x80] sm:$0xff]
    %v2383 = vld [vmem:[%s314 + $0x88] sm:$0x1]
    %s2384 = sld [smem:[#allocation7 + $0x24]]
    %v2385 = vstv %s2384
    %v2386 = vmul.f32 %v2366, %v2385
    %v2387 = vmul.f32 %v2367, %v2385
    %v2388 = vmul.f32 %v2368, %v2385
    %v2389 = vmul.f32 %v2369, %v2385
    %v2390 = vmul.f32 %v2370, %v2385
    %v2391 = vmul.f32 %v2371, %v2385
    %v2392 = vmul.f32 %v2372, %v2385
    %v2393 = vmul.f32 %v2373, %v2385
    %v2394 = vmul.f32 %v2374, %v2385
    %v2395 = vmul.f32 %v2375, %v2385
    %v2396 = vmul.f32 %v2376, %v2385
    %v2397 = vmul.f32 %v2377, %v2385
    %v2398 = vmul.f32 %v2378, %v2385
    %v2399 = vmul.f32 %v2379, %v2385
    %v2400 = vmul.f32 %v2380, %v2385
    %v2401 = vmul.f32 %v2381, %v2385
    %v2402 = vmul.f32 %v2382, %v2385
    %v2403 = vmul.f32 %v2383, %v2385
    %v2404 = vadd.f32 %v2348, %v2386
    %v2405 = vadd.f32 %v2349, %v2387
    %v2406 = vadd.f32 %v2350, %v2388
    %v2407 = vadd.f32 %v2351, %v2389
    %v2408 = vadd.f32 %v2352, %v2390
    %v2409 = vadd.f32 %v2353, %v2391
    %v2410 = vadd.f32 %v2354, %v2392
    %v2411 = vadd.f32 %v2355, %v2393
    %v2412 = vadd.f32 %v2356, %v2394
    %v2413 = vadd.f32 %v2357, %v2395
    %v2414 = vadd.f32 %v2358, %v2396
    %v2415 = vadd.f32 %v2359, %v2397
    %v2416 = vadd.f32 %v2360, %v2398
    %v2417 = vadd.f32 %v2361, %v2399
    %v2418 = vadd.f32 %v2362, %v2400
    %v2419 = vadd.f32 %v2363, %v2401
    %v2420 = vadd.f32 %v2364, %v2402
    %v2421 = vadd.f32 %v2365, %v2403
    %v2422 = vld [vmem:[%s371] sm:$0xff]
    %v2423 = vld [vmem:[%s371 + $0x8] sm:$0x1]
    %v2424 = vld [vmem:[%s371 + $0x10] sm:$0xff]
    %v2425 = vld [vmem:[%s371 + $0x18] sm:$0x1]
    %v2426 = vld [vmem:[%s371 + $0x20] sm:$0xff]
    %v2427 = vld [vmem:[%s371 + $0x28] sm:$0x1]
    %v2428 = vld [vmem:[%s371 + $0x30] sm:$0xff]
    %v2429 = vld [vmem:[%s371 + $0x38] sm:$0x1]
    %v2430 = vld [vmem:[%s371 + $0x40] sm:$0xff]
    %v2431 = vld [vmem:[%s371 + $0x48] sm:$0x1]
    %v2432 = vld [vmem:[%s371 + $0x50] sm:$0xff]
    %v2433 = vld [vmem:[%s371 + $0x58] sm:$0x1]
    %v2434 = vld [vmem:[%s371 + $0x60] sm:$0xff]
    %v2435 = vld [vmem:[%s371 + $0x68] sm:$0x1]
    %v2436 = vld [vmem:[%s371 + $0x70] sm:$0xff]
    %v2437 = vld [vmem:[%s371 + $0x78] sm:$0x1]
    %v2438 = vld [vmem:[%s371 + $0x80] sm:$0xff]
    %v2439 = vld [vmem:[%s371 + $0x88] sm:$0x1]
    %s2440 = sld [smem:[#allocation7 + $0x2c]]
    %v2441 = vstv %s2440
    %v2442 = vmul.f32 %v2422, %v2441
    %v2443 = vmul.f32 %v2423, %v2441
    %v2444 = vmul.f32 %v2424, %v2441
    %v2445 = vmul.f32 %v2425, %v2441
    %v2446 = vmul.f32 %v2426, %v2441
    %v2447 = vmul.f32 %v2427, %v2441
    %v2448 = vmul.f32 %v2428, %v2441
    %v2449 = vmul.f32 %v2429, %v2441
    %v2450 = vmul.f32 %v2430, %v2441
    %v2451 = vmul.f32 %v2431, %v2441
    %v2452 = vmul.f32 %v2432, %v2441
    %v2453 = vmul.f32 %v2433, %v2441
    %v2454 = vmul.f32 %v2434, %v2441
    %v2455 = vmul.f32 %v2435, %v2441
    %v2456 = vmul.f32 %v2436, %v2441
    %v2457 = vmul.f32 %v2437, %v2441
    %v2458 = vmul.f32 %v2438, %v2441
    %v2459 = vmul.f32 %v2439, %v2441
    %v2460 = vadd.f32 %v2404, %v2442
    %v2461 = vadd.f32 %v2405, %v2443
    %v2462 = vadd.f32 %v2406, %v2444
    %v2463 = vadd.f32 %v2407, %v2445
    %v2464 = vadd.f32 %v2408, %v2446
    %v2465 = vadd.f32 %v2409, %v2447
    %v2466 = vadd.f32 %v2410, %v2448
    %v2467 = vadd.f32 %v2411, %v2449
    %v2468 = vadd.f32 %v2412, %v2450
    %v2469 = vadd.f32 %v2413, %v2451
    %v2470 = vadd.f32 %v2414, %v2452
    %v2471 = vadd.f32 %v2415, %v2453
    %v2472 = vadd.f32 %v2416, %v2454
    %v2473 = vadd.f32 %v2417, %v2455
    %v2474 = vadd.f32 %v2418, %v2456
    %v2475 = vadd.f32 %v2419, %v2457
    %v2476 = vadd.f32 %v2420, %v2458
    %v2477 = vadd.f32 %v2421, %v2459
    %v2478 = vld [vmem:[%s428] sm:$0xff]
    %v2479 = vld [vmem:[%s428 + $0x8] sm:$0x1]
    %v2480 = vld [vmem:[%s428 + $0x10] sm:$0xff]
    %v2481 = vld [vmem:[%s428 + $0x18] sm:$0x1]
    %v2482 = vld [vmem:[%s428 + $0x20] sm:$0xff]
    %v2483 = vld [vmem:[%s428 + $0x28] sm:$0x1]
    %v2484 = vld [vmem:[%s428 + $0x30] sm:$0xff]
    %v2485 = vld [vmem:[%s428 + $0x38] sm:$0x1]
    %v2486 = vld [vmem:[%s428 + $0x40] sm:$0xff]
    %v2487 = vld [vmem:[%s428 + $0x48] sm:$0x1]
    %v2488 = vld [vmem:[%s428 + $0x50] sm:$0xff]
    %v2489 = vld [vmem:[%s428 + $0x58] sm:$0x1]
    %v2490 = vld [vmem:[%s428 + $0x60] sm:$0xff]
    %v2491 = vld [vmem:[%s428 + $0x68] sm:$0x1]
    %v2492 = vld [vmem:[%s428 + $0x70] sm:$0xff]
    %v2493 = vld [vmem:[%s428 + $0x78] sm:$0x1]
    %v2494 = vld [vmem:[%s428 + $0x80] sm:$0xff]
    %v2495 = vld [vmem:[%s428 + $0x88] sm:$0x1]
    %s2496 = sld [smem:[#allocation7 + $0x34]]
    %v2497 = vstv %s2496
    %v2498 = vmul.f32 %v2478, %v2497
    %v2499 = vmul.f32 %v2479, %v2497
    %v2500 = vmul.f32 %v2480, %v2497
    %v2501 = vmul.f32 %v2481, %v2497
    %v2502 = vmul.f32 %v2482, %v2497
    %v2503 = vmul.f32 %v2483, %v2497
    %v2504 = vmul.f32 %v2484, %v2497
    %v2505 = vmul.f32 %v2485, %v2497
    %v2506 = vmul.f32 %v2486, %v2497
    %v2507 = vmul.f32 %v2487, %v2497
    %v2508 = vmul.f32 %v2488, %v2497
    %v2509 = vmul.f32 %v2489, %v2497
    %v2510 = vmul.f32 %v2490, %v2497
    %v2511 = vmul.f32 %v2491, %v2497
    %v2512 = vmul.f32 %v2492, %v2497
    %v2513 = vmul.f32 %v2493, %v2497
    %v2514 = vmul.f32 %v2494, %v2497
    %v2515 = vmul.f32 %v2495, %v2497
    %v2516 = vadd.f32 %v2460, %v2498
    %v2517 = vadd.f32 %v2461, %v2499
    %v2518 = vadd.f32 %v2462, %v2500
    %v2519 = vadd.f32 %v2463, %v2501
    %v2520 = vadd.f32 %v2464, %v2502
    %v2521 = vadd.f32 %v2465, %v2503
    %v2522 = vadd.f32 %v2466, %v2504
    %v2523 = vadd.f32 %v2467, %v2505
    %v2524 = vadd.f32 %v2468, %v2506
    %v2525 = vadd.f32 %v2469, %v2507
    %v2526 = vadd.f32 %v2470, %v2508
    %v2527 = vadd.f32 %v2471, %v2509
    %v2528 = vadd.f32 %v2472, %v2510
    %v2529 = vadd.f32 %v2473, %v2511
    %v2530 = vadd.f32 %v2474, %v2512
    %v2531 = vadd.f32 %v2475, %v2513
    %v2532 = vadd.f32 %v2476, %v2514
    %v2533 = vadd.f32 %v2477, %v2515
    %v2534 = vld [vmem:[%s485] sm:$0xff]
    %v2535 = vld [vmem:[%s485 + $0x8] sm:$0x1]
    %v2536 = vld [vmem:[%s485 + $0x10] sm:$0xff]
    %v2537 = vld [vmem:[%s485 + $0x18] sm:$0x1]
    %v2538 = vld [vmem:[%s485 + $0x20] sm:$0xff]
    %v2539 = vld [vmem:[%s485 + $0x28] sm:$0x1]
    %v2540 = vld [vmem:[%s485 + $0x30] sm:$0xff]
    %v2541 = vld [vmem:[%s485 + $0x38] sm:$0x1]
    %v2542 = vld [vmem:[%s485 + $0x40] sm:$0xff]
    %v2543 = vld [vmem:[%s485 + $0x48] sm:$0x1]
    %v2544 = vld [vmem:[%s485 + $0x50] sm:$0xff]
    %v2545 = vld [vmem:[%s485 + $0x58] sm:$0x1]
    %v2546 = vld [vmem:[%s485 + $0x60] sm:$0xff]
    %v2547 = vld [vmem:[%s485 + $0x68] sm:$0x1]
    %v2548 = vld [vmem:[%s485 + $0x70] sm:$0xff]
    %v2549 = vld [vmem:[%s485 + $0x78] sm:$0x1]
    %v2550 = vld [vmem:[%s485 + $0x80] sm:$0xff]
    %v2551 = vld [vmem:[%s485 + $0x88] sm:$0x1]
    %s2552 = sld [smem:[#allocation7 + $0x3c]]
    %v2553 = vstv %s2552
    %v2554 = vmul.f32 %v2534, %v2553
    %v2555 = vmul.f32 %v2535, %v2553
    %v2556 = vmul.f32 %v2536, %v2553
    %v2557 = vmul.f32 %v2537, %v2553
    %v2558 = vmul.f32 %v2538, %v2553
    %v2559 = vmul.f32 %v2539, %v2553
    %v2560 = vmul.f32 %v2540, %v2553
    %v2561 = vmul.f32 %v2541, %v2553
    %v2562 = vmul.f32 %v2542, %v2553
    %v2563 = vmul.f32 %v2543, %v2553
    %v2564 = vmul.f32 %v2544, %v2553
    %v2565 = vmul.f32 %v2545, %v2553
    %v2566 = vmul.f32 %v2546, %v2553
    %v2567 = vmul.f32 %v2547, %v2553
    %v2568 = vmul.f32 %v2548, %v2553
    %v2569 = vmul.f32 %v2549, %v2553
    %v2570 = vmul.f32 %v2550, %v2553
    %v2571 = vmul.f32 %v2551, %v2553
    %v2572 = vadd.f32 %v2516, %v2554
    %v2573 = vadd.f32 %v2517, %v2555
    %v2574 = vadd.f32 %v2518, %v2556
    %v2575 = vadd.f32 %v2519, %v2557
    %v2576 = vadd.f32 %v2520, %v2558
    %v2577 = vadd.f32 %v2521, %v2559
    %v2578 = vadd.f32 %v2522, %v2560
    %v2579 = vadd.f32 %v2523, %v2561
    %v2580 = vadd.f32 %v2524, %v2562
    %v2581 = vadd.f32 %v2525, %v2563
    %v2582 = vadd.f32 %v2526, %v2564
    %v2583 = vadd.f32 %v2527, %v2565
    %v2584 = vadd.f32 %v2528, %v2566
    %v2585 = vadd.f32 %v2529, %v2567
    %v2586 = vadd.f32 %v2530, %v2568
    %v2587 = vadd.f32 %v2531, %v2569
    %v2588 = vadd.f32 %v2532, %v2570
    %v2589 = vadd.f32 %v2533, %v2571
    %v2590 = vld [vmem:[#allocation3 + $0x5] sm:$0xff]
    %v2591 = vld [vmem:[#allocation3 + $0xd] sm:$0x1]
    %v2592 = vld [vmem:[#allocation3 + $0x15] sm:$0xff]
    %v2593 = vld [vmem:[#allocation3 + $0x1d] sm:$0x1]
    %v2594 = vld [vmem:[#allocation3 + $0x25] sm:$0xff]
    %v2595 = vld [vmem:[#allocation3 + $0x2d] sm:$0x1]
    %v2596 = vld [vmem:[#allocation3 + $0x35] sm:$0xff]
    %v2597 = vld [vmem:[#allocation3 + $0x3d] sm:$0x1]
    %v2598 = vld [vmem:[#allocation3 + $0x45] sm:$0xff]
    %v2599 = vld [vmem:[#allocation3 + $0x4d] sm:$0x1]
    %v2600 = vld [vmem:[#allocation3 + $0x55] sm:$0xff]
    %v2601 = vld [vmem:[#allocation3 + $0x5d] sm:$0x1]
    %v2602 = vld [vmem:[#allocation3 + $0x65] sm:$0xff]
    %v2603 = vld [vmem:[#allocation3 + $0x6d] sm:$0x1]
    %v2604 = vld [vmem:[#allocation3 + $0x75] sm:$0xff]
    %v2605 = vld [vmem:[#allocation3 + $0x7d] sm:$0x1]
    %v2606 = vld [vmem:[#allocation3 + $0x85] sm:$0xff]
    %v2607 = vld [vmem:[#allocation3 + $0x8d] sm:$0x1]
    %v2608 = vld [vmem:[#allocation3 + $0x95] sm:$0xff]
    %v2609 = vld [vmem:[#allocation3 + $0x9d] sm:$0x1]
    %v2610 = vld [vmem:[#allocation3 + $0xa5] sm:$0xff]
    %v2611 = vld [vmem:[#allocation3 + $0xad] sm:$0x1]
    %v2612 = vld [vmem:[#allocation3 + $0xb5] sm:$0xff]
    %v2613 = vld [vmem:[#allocation3 + $0xbd] sm:$0x1]
    %v2614 = vld [vmem:[#allocation3 + $0xc5] sm:$0xff]
    %v2615 = vld [vmem:[#allocation3 + $0xcd] sm:$0x1]
    %v2616 = vld [vmem:[#allocation3 + $0xd5] sm:$0xff]
    %v2617 = vld [vmem:[#allocation3 + $0xdd] sm:$0x1]
    %v2618 = vld [vmem:[#allocation3 + $0xe5] sm:$0xff]
    %v2619 = vld [vmem:[#allocation3 + $0xed] sm:$0x1]
    %v2620 = vld [vmem:[#allocation3 + $0xf5] sm:$0xff]
    %v2621 = vld [vmem:[#allocation3 + $0xfd] sm:$0x1]
    %2622 = vst [vmem:[#allocation2] sm:$0xff] %v2590
    %2623 = vst [vmem:[#allocation2 + $0x8] sm:$0x1] %v2591
    %2624 = vst [vmem:[#allocation2 + $0x10] sm:$0xff] %v2592
    %2625 = vst [vmem:[#allocation2 + $0x18] sm:$0x1] %v2593
    %2626 = vst [vmem:[#allocation2 + $0x20] sm:$0xff] %v2594
    %2627 = vst [vmem:[#allocation2 + $0x28] sm:$0x1] %v2595
    %2628 = vst [vmem:[#allocation2 + $0x30] sm:$0xff] %v2596
    %2629 = vst [vmem:[#allocation2 + $0x38] sm:$0x1] %v2597
    %2630 = vst [vmem:[#allocation2 + $0x40] sm:$0xff] %v2598
    %2631 = vst [vmem:[#allocation2 + $0x48] sm:$0x1] %v2599
    %2632 = vst [vmem:[#allocation2 + $0x50] sm:$0xff] %v2600
    %2633 = vst [vmem:[#allocation2 + $0x58] sm:$0x1] %v2601
    %2634 = vst [vmem:[#allocation2 + $0x60] sm:$0xff] %v2602
    %2635 = vst [vmem:[#allocation2 + $0x68] sm:$0x1] %v2603
    %2636 = vst [vmem:[#allocation2 + $0x70] sm:$0xff] %v2604
    %2637 = vst [vmem:[#allocation2 + $0x78] sm:$0x1] %v2605
    %2638 = vst [vmem:[#allocation2 + $0x80] sm:$0xff] %v2606
    %2639 = vst [vmem:[#allocation2 + $0x88] sm:$0x1] %v2607
    %2640 = vst [vmem:[#allocation2 + $0x90] sm:$0xff] %v2608
    %2641 = vst [vmem:[#allocation2 + $0x98] sm:$0x1] %v2609
    %2642 = vst [vmem:[#allocation2 + $0xa0] sm:$0xff] %v2610
    %2643 = vst [vmem:[#allocation2 + $0xa8] sm:$0x1] %v2611
    %2644 = vst [vmem:[#allocation2 + $0xb0] sm:$0xff] %v2612
    %2645 = vst [vmem:[#allocation2 + $0xb8] sm:$0x1] %v2613
    %2646 = vst [vmem:[#allocation2 + $0xc0] sm:$0xff] %v2614
    %2647 = vst [vmem:[#allocation2 + $0xc8] sm:$0x1] %v2615
    %2648 = vst [vmem:[#allocation2 + $0xd0] sm:$0xff] %v2616
    %2649 = vst [vmem:[#allocation2 + $0xd8] sm:$0x1] %v2617
    %2650 = vst [vmem:[#allocation2 + $0xe0] sm:$0xff] %v2618
    %2651 = vst [vmem:[#allocation2 + $0xe8] sm:$0x1] %v2619
    %2652 = vst [vmem:[#allocation2 + $0xf0] sm:$0xff] %v2620
    %2653 = vst [vmem:[#allocation2 + $0xf8] sm:$0x1] %v2621
    %v2654 = vld [vmem:[#allocation2] sm:$0xff]
    %v2655 = vld [vmem:[#allocation2 + $0x8] sm:$0x1]
    %v2656 = vld [vmem:[#allocation2 + $0x10] sm:$0xff]
    %v2657 = vld [vmem:[#allocation2 + $0x18] sm:$0x1]
    %v2658 = vld [vmem:[#allocation2 + $0x20] sm:$0xff]
    %v2659 = vld [vmem:[#allocation2 + $0x28] sm:$0x1]
    %v2660 = vld [vmem:[#allocation2 + $0x30] sm:$0xff]
    %v2661 = vld [vmem:[#allocation2 + $0x38] sm:$0x1]
    %v2662 = vld [vmem:[#allocation2 + $0x40] sm:$0xff]
    %v2663 = vld [vmem:[#allocation2 + $0x48] sm:$0x1]
    %v2664 = vld [vmem:[#allocation2 + $0x50] sm:$0xff]
    %v2665 = vld [vmem:[#allocation2 + $0x58] sm:$0x1]
    %v2666 = vld [vmem:[#allocation2 + $0x60] sm:$0xff]
    %v2667 = vld [vmem:[#allocation2 + $0x68] sm:$0x1]
    %v2668 = vld [vmem:[#allocation2 + $0x70] sm:$0xff]
    %v2669 = vld [vmem:[#allocation2 + $0x78] sm:$0x1]
    %v2670 = vld [vmem:[#allocation2 + $0x80] sm:$0xff]
    %v2671 = vld [vmem:[#allocation2 + $0x88] sm:$0x1]
    %s2672 = sld [smem:[#allocation7 + $0x5]]
    %v2673 = vstv %s2672
    %v2674 = vmul.f32 %v2654, %v2673
    %v2675 = vmul.f32 %v2655, %v2673
    %v2676 = vmul.f32 %v2656, %v2673
    %v2677 = vmul.f32 %v2657, %v2673
    %v2678 = vmul.f32 %v2658, %v2673
    %v2679 = vmul.f32 %v2659, %v2673
    %v2680 = vmul.f32 %v2660, %v2673
    %v2681 = vmul.f32 %v2661, %v2673
    %v2682 = vmul.f32 %v2662, %v2673
    %v2683 = vmul.f32 %v2663, %v2673
    %v2684 = vmul.f32 %v2664, %v2673
    %v2685 = vmul.f32 %v2665, %v2673
    %v2686 = vmul.f32 %v2666, %v2673
    %v2687 = vmul.f32 %v2667, %v2673
    %v2688 = vmul.f32 %v2668, %v2673
    %v2689 = vmul.f32 %v2669, %v2673
    %v2690 = vmul.f32 %v2670, %v2673
    %v2691 = vmul.f32 %v2671, %v2673
    %v2692 = vadd.f32 %v2572, %v2674
    %v2693 = vadd.f32 %v2573, %v2675
    %v2694 = vadd.f32 %v2574, %v2676
    %v2695 = vadd.f32 %v2575, %v2677
    %v2696 = vadd.f32 %v2576, %v2678
    %v2697 = vadd.f32 %v2577, %v2679
    %v2698 = vadd.f32 %v2578, %v2680
    %v2699 = vadd.f32 %v2579, %v2681
    %v2700 = vadd.f32 %v2580, %v2682
    %v2701 = vadd.f32 %v2581, %v2683
    %v2702 = vadd.f32 %v2582, %v2684
    %v2703 = vadd.f32 %v2583, %v2685
    %v2704 = vadd.f32 %v2584, %v2686
    %v2705 = vadd.f32 %v2585, %v2687
    %v2706 = vadd.f32 %v2586, %v2688
    %v2707 = vadd.f32 %v2587, %v2689
    %v2708 = vadd.f32 %v2588, %v2690
    %v2709 = vadd.f32 %v2589, %v2691
    %v2710 = vld [vmem:[%s143] sm:$0xff]
    %v2711 = vld [vmem:[%s143 + $0x8] sm:$0x1]
    %v2712 = vld [vmem:[%s143 + $0x10] sm:$0xff]
    %v2713 = vld [vmem:[%s143 + $0x18] sm:$0x1]
    %v2714 = vld [vmem:[%s143 + $0x20] sm:$0xff]
    %v2715 = vld [vmem:[%s143 + $0x28] sm:$0x1]
    %v2716 = vld [vmem:[%s143 + $0x30] sm:$0xff]
    %v2717 = vld [vmem:[%s143 + $0x38] sm:$0x1]
    %v2718 = vld [vmem:[%s143 + $0x40] sm:$0xff]
    %v2719 = vld [vmem:[%s143 + $0x48] sm:$0x1]
    %v2720 = vld [vmem:[%s143 + $0x50] sm:$0xff]
    %v2721 = vld [vmem:[%s143 + $0x58] sm:$0x1]
    %v2722 = vld [vmem:[%s143 + $0x60] sm:$0xff]
    %v2723 = vld [vmem:[%s143 + $0x68] sm:$0x1]
    %v2724 = vld [vmem:[%s143 + $0x70] sm:$0xff]
    %v2725 = vld [vmem:[%s143 + $0x78] sm:$0x1]
    %v2726 = vld [vmem:[%s143 + $0x80] sm:$0xff]
    %v2727 = vld [vmem:[%s143 + $0x88] sm:$0x1]
    %s2728 = sld [smem:[#allocation7 + $0xd]]
    %v2729 = vstv %s2728
    %v2730 = vmul.f32 %v2710, %v2729
    %v2731 = vmul.f32 %v2711, %v2729
    %v2732 = vmul.f32 %v2712, %v2729
    %v2733 = vmul.f32 %v2713, %v2729
    %v2734 = vmul.f32 %v2714, %v2729
    %v2735 = vmul.f32 %v2715, %v2729
    %v2736 = vmul.f32 %v2716, %v2729
    %v2737 = vmul.f32 %v2717, %v2729
    %v2738 = vmul.f32 %v2718, %v2729
    %v2739 = vmul.f32 %v2719, %v2729
    %v2740 = vmul.f32 %v2720, %v2729
    %v2741 = vmul.f32 %v2721, %v2729
    %v2742 = vmul.f32 %v2722, %v2729
    %v2743 = vmul.f32 %v2723, %v2729
    %v2744 = vmul.f32 %v2724, %v2729
    %v2745 = vmul.f32 %v2725, %v2729
    %v2746 = vmul.f32 %v2726, %v2729
    %v2747 = vmul.f32 %v2727, %v2729
    %v2748 = vadd.f32 %v2692, %v2730
    %v2749 = vadd.f32 %v2693, %v2731
    %v2750 = vadd.f32 %v2694, %v2732
    %v2751 = vadd.f32 %v2695, %v2733
    %v2752 = vadd.f32 %v2696, %v2734
    %v2753 = vadd.f32 %v2697, %v2735
    %v2754 = vadd.f32 %v2698, %v2736
    %v2755 = vadd.f32 %v2699, %v2737
    %v2756 = vadd.f32 %v2700, %v2738
    %v2757 = vadd.f32 %v2701, %v2739
    %v2758 = vadd.f32 %v2702, %v2740
    %v2759 = vadd.f32 %v2703, %v2741
    %v2760 = vadd.f32 %v2704, %v2742
    %v2761 = vadd.f32 %v2705, %v2743
    %v2762 = vadd.f32 %v2706, %v2744
    %v2763 = vadd.f32 %v2707, %v2745
    %v2764 = vadd.f32 %v2708, %v2746
    %v2765 = vadd.f32 %v2709, %v2747
    %v2766 = vld [vmem:[%s200] sm:$0xff]
    %v2767 = vld [vmem:[%s200 + $0x8] sm:$0x1]
    %v2768 = vld [vmem:[%s200 + $0x10] sm:$0xff]
    %v2769 = vld [vmem:[%s200 + $0x18] sm:$0x1]
    %v2770 = vld [vmem:[%s200 + $0x20] sm:$0xff]
    %v2771 = vld [vmem:[%s200 + $0x28] sm:$0x1]
    %v2772 = vld [vmem:[%s200 + $0x30] sm:$0xff]
    %v2773 = vld [vmem:[%s200 + $0x38] sm:$0x1]
    %v2774 = vld [vmem:[%s200 + $0x40] sm:$0xff]
    %v2775 = vld [vmem:[%s200 + $0x48] sm:$0x1]
    %v2776 = vld [vmem:[%s200 + $0x50] sm:$0xff]
    %v2777 = vld [vmem:[%s200 + $0x58] sm:$0x1]
    %v2778 = vld [vmem:[%s200 + $0x60] sm:$0xff]
    %v2779 = vld [vmem:[%s200 + $0x68] sm:$0x1]
    %v2780 = vld [vmem:[%s200 + $0x70] sm:$0xff]
    %v2781 = vld [vmem:[%s200 + $0x78] sm:$0x1]
    %v2782 = vld [vmem:[%s200 + $0x80] sm:$0xff]
    %v2783 = vld [vmem:[%s200 + $0x88] sm:$0x1]
    %s2784 = sld [smem:[#allocation7 + $0x15]]
    %v2785 = vstv %s2784
    %v2786 = vmul.f32 %v2766, %v2785
    %v2787 = vmul.f32 %v2767, %v2785
    %v2788 = vmul.f32 %v2768, %v2785
    %v2789 = vmul.f32 %v2769, %v2785
    %v2790 = vmul.f32 %v2770, %v2785
    %v2791 = vmul.f32 %v2771, %v2785
    %v2792 = vmul.f32 %v2772, %v2785
    %v2793 = vmul.f32 %v2773, %v2785
    %v2794 = vmul.f32 %v2774, %v2785
    %v2795 = vmul.f32 %v2775, %v2785
    %v2796 = vmul.f32 %v2776, %v2785
    %v2797 = vmul.f32 %v2777, %v2785
    %v2798 = vmul.f32 %v2778, %v2785
    %v2799 = vmul.f32 %v2779, %v2785
    %v2800 = vmul.f32 %v2780, %v2785
    %v2801 = vmul.f32 %v2781, %v2785
    %v2802 = vmul.f32 %v2782, %v2785
    %v2803 = vmul.f32 %v2783, %v2785
    %v2804 = vadd.f32 %v2748, %v2786
    %v2805 = vadd.f32 %v2749, %v2787
    %v2806 = vadd.f32 %v2750, %v2788
    %v2807 = vadd.f32 %v2751, %v2789
    %v2808 = vadd.f32 %v2752, %v2790
    %v2809 = vadd.f32 %v2753, %v2791
    %v2810 = vadd.f32 %v2754, %v2792
    %v2811 = vadd.f32 %v2755, %v2793
    %v2812 = vadd.f32 %v2756, %v2794
    %v2813 = vadd.f32 %v2757, %v2795
    %v2814 = vadd.f32 %v2758, %v2796
    %v2815 = vadd.f32 %v2759, %v2797
    %v2816 = vadd.f32 %v2760, %v2798
    %v2817 = vadd.f32 %v2761, %v2799
    %v2818 = vadd.f32 %v2762, %v2800
    %v2819 = vadd.f32 %v2763, %v2801
    %v2820 = vadd.f32 %v2764, %v2802
    %v2821 = vadd.f32 %v2765, %v2803
    %v2822 = vld [vmem:[%s257] sm:$0xff]
    %v2823 = vld [vmem:[%s257 + $0x8] sm:$0x1]
    %v2824 = vld [vmem:[%s257 + $0x10] sm:$0xff]
    %v2825 = vld [vmem:[%s257 + $0x18] sm:$0x1]
    %v2826 = vld [vmem:[%s257 + $0x20] sm:$0xff]
    %v2827 = vld [vmem:[%s257 + $0x28] sm:$0x1]
    %v2828 = vld [vmem:[%s257 + $0x30] sm:$0xff]
    %v2829 = vld [vmem:[%s257 + $0x38] sm:$0x1]
    %v2830 = vld [vmem:[%s257 + $0x40] sm:$0xff]
    %v2831 = vld [vmem:[%s257 + $0x48] sm:$0x1]
    %v2832 = vld [vmem:[%s257 + $0x50] sm:$0xff]
    %v2833 = vld [vmem:[%s257 + $0x58] sm:$0x1]
    %v2834 = vld [vmem:[%s257 + $0x60] sm:$0xff]
    %v2835 = vld [vmem:[%s257 + $0x68] sm:$0x1]
    %v2836 = vld [vmem:[%s257 + $0x70] sm:$0xff]
    %v2837 = vld [vmem:[%s257 + $0x78] sm:$0x1]
    %v2838 = vld [vmem:[%s257 + $0x80] sm:$0xff]
    %v2839 = vld [vmem:[%s257 + $0x88] sm:$0x1]
    %s2840 = sld [smem:[#allocation7 + $0x1d]]
    %v2841 = vstv %s2840
    %v2842 = vmul.f32 %v2822, %v2841
    %v2843 = vmul.f32 %v2823, %v2841
    %v2844 = vmul.f32 %v2824, %v2841
    %v2845 = vmul.f32 %v2825, %v2841
    %v2846 = vmul.f32 %v2826, %v2841
    %v2847 = vmul.f32 %v2827, %v2841
    %v2848 = vmul.f32 %v2828, %v2841
    %v2849 = vmul.f32 %v2829, %v2841
    %v2850 = vmul.f32 %v2830, %v2841
    %v2851 = vmul.f32 %v2831, %v2841
    %v2852 = vmul.f32 %v2832, %v2841
    %v2853 = vmul.f32 %v2833, %v2841
    %v2854 = vmul.f32 %v2834, %v2841
    %v2855 = vmul.f32 %v2835, %v2841
    %v2856 = vmul.f32 %v2836, %v2841
    %v2857 = vmul.f32 %v2837, %v2841
    %v2858 = vmul.f32 %v2838, %v2841
    %v2859 = vmul.f32 %v2839, %v2841
    %v2860 = vadd.f32 %v2804, %v2842
    %v2861 = vadd.f32 %v2805, %v2843
    %v2862 = vadd.f32 %v2806, %v2844
    %v2863 = vadd.f32 %v2807, %v2845
    %v2864 = vadd.f32 %v2808, %v2846
    %v2865 = vadd.f32 %v2809, %v2847
    %v2866 = vadd.f32 %v2810, %v2848
    %v2867 = vadd.f32 %v2811, %v2849
    %v2868 = vadd.f32 %v2812, %v2850
    %v2869 = vadd.f32 %v2813, %v2851
    %v2870 = vadd.f32 %v2814, %v2852
    %v2871 = vadd.f32 %v2815, %v2853
    %v2872 = vadd.f32 %v2816, %v2854
    %v2873 = vadd.f32 %v2817, %v2855
    %v2874 = vadd.f32 %v2818, %v2856
    %v2875 = vadd.f32 %v2819, %v2857
    %v2876 = vadd.f32 %v2820, %v2858
    %v2877 = vadd.f32 %v2821, %v2859
    %v2878 = vld [vmem:[%s314] sm:$0xff]
    %v2879 = vld [vmem:[%s314 + $0x8] sm:$0x1]
    %v2880 = vld [vmem:[%s314 + $0x10] sm:$0xff]
    %v2881 = vld [vmem:[%s314 + $0x18] sm:$0x1]
    %v2882 = vld [vmem:[%s314 + $0x20] sm:$0xff]
    %v2883 = vld [vmem:[%s314 + $0x28] sm:$0x1]
    %v2884 = vld [vmem:[%s314 + $0x30] sm:$0xff]
    %v2885 = vld [vmem:[%s314 + $0x38] sm:$0x1]
    %v2886 = vld [vmem:[%s314 + $0x40] sm:$0xff]
    %v2887 = vld [vmem:[%s314 + $0x48] sm:$0x1]
    %v2888 = vld [vmem:[%s314 + $0x50] sm:$0xff]
    %v2889 = vld [vmem:[%s314 + $0x58] sm:$0x1]
    %v2890 = vld [vmem:[%s314 + $0x60] sm:$0xff]
    %v2891 = vld [vmem:[%s314 + $0x68] sm:$0x1]
    %v2892 = vld [vmem:[%s314 + $0x70] sm:$0xff]
    %v2893 = vld [vmem:[%s314 + $0x78] sm:$0x1]
    %v2894 = vld [vmem:[%s314 + $0x80] sm:$0xff]
    %v2895 = vld [vmem:[%s314 + $0x88] sm:$0x1]
    %s2896 = sld [smem:[#allocation7 + $0x25]]
    %v2897 = vstv %s2896
    %v2898 = vmul.f32 %v2878, %v2897
    %v2899 = vmul.f32 %v2879, %v2897
    %v2900 = vmul.f32 %v2880, %v2897
    %v2901 = vmul.f32 %v2881, %v2897
    %v2902 = vmul.f32 %v2882, %v2897
    %v2903 = vmul.f32 %v2883, %v2897
    %v2904 = vmul.f32 %v2884, %v2897
    %v2905 = vmul.f32 %v2885, %v2897
    %v2906 = vmul.f32 %v2886, %v2897
    %v2907 = vmul.f32 %v2887, %v2897
    %v2908 = vmul.f32 %v2888, %v2897
    %v2909 = vmul.f32 %v2889, %v2897
    %v2910 = vmul.f32 %v2890, %v2897
    %v2911 = vmul.f32 %v2891, %v2897
    %v2912 = vmul.f32 %v2892, %v2897
    %v2913 = vmul.f32 %v2893, %v2897
    %v2914 = vmul.f32 %v2894, %v2897
    %v2915 = vmul.f32 %v2895, %v2897
    %v2916 = vadd.f32 %v2860, %v2898
    %v2917 = vadd.f32 %v2861, %v2899
    %v2918 = vadd.f32 %v2862, %v2900
    %v2919 = vadd.f32 %v2863, %v2901
    %v2920 = vadd.f32 %v2864, %v2902
    %v2921 = vadd.f32 %v2865, %v2903
    %v2922 = vadd.f32 %v2866, %v2904
    %v2923 = vadd.f32 %v2867, %v2905
    %v2924 = vadd.f32 %v2868, %v2906
    %v2925 = vadd.f32 %v2869, %v2907
    %v2926 = vadd.f32 %v2870, %v2908
    %v2927 = vadd.f32 %v2871, %v2909
    %v2928 = vadd.f32 %v2872, %v2910
    %v2929 = vadd.f32 %v2873, %v2911
    %v2930 = vadd.f32 %v2874, %v2912
    %v2931 = vadd.f32 %v2875, %v2913
    %v2932 = vadd.f32 %v2876, %v2914
    %v2933 = vadd.f32 %v2877, %v2915
    %v2934 = vld [vmem:[%s371] sm:$0xff]
    %v2935 = vld [vmem:[%s371 + $0x8] sm:$0x1]
    %v2936 = vld [vmem:[%s371 + $0x10] sm:$0xff]
    %v2937 = vld [vmem:[%s371 + $0x18] sm:$0x1]
    %v2938 = vld [vmem:[%s371 + $0x20] sm:$0xff]
    %v2939 = vld [vmem:[%s371 + $0x28] sm:$0x1]
    %v2940 = vld [vmem:[%s371 + $0x30] sm:$0xff]
    %v2941 = vld [vmem:[%s371 + $0x38] sm:$0x1]
    %v2942 = vld [vmem:[%s371 + $0x40] sm:$0xff]
    %v2943 = vld [vmem:[%s371 + $0x48] sm:$0x1]
    %v2944 = vld [vmem:[%s371 + $0x50] sm:$0xff]
    %v2945 = vld [vmem:[%s371 + $0x58] sm:$0x1]
    %v2946 = vld [vmem:[%s371 + $0x60] sm:$0xff]
    %v2947 = vld [vmem:[%s371 + $0x68] sm:$0x1]
    %v2948 = vld [vmem:[%s371 + $0x70] sm:$0xff]
    %v2949 = vld [vmem:[%s371 + $0x78] sm:$0x1]
    %v2950 = vld [vmem:[%s371 + $0x80] sm:$0xff]
    %v2951 = vld [vmem:[%s371 + $0x88] sm:$0x1]
    %s2952 = sld [smem:[#allocation7 + $0x2d]]
    %v2953 = vstv %s2952
    %v2954 = vmul.f32 %v2934, %v2953
    %v2955 = vmul.f32 %v2935, %v2953
    %v2956 = vmul.f32 %v2936, %v2953
    %v2957 = vmul.f32 %v2937, %v2953
    %v2958 = vmul.f32 %v2938, %v2953
    %v2959 = vmul.f32 %v2939, %v2953
    %v2960 = vmul.f32 %v2940, %v2953
    %v2961 = vmul.f32 %v2941, %v2953
    %v2962 = vmul.f32 %v2942, %v2953
    %v2963 = vmul.f32 %v2943, %v2953
    %v2964 = vmul.f32 %v2944, %v2953
    %v2965 = vmul.f32 %v2945, %v2953
    %v2966 = vmul.f32 %v2946, %v2953
    %v2967 = vmul.f32 %v2947, %v2953
    %v2968 = vmul.f32 %v2948, %v2953
    %v2969 = vmul.f32 %v2949, %v2953
    %v2970 = vmul.f32 %v2950, %v2953
    %v2971 = vmul.f32 %v2951, %v2953
    %v2972 = vadd.f32 %v2916, %v2954
    %v2973 = vadd.f32 %v2917, %v2955
    %v2974 = vadd.f32 %v2918, %v2956
    %v2975 = vadd.f32 %v2919, %v2957
    %v2976 = vadd.f32 %v2920, %v2958
    %v2977 = vadd.f32 %v2921, %v2959
    %v2978 = vadd.f32 %v2922, %v2960
    %v2979 = vadd.f32 %v2923, %v2961
    %v2980 = vadd.f32 %v2924, %v2962
    %v2981 = vadd.f32 %v2925, %v2963
    %v2982 = vadd.f32 %v2926, %v2964
    %v2983 = vadd.f32 %v2927, %v2965
    %v2984 = vadd.f32 %v2928, %v2966
    %v2985 = vadd.f32 %v2929, %v2967
    %v2986 = vadd.f32 %v2930, %v2968
    %v2987 = vadd.f32 %v2931, %v2969
    %v2988 = vadd.f32 %v2932, %v2970
    %v2989 = vadd.f32 %v2933, %v2971
    %v2990 = vld [vmem:[%s428] sm:$0xff]
    %v2991 = vld [vmem:[%s428 + $0x8] sm:$0x1]
    %v2992 = vld [vmem:[%s428 + $0x10] sm:$0xff]
    %v2993 = vld [vmem:[%s428 + $0x18] sm:$0x1]
    %v2994 = vld [vmem:[%s428 + $0x20] sm:$0xff]
    %v2995 = vld [vmem:[%s428 + $0x28] sm:$0x1]
    %v2996 = vld [vmem:[%s428 + $0x30] sm:$0xff]
    %v2997 = vld [vmem:[%s428 + $0x38] sm:$0x1]
    %v2998 = vld [vmem:[%s428 + $0x40] sm:$0xff]
    %v2999 = vld [vmem:[%s428 + $0x48] sm:$0x1]
    %v3000 = vld [vmem:[%s428 + $0x50] sm:$0xff]
    %v3001 = vld [vmem:[%s428 + $0x58] sm:$0x1]
    %v3002 = vld [vmem:[%s428 + $0x60] sm:$0xff]
    %v3003 = vld [vmem:[%s428 + $0x68] sm:$0x1]
    %v3004 = vld [vmem:[%s428 + $0x70] sm:$0xff]
    %v3005 = vld [vmem:[%s428 + $0x78] sm:$0x1]
    %v3006 = vld [vmem:[%s428 + $0x80] sm:$0xff]
    %v3007 = vld [vmem:[%s428 + $0x88] sm:$0x1]
    %s3008 = sld [smem:[#allocation7 + $0x35]]
    %v3009 = vstv %s3008
    %v3010 = vmul.f32 %v2990, %v3009
    %v3011 = vmul.f32 %v2991, %v3009
    %v3012 = vmul.f32 %v2992, %v3009
    %v3013 = vmul.f32 %v2993, %v3009
    %v3014 = vmul.f32 %v2994, %v3009
    %v3015 = vmul.f32 %v2995, %v3009
    %v3016 = vmul.f32 %v2996, %v3009
    %v3017 = vmul.f32 %v2997, %v3009
    %v3018 = vmul.f32 %v2998, %v3009
    %v3019 = vmul.f32 %v2999, %v3009
    %v3020 = vmul.f32 %v3000, %v3009
    %v3021 = vmul.f32 %v3001, %v3009
    %v3022 = vmul.f32 %v3002, %v3009
    %v3023 = vmul.f32 %v3003, %v3009
    %v3024 = vmul.f32 %v3004, %v3009
    %v3025 = vmul.f32 %v3005, %v3009
    %v3026 = vmul.f32 %v3006, %v3009
    %v3027 = vmul.f32 %v3007, %v3009
    %v3028 = vadd.f32 %v2972, %v3010
    %v3029 = vadd.f32 %v2973, %v3011
    %v3030 = vadd.f32 %v2974, %v3012
    %v3031 = vadd.f32 %v2975, %v3013
    %v3032 = vadd.f32 %v2976, %v3014
    %v3033 = vadd.f32 %v2977, %v3015
    %v3034 = vadd.f32 %v2978, %v3016
    %v3035 = vadd.f32 %v2979, %v3017
    %v3036 = vadd.f32 %v2980, %v3018
    %v3037 = vadd.f32 %v2981, %v3019
    %v3038 = vadd.f32 %v2982, %v3020
    %v3039 = vadd.f32 %v2983, %v3021
    %v3040 = vadd.f32 %v2984, %v3022
    %v3041 = vadd.f32 %v2985, %v3023
    %v3042 = vadd.f32 %v2986, %v3024
    %v3043 = vadd.f32 %v2987, %v3025
    %v3044 = vadd.f32 %v2988, %v3026
    %v3045 = vadd.f32 %v2989, %v3027
    %v3046 = vld [vmem:[%s485] sm:$0xff]
    %v3047 = vld [vmem:[%s485 + $0x8] sm:$0x1]
    %v3048 = vld [vmem:[%s485 + $0x10] sm:$0xff]
    %v3049 = vld [vmem:[%s485 + $0x18] sm:$0x1]
    %v3050 = vld [vmem:[%s485 + $0x20] sm:$0xff]
    %v3051 = vld [vmem:[%s485 + $0x28] sm:$0x1]
    %v3052 = vld [vmem:[%s485 + $0x30] sm:$0xff]
    %v3053 = vld [vmem:[%s485 + $0x38] sm:$0x1]
    %v3054 = vld [vmem:[%s485 + $0x40] sm:$0xff]
    %v3055 = vld [vmem:[%s485 + $0x48] sm:$0x1]
    %v3056 = vld [vmem:[%s485 + $0x50] sm:$0xff]
    %v3057 = vld [vmem:[%s485 + $0x58] sm:$0x1]
    %v3058 = vld [vmem:[%s485 + $0x60] sm:$0xff]
    %v3059 = vld [vmem:[%s485 + $0x68] sm:$0x1]
    %v3060 = vld [vmem:[%s485 + $0x70] sm:$0xff]
    %v3061 = vld [vmem:[%s485 + $0x78] sm:$0x1]
    %v3062 = vld [vmem:[%s485 + $0x80] sm:$0xff]
    %v3063 = vld [vmem:[%s485 + $0x88] sm:$0x1]
    %s3064 = sld [smem:[#allocation7 + $0x3d]]
    %v3065 = vstv %s3064
    %v3066 = vmul.f32 %v3046, %v3065
    %v3067 = vmul.f32 %v3047, %v3065
    %v3068 = vmul.f32 %v3048, %v3065
    %v3069 = vmul.f32 %v3049, %v3065
    %v3070 = vmul.f32 %v3050, %v3065
    %v3071 = vmul.f32 %v3051, %v3065
    %v3072 = vmul.f32 %v3052, %v3065
    %v3073 = vmul.f32 %v3053, %v3065
    %v3074 = vmul.f32 %v3054, %v3065
    %v3075 = vmul.f32 %v3055, %v3065
    %v3076 = vmul.f32 %v3056, %v3065
    %v3077 = vmul.f32 %v3057, %v3065
    %v3078 = vmul.f32 %v3058, %v3065
    %v3079 = vmul.f32 %v3059, %v3065
    %v3080 = vmul.f32 %v3060, %v3065
    %v3081 = vmul.f32 %v3061, %v3065
    %v3082 = vmul.f32 %v3062, %v3065
    %v3083 = vmul.f32 %v3063, %v3065
    %v3084 = vadd.f32 %v3028, %v3066
    %v3085 = vadd.f32 %v3029, %v3067
    %v3086 = vadd.f32 %v3030, %v3068
    %v3087 = vadd.f32 %v3031, %v3069
    %v3088 = vadd.f32 %v3032, %v3070
    %v3089 = vadd.f32 %v3033, %v3071
    %v3090 = vadd.f32 %v3034, %v3072
    %v3091 = vadd.f32 %v3035, %v3073
    %v3092 = vadd.f32 %v3036, %v3074
    %v3093 = vadd.f32 %v3037, %v3075
    %v3094 = vadd.f32 %v3038, %v3076
    %v3095 = vadd.f32 %v3039, %v3077
    %v3096 = vadd.f32 %v3040, %v3078
    %v3097 = vadd.f32 %v3041, %v3079
    %v3098 = vadd.f32 %v3042, %v3080
    %v3099 = vadd.f32 %v3043, %v3081
    %v3100 = vadd.f32 %v3044, %v3082
    %v3101 = vadd.f32 %v3045, %v3083
    %v3102 = vld [vmem:[#allocation3 + $0x6] sm:$0xff]
    %v3103 = vld [vmem:[#allocation3 + $0xe] sm:$0x1]
    %v3104 = vld [vmem:[#allocation3 + $0x16] sm:$0xff]
    %v3105 = vld [vmem:[#allocation3 + $0x1e] sm:$0x1]
    %v3106 = vld [vmem:[#allocation3 + $0x26] sm:$0xff]
    %v3107 = vld [vmem:[#allocation3 + $0x2e] sm:$0x1]
    %v3108 = vld [vmem:[#allocation3 + $0x36] sm:$0xff]
    %v3109 = vld [vmem:[#allocation3 + $0x3e] sm:$0x1]
    %v3110 = vld [vmem:[#allocation3 + $0x46] sm:$0xff]
    %v3111 = vld [vmem:[#allocation3 + $0x4e] sm:$0x1]
    %v3112 = vld [vmem:[#allocation3 + $0x56] sm:$0xff]
    %v3113 = vld [vmem:[#allocation3 + $0x5e] sm:$0x1]
    %v3114 = vld [vmem:[#allocation3 + $0x66] sm:$0xff]
    %v3115 = vld [vmem:[#allocation3 + $0x6e] sm:$0x1]
    %v3116 = vld [vmem:[#allocation3 + $0x76] sm:$0xff]
    %v3117 = vld [vmem:[#allocation3 + $0x7e] sm:$0x1]
    %v3118 = vld [vmem:[#allocation3 + $0x86] sm:$0xff]
    %v3119 = vld [vmem:[#allocation3 + $0x8e] sm:$0x1]
    %v3120 = vld [vmem:[#allocation3 + $0x96] sm:$0xff]
    %v3121 = vld [vmem:[#allocation3 + $0x9e] sm:$0x1]
    %v3122 = vld [vmem:[#allocation3 + $0xa6] sm:$0xff]
    %v3123 = vld [vmem:[#allocation3 + $0xae] sm:$0x1]
    %v3124 = vld [vmem:[#allocation3 + $0xb6] sm:$0xff]
    %v3125 = vld [vmem:[#allocation3 + $0xbe] sm:$0x1]
    %v3126 = vld [vmem:[#allocation3 + $0xc6] sm:$0xff]
    %v3127 = vld [vmem:[#allocation3 + $0xce] sm:$0x1]
    %v3128 = vld [vmem:[#allocation3 + $0xd6] sm:$0xff]
    %v3129 = vld [vmem:[#allocation3 + $0xde] sm:$0x1]
    %v3130 = vld [vmem:[#allocation3 + $0xe6] sm:$0xff]
    %v3131 = vld [vmem:[#allocation3 + $0xee] sm:$0x1]
    %v3132 = vld [vmem:[#allocation3 + $0xf6] sm:$0xff]
    %v3133 = vld [vmem:[#allocation3 + $0xfe] sm:$0x1]
    %3134 = vst [vmem:[#allocation2] sm:$0xff] %v3102
    %3135 = vst [vmem:[#allocation2 + $0x8] sm:$0x1] %v3103
    %3136 = vst [vmem:[#allocation2 + $0x10] sm:$0xff] %v3104
    %3137 = vst [vmem:[#allocation2 + $0x18] sm:$0x1] %v3105
    %3138 = vst [vmem:[#allocation2 + $0x20] sm:$0xff] %v3106
    %3139 = vst [vmem:[#allocation2 + $0x28] sm:$0x1] %v3107
    %3140 = vst [vmem:[#allocation2 + $0x30] sm:$0xff] %v3108
    %3141 = vst [vmem:[#allocation2 + $0x38] sm:$0x1] %v3109
    %3142 = vst [vmem:[#allocation2 + $0x40] sm:$0xff] %v3110
    %3143 = vst [vmem:[#allocation2 + $0x48] sm:$0x1] %v3111
    %3144 = vst [vmem:[#allocation2 + $0x50] sm:$0xff] %v3112
    %3145 = vst [vmem:[#allocation2 + $0x58] sm:$0x1] %v3113
    %3146 = vst [vmem:[#allocation2 + $0x60] sm:$0xff] %v3114
    %3147 = vst [vmem:[#allocation2 + $0x68] sm:$0x1] %v3115
    %3148 = vst [vmem:[#allocation2 + $0x70] sm:$0xff] %v3116
    %3149 = vst [vmem:[#allocation2 + $0x78] sm:$0x1] %v3117
    %3150 = vst [vmem:[#allocation2 + $0x80] sm:$0xff] %v3118
    %3151 = vst [vmem:[#allocation2 + $0x88] sm:$0x1] %v3119
    %3152 = vst [vmem:[#allocation2 + $0x90] sm:$0xff] %v3120
    %3153 = vst [vmem:[#allocation2 + $0x98] sm:$0x1] %v3121
    %3154 = vst [vmem:[#allocation2 + $0xa0] sm:$0xff] %v3122
    %3155 = vst [vmem:[#allocation2 + $0xa8] sm:$0x1] %v3123
    %3156 = vst [vmem:[#allocation2 + $0xb0] sm:$0xff] %v3124
    %3157 = vst [vmem:[#allocation2 + $0xb8] sm:$0x1] %v3125
    %3158 = vst [vmem:[#allocation2 + $0xc0] sm:$0xff] %v3126
    %3159 = vst [vmem:[#allocation2 + $0xc8] sm:$0x1] %v3127
    %3160 = vst [vmem:[#allocation2 + $0xd0] sm:$0xff] %v3128
    %3161 = vst [vmem:[#allocation2 + $0xd8] sm:$0x1] %v3129
    %3162 = vst [vmem:[#allocation2 + $0xe0] sm:$0xff] %v3130
    %3163 = vst [vmem:[#allocation2 + $0xe8] sm:$0x1] %v3131
    %3164 = vst [vmem:[#allocation2 + $0xf0] sm:$0xff] %v3132
    %3165 = vst [vmem:[#allocation2 + $0xf8] sm:$0x1] %v3133
    %v3166 = vld [vmem:[#allocation2] sm:$0xff]
    %v3167 = vld [vmem:[#allocation2 + $0x8] sm:$0x1]
    %v3168 = vld [vmem:[#allocation2 + $0x10] sm:$0xff]
    %v3169 = vld [vmem:[#allocation2 + $0x18] sm:$0x1]
    %v3170 = vld [vmem:[#allocation2 + $0x20] sm:$0xff]
    %v3171 = vld [vmem:[#allocation2 + $0x28] sm:$0x1]
    %v3172 = vld [vmem:[#allocation2 + $0x30] sm:$0xff]
    %v3173 = vld [vmem:[#allocation2 + $0x38] sm:$0x1]
    %v3174 = vld [vmem:[#allocation2 + $0x40] sm:$0xff]
    %v3175 = vld [vmem:[#allocation2 + $0x48] sm:$0x1]
    %v3176 = vld [vmem:[#allocation2 + $0x50] sm:$0xff]
    %v3177 = vld [vmem:[#allocation2 + $0x58] sm:$0x1]
    %v3178 = vld [vmem:[#allocation2 + $0x60] sm:$0xff]
    %v3179 = vld [vmem:[#allocation2 + $0x68] sm:$0x1]
    %v3180 = vld [vmem:[#allocation2 + $0x70] sm:$0xff]
    %v3181 = vld [vmem:[#allocation2 + $0x78] sm:$0x1]
    %v3182 = vld [vmem:[#allocation2 + $0x80] sm:$0xff]
    %v3183 = vld [vmem:[#allocation2 + $0x88] sm:$0x1]
    %s3184 = sld [smem:[#allocation7 + $0x6]]
    %v3185 = vstv %s3184
    %v3186 = vmul.f32 %v3166, %v3185
    %v3187 = vmul.f32 %v3167, %v3185
    %v3188 = vmul.f32 %v3168, %v3185
    %v3189 = vmul.f32 %v3169, %v3185
    %v3190 = vmul.f32 %v3170, %v3185
    %v3191 = vmul.f32 %v3171, %v3185
    %v3192 = vmul.f32 %v3172, %v3185
    %v3193 = vmul.f32 %v3173, %v3185
    %v3194 = vmul.f32 %v3174, %v3185
    %v3195 = vmul.f32 %v3175, %v3185
    %v3196 = vmul.f32 %v3176, %v3185
    %v3197 = vmul.f32 %v3177, %v3185
    %v3198 = vmul.f32 %v3178, %v3185
    %v3199 = vmul.f32 %v3179, %v3185
    %v3200 = vmul.f32 %v3180, %v3185
    %v3201 = vmul.f32 %v3181, %v3185
    %v3202 = vmul.f32 %v3182, %v3185
    %v3203 = vmul.f32 %v3183, %v3185
    %v3204 = vadd.f32 %v3084, %v3186
    %v3205 = vadd.f32 %v3085, %v3187
    %v3206 = vadd.f32 %v3086, %v3188
    %v3207 = vadd.f32 %v3087, %v3189
    %v3208 = vadd.f32 %v3088, %v3190
    %v3209 = vadd.f32 %v3089, %v3191
    %v3210 = vadd.f32 %v3090, %v3192
    %v3211 = vadd.f32 %v3091, %v3193
    %v3212 = vadd.f32 %v3092, %v3194
    %v3213 = vadd.f32 %v3093, %v3195
    %v3214 = vadd.f32 %v3094, %v3196
    %v3215 = vadd.f32 %v3095, %v3197
    %v3216 = vadd.f32 %v3096, %v3198
    %v3217 = vadd.f32 %v3097, %v3199
    %v3218 = vadd.f32 %v3098, %v3200
    %v3219 = vadd.f32 %v3099, %v3201
    %v3220 = vadd.f32 %v3100, %v3202
    %v3221 = vadd.f32 %v3101, %v3203
    %v3222 = vld [vmem:[%s143] sm:$0xff]
    %v3223 = vld [vmem:[%s143 + $0x8] sm:$0x1]
    %v3224 = vld [vmem:[%s143 + $0x10] sm:$0xff]
    %v3225 = vld [vmem:[%s143 + $0x18] sm:$0x1]
    %v3226 = vld [vmem:[%s143 + $0x20] sm:$0xff]
    %v3227 = vld [vmem:[%s143 + $0x28] sm:$0x1]
    %v3228 = vld [vmem:[%s143 + $0x30] sm:$0xff]
    %v3229 = vld [vmem:[%s143 + $0x38] sm:$0x1]
    %v3230 = vld [vmem:[%s143 + $0x40] sm:$0xff]
    %v3231 = vld [vmem:[%s143 + $0x48] sm:$0x1]
    %v3232 = vld [vmem:[%s143 + $0x50] sm:$0xff]
    %v3233 = vld [vmem:[%s143 + $0x58] sm:$0x1]
    %v3234 = vld [vmem:[%s143 + $0x60] sm:$0xff]
    %v3235 = vld [vmem:[%s143 + $0x68] sm:$0x1]
    %v3236 = vld [vmem:[%s143 + $0x70] sm:$0xff]
    %v3237 = vld [vmem:[%s143 + $0x78] sm:$0x1]
    %v3238 = vld [vmem:[%s143 + $0x80] sm:$0xff]
    %v3239 = vld [vmem:[%s143 + $0x88] sm:$0x1]
    %s3240 = sld [smem:[#allocation7 + $0xe]]
    %v3241 = vstv %s3240
    %v3242 = vmul.f32 %v3222, %v3241
    %v3243 = vmul.f32 %v3223, %v3241
    %v3244 = vmul.f32 %v3224, %v3241
    %v3245 = vmul.f32 %v3225, %v3241
    %v3246 = vmul.f32 %v3226, %v3241
    %v3247 = vmul.f32 %v3227, %v3241
    %v3248 = vmul.f32 %v3228, %v3241
    %v3249 = vmul.f32 %v3229, %v3241
    %v3250 = vmul.f32 %v3230, %v3241
    %v3251 = vmul.f32 %v3231, %v3241
    %v3252 = vmul.f32 %v3232, %v3241
    %v3253 = vmul.f32 %v3233, %v3241
    %v3254 = vmul.f32 %v3234, %v3241
    %v3255 = vmul.f32 %v3235, %v3241
    %v3256 = vmul.f32 %v3236, %v3241
    %v3257 = vmul.f32 %v3237, %v3241
    %v3258 = vmul.f32 %v3238, %v3241
    %v3259 = vmul.f32 %v3239, %v3241
    %v3260 = vadd.f32 %v3204, %v3242
    %v3261 = vadd.f32 %v3205, %v3243
    %v3262 = vadd.f32 %v3206, %v3244
    %v3263 = vadd.f32 %v3207, %v3245
    %v3264 = vadd.f32 %v3208, %v3246
    %v3265 = vadd.f32 %v3209, %v3247
    %v3266 = vadd.f32 %v3210, %v3248
    %v3267 = vadd.f32 %v3211, %v3249
    %v3268 = vadd.f32 %v3212, %v3250
    %v3269 = vadd.f32 %v3213, %v3251
    %v3270 = vadd.f32 %v3214, %v3252
    %v3271 = vadd.f32 %v3215, %v3253
    %v3272 = vadd.f32 %v3216, %v3254
    %v3273 = vadd.f32 %v3217, %v3255
    %v3274 = vadd.f32 %v3218, %v3256
    %v3275 = vadd.f32 %v3219, %v3257
    %v3276 = vadd.f32 %v3220, %v3258
    %v3277 = vadd.f32 %v3221, %v3259
    %v3278 = vld [vmem:[%s200] sm:$0xff]
    %v3279 = vld [vmem:[%s200 + $0x8] sm:$0x1]
    %v3280 = vld [vmem:[%s200 + $0x10] sm:$0xff]
    %v3281 = vld [vmem:[%s200 + $0x18] sm:$0x1]
    %v3282 = vld [vmem:[%s200 + $0x20] sm:$0xff]
    %v3283 = vld [vmem:[%s200 + $0x28] sm:$0x1]
    %v3284 = vld [vmem:[%s200 + $0x30] sm:$0xff]
    %v3285 = vld [vmem:[%s200 + $0x38] sm:$0x1]
    %v3286 = vld [vmem:[%s200 + $0x40] sm:$0xff]
    %v3287 = vld [vmem:[%s200 + $0x48] sm:$0x1]
    %v3288 = vld [vmem:[%s200 + $0x50] sm:$0xff]
    %v3289 = vld [vmem:[%s200 + $0x58] sm:$0x1]
    %v3290 = vld [vmem:[%s200 + $0x60] sm:$0xff]
    %v3291 = vld [vmem:[%s200 + $0x68] sm:$0x1]
    %v3292 = vld [vmem:[%s200 + $0x70] sm:$0xff]
    %v3293 = vld [vmem:[%s200 + $0x78] sm:$0x1]
    %v3294 = vld [vmem:[%s200 + $0x80] sm:$0xff]
    %v3295 = vld [vmem:[%s200 + $0x88] sm:$0x1]
    %s3296 = sld [smem:[#allocation7 + $0x16]]
    %v3297 = vstv %s3296
    %v3298 = vmul.f32 %v3278, %v3297
    %v3299 = vmul.f32 %v3279, %v3297
    %v3300 = vmul.f32 %v3280, %v3297
    %v3301 = vmul.f32 %v3281, %v3297
    %v3302 = vmul.f32 %v3282, %v3297
    %v3303 = vmul.f32 %v3283, %v3297
    %v3304 = vmul.f32 %v3284, %v3297
    %v3305 = vmul.f32 %v3285, %v3297
    %v3306 = vmul.f32 %v3286, %v3297
    %v3307 = vmul.f32 %v3287, %v3297
    %v3308 = vmul.f32 %v3288, %v3297
    %v3309 = vmul.f32 %v3289, %v3297
    %v3310 = vmul.f32 %v3290, %v3297
    %v3311 = vmul.f32 %v3291, %v3297
    %v3312 = vmul.f32 %v3292, %v3297
    %v3313 = vmul.f32 %v3293, %v3297
    %v3314 = vmul.f32 %v3294, %v3297
    %v3315 = vmul.f32 %v3295, %v3297
    %v3316 = vadd.f32 %v3260, %v3298
    %v3317 = vadd.f32 %v3261, %v3299
    %v3318 = vadd.f32 %v3262, %v3300
    %v3319 = vadd.f32 %v3263, %v3301
    %v3320 = vadd.f32 %v3264, %v3302
    %v3321 = vadd.f32 %v3265, %v3303
    %v3322 = vadd.f32 %v3266, %v3304
    %v3323 = vadd.f32 %v3267, %v3305
    %v3324 = vadd.f32 %v3268, %v3306
    %v3325 = vadd.f32 %v3269, %v3307
    %v3326 = vadd.f32 %v3270, %v3308
    %v3327 = vadd.f32 %v3271, %v3309
    %v3328 = vadd.f32 %v3272, %v3310
    %v3329 = vadd.f32 %v3273, %v3311
    %v3330 = vadd.f32 %v3274, %v3312
    %v3331 = vadd.f32 %v3275, %v3313
    %v3332 = vadd.f32 %v3276, %v3314
    %v3333 = vadd.f32 %v3277, %v3315
    %v3334 = vld [vmem:[%s257] sm:$0xff]
    %v3335 = vld [vmem:[%s257 + $0x8] sm:$0x1]
    %v3336 = vld [vmem:[%s257 + $0x10] sm:$0xff]
    %v3337 = vld [vmem:[%s257 + $0x18] sm:$0x1]
    %v3338 = vld [vmem:[%s257 + $0x20] sm:$0xff]
    %v3339 = vld [vmem:[%s257 + $0x28] sm:$0x1]
    %v3340 = vld [vmem:[%s257 + $0x30] sm:$0xff]
    %v3341 = vld [vmem:[%s257 + $0x38] sm:$0x1]
    %v3342 = vld [vmem:[%s257 + $0x40] sm:$0xff]
    %v3343 = vld [vmem:[%s257 + $0x48] sm:$0x1]
    %v3344 = vld [vmem:[%s257 + $0x50] sm:$0xff]
    %v3345 = vld [vmem:[%s257 + $0x58] sm:$0x1]
    %v3346 = vld [vmem:[%s257 + $0x60] sm:$0xff]
    %v3347 = vld [vmem:[%s257 + $0x68] sm:$0x1]
    %v3348 = vld [vmem:[%s257 + $0x70] sm:$0xff]
    %v3349 = vld [vmem:[%s257 + $0x78] sm:$0x1]
    %v3350 = vld [vmem:[%s257 + $0x80] sm:$0xff]
    %v3351 = vld [vmem:[%s257 + $0x88] sm:$0x1]
    %s3352 = sld [smem:[#allocation7 + $0x1e]]
    %v3353 = vstv %s3352
    %v3354 = vmul.f32 %v3334, %v3353
    %v3355 = vmul.f32 %v3335, %v3353
    %v3356 = vmul.f32 %v3336, %v3353
    %v3357 = vmul.f32 %v3337, %v3353
    %v3358 = vmul.f32 %v3338, %v3353
    %v3359 = vmul.f32 %v3339, %v3353
    %v3360 = vmul.f32 %v3340, %v3353
    %v3361 = vmul.f32 %v3341, %v3353
    %v3362 = vmul.f32 %v3342, %v3353
    %v3363 = vmul.f32 %v3343, %v3353
    %v3364 = vmul.f32 %v3344, %v3353
    %v3365 = vmul.f32 %v3345, %v3353
    %v3366 = vmul.f32 %v3346, %v3353
    %v3367 = vmul.f32 %v3347, %v3353
    %v3368 = vmul.f32 %v3348, %v3353
    %v3369 = vmul.f32 %v3349, %v3353
    %v3370 = vmul.f32 %v3350, %v3353
    %v3371 = vmul.f32 %v3351, %v3353
    %v3372 = vadd.f32 %v3316, %v3354
    %v3373 = vadd.f32 %v3317, %v3355
    %v3374 = vadd.f32 %v3318, %v3356
    %v3375 = vadd.f32 %v3319, %v3357
    %v3376 = vadd.f32 %v3320, %v3358
    %v3377 = vadd.f32 %v3321, %v3359
    %v3378 = vadd.f32 %v3322, %v3360
    %v3379 = vadd.f32 %v3323, %v3361
    %v3380 = vadd.f32 %v3324, %v3362
    %v3381 = vadd.f32 %v3325, %v3363
    %v3382 = vadd.f32 %v3326, %v3364
    %v3383 = vadd.f32 %v3327, %v3365
    %v3384 = vadd.f32 %v3328, %v3366
    %v3385 = vadd.f32 %v3329, %v3367
    %v3386 = vadd.f32 %v3330, %v3368
    %v3387 = vadd.f32 %v3331, %v3369
    %v3388 = vadd.f32 %v3332, %v3370
    %v3389 = vadd.f32 %v3333, %v3371
    %v3390 = vld [vmem:[%s314] sm:$0xff]
    %v3391 = vld [vmem:[%s314 + $0x8] sm:$0x1]
    %v3392 = vld [vmem:[%s314 + $0x10] sm:$0xff]
    %v3393 = vld [vmem:[%s314 + $0x18] sm:$0x1]
    %v3394 = vld [vmem:[%s314 + $0x20] sm:$0xff]
    %v3395 = vld [vmem:[%s314 + $0x28] sm:$0x1]
    %v3396 = vld [vmem:[%s314 + $0x30] sm:$0xff]
    %v3397 = vld [vmem:[%s314 + $0x38] sm:$0x1]
    %v3398 = vld [vmem:[%s314 + $0x40] sm:$0xff]
    %v3399 = vld [vmem:[%s314 + $0x48] sm:$0x1]
    %v3400 = vld [vmem:[%s314 + $0x50] sm:$0xff]
    %v3401 = vld [vmem:[%s314 + $0x58] sm:$0x1]
    %v3402 = vld [vmem:[%s314 + $0x60] sm:$0xff]
    %v3403 = vld [vmem:[%s314 + $0x68] sm:$0x1]
    %v3404 = vld [vmem:[%s314 + $0x70] sm:$0xff]
    %v3405 = vld [vmem:[%s314 + $0x78] sm:$0x1]
    %v3406 = vld [vmem:[%s314 + $0x80] sm:$0xff]
    %v3407 = vld [vmem:[%s314 + $0x88] sm:$0x1]
    %s3408 = sld [smem:[#allocation7 + $0x26]]
    %v3409 = vstv %s3408
    %v3410 = vmul.f32 %v3390, %v3409
    %v3411 = vmul.f32 %v3391, %v3409
    %v3412 = vmul.f32 %v3392, %v3409
    %v3413 = vmul.f32 %v3393, %v3409
    %v3414 = vmul.f32 %v3394, %v3409
    %v3415 = vmul.f32 %v3395, %v3409
    %v3416 = vmul.f32 %v3396, %v3409
    %v3417 = vmul.f32 %v3397, %v3409
    %v3418 = vmul.f32 %v3398, %v3409
    %v3419 = vmul.f32 %v3399, %v3409
    %v3420 = vmul.f32 %v3400, %v3409
    %v3421 = vmul.f32 %v3401, %v3409
    %v3422 = vmul.f32 %v3402, %v3409
    %v3423 = vmul.f32 %v3403, %v3409
    %v3424 = vmul.f32 %v3404, %v3409
    %v3425 = vmul.f32 %v3405, %v3409
    %v3426 = vmul.f32 %v3406, %v3409
    %v3427 = vmul.f32 %v3407, %v3409
    %v3428 = vadd.f32 %v3372, %v3410
    %v3429 = vadd.f32 %v3373, %v3411
    %v3430 = vadd.f32 %v3374, %v3412
    %v3431 = vadd.f32 %v3375, %v3413
    %v3432 = vadd.f32 %v3376, %v3414
    %v3433 = vadd.f32 %v3377, %v3415
    %v3434 = vadd.f32 %v3378, %v3416
    %v3435 = vadd.f32 %v3379, %v3417
    %v3436 = vadd.f32 %v3380, %v3418
    %v3437 = vadd.f32 %v3381, %v3419
    %v3438 = vadd.f32 %v3382, %v3420
    %v3439 = vadd.f32 %v3383, %v3421
    %v3440 = vadd.f32 %v3384, %v3422
    %v3441 = vadd.f32 %v3385, %v3423
    %v3442 = vadd.f32 %v3386, %v3424
    %v3443 = vadd.f32 %v3387, %v3425
    %v3444 = vadd.f32 %v3388, %v3426
    %v3445 = vadd.f32 %v3389, %v3427
    %v3446 = vld [vmem:[%s371] sm:$0xff]
    %v3447 = vld [vmem:[%s371 + $0x8] sm:$0x1]
    %v3448 = vld [vmem:[%s371 + $0x10] sm:$0xff]
    %v3449 = vld [vmem:[%s371 + $0x18] sm:$0x1]
    %v3450 = vld [vmem:[%s371 + $0x20] sm:$0xff]
    %v3451 = vld [vmem:[%s371 + $0x28] sm:$0x1]
    %v3452 = vld [vmem:[%s371 + $0x30] sm:$0xff]
    %v3453 = vld [vmem:[%s371 + $0x38] sm:$0x1]
    %v3454 = vld [vmem:[%s371 + $0x40] sm:$0xff]
    %v3455 = vld [vmem:[%s371 + $0x48] sm:$0x1]
    %v3456 = vld [vmem:[%s371 + $0x50] sm:$0xff]
    %v3457 = vld [vmem:[%s371 + $0x58] sm:$0x1]
    %v3458 = vld [vmem:[%s371 + $0x60] sm:$0xff]
    %v3459 = vld [vmem:[%s371 + $0x68] sm:$0x1]
    %v3460 = vld [vmem:[%s371 + $0x70] sm:$0xff]
    %v3461 = vld [vmem:[%s371 + $0x78] sm:$0x1]
    %v3462 = vld [vmem:[%s371 + $0x80] sm:$0xff]
    %v3463 = vld [vmem:[%s371 + $0x88] sm:$0x1]
    %s3464 = sld [smem:[#allocation7 + $0x2e]]
    %v3465 = vstv %s3464
    %v3466 = vmul.f32 %v3446, %v3465
    %v3467 = vmul.f32 %v3447, %v3465
    %v3468 = vmul.f32 %v3448, %v3465
    %v3469 = vmul.f32 %v3449, %v3465
    %v3470 = vmul.f32 %v3450, %v3465
    %v3471 = vmul.f32 %v3451, %v3465
    %v3472 = vmul.f32 %v3452, %v3465
    %v3473 = vmul.f32 %v3453, %v3465
    %v3474 = vmul.f32 %v3454, %v3465
    %v3475 = vmul.f32 %v3455, %v3465
    %v3476 = vmul.f32 %v3456, %v3465
    %v3477 = vmul.f32 %v3457, %v3465
    %v3478 = vmul.f32 %v3458, %v3465
    %v3479 = vmul.f32 %v3459, %v3465
    %v3480 = vmul.f32 %v3460, %v3465
    %v3481 = vmul.f32 %v3461, %v3465
    %v3482 = vmul.f32 %v3462, %v3465
    %v3483 = vmul.f32 %v3463, %v3465
    %v3484 = vadd.f32 %v3428, %v3466
    %v3485 = vadd.f32 %v3429, %v3467
    %v3486 = vadd.f32 %v3430, %v3468
    %v3487 = vadd.f32 %v3431, %v3469
    %v3488 = vadd.f32 %v3432, %v3470
    %v3489 = vadd.f32 %v3433, %v3471
    %v3490 = vadd.f32 %v3434, %v3472
    %v3491 = vadd.f32 %v3435, %v3473
    %v3492 = vadd.f32 %v3436, %v3474
    %v3493 = vadd.f32 %v3437, %v3475
    %v3494 = vadd.f32 %v3438, %v3476
    %v3495 = vadd.f32 %v3439, %v3477
    %v3496 = vadd.f32 %v3440, %v3478
    %v3497 = vadd.f32 %v3441, %v3479
    %v3498 = vadd.f32 %v3442, %v3480
    %v3499 = vadd.f32 %v3443, %v3481
    %v3500 = vadd.f32 %v3444, %v3482
    %v3501 = vadd.f32 %v3445, %v3483
    %v3502 = vld [vmem:[%s428] sm:$0xff]
    %v3503 = vld [vmem:[%s428 + $0x8] sm:$0x1]
    %v3504 = vld [vmem:[%s428 + $0x10] sm:$0xff]
    %v3505 = vld [vmem:[%s428 + $0x18] sm:$0x1]
    %v3506 = vld [vmem:[%s428 + $0x20] sm:$0xff]
    %v3507 = vld [vmem:[%s428 + $0x28] sm:$0x1]
    %v3508 = vld [vmem:[%s428 + $0x30] sm:$0xff]
    %v3509 = vld [vmem:[%s428 + $0x38] sm:$0x1]
    %v3510 = vld [vmem:[%s428 + $0x40] sm:$0xff]
    %v3511 = vld [vmem:[%s428 + $0x48] sm:$0x1]
    %v3512 = vld [vmem:[%s428 + $0x50] sm:$0xff]
    %v3513 = vld [vmem:[%s428 + $0x58] sm:$0x1]
    %v3514 = vld [vmem:[%s428 + $0x60] sm:$0xff]
    %v3515 = vld [vmem:[%s428 + $0x68] sm:$0x1]
    %v3516 = vld [vmem:[%s428 + $0x70] sm:$0xff]
    %v3517 = vld [vmem:[%s428 + $0x78] sm:$0x1]
    %v3518 = vld [vmem:[%s428 + $0x80] sm:$0xff]
    %v3519 = vld [vmem:[%s428 + $0x88] sm:$0x1]
    %s3520 = sld [smem:[#allocation7 + $0x36]]
    %v3521 = vstv %s3520
    %v3522 = vmul.f32 %v3502, %v3521
    %v3523 = vmul.f32 %v3503, %v3521
    %v3524 = vmul.f32 %v3504, %v3521
    %v3525 = vmul.f32 %v3505, %v3521
    %v3526 = vmul.f32 %v3506, %v3521
    %v3527 = vmul.f32 %v3507, %v3521
    %v3528 = vmul.f32 %v3508, %v3521
    %v3529 = vmul.f32 %v3509, %v3521
    %v3530 = vmul.f32 %v3510, %v3521
    %v3531 = vmul.f32 %v3511, %v3521
    %v3532 = vmul.f32 %v3512, %v3521
    %v3533 = vmul.f32 %v3513, %v3521
    %v3534 = vmul.f32 %v3514, %v3521
    %v3535 = vmul.f32 %v3515, %v3521
    %v3536 = vmul.f32 %v3516, %v3521
    %v3537 = vmul.f32 %v3517, %v3521
    %v3538 = vmul.f32 %v3518, %v3521
    %v3539 = vmul.f32 %v3519, %v3521
    %v3540 = vadd.f32 %v3484, %v3522
    %v3541 = vadd.f32 %v3485, %v3523
    %v3542 = vadd.f32 %v3486, %v3524
    %v3543 = vadd.f32 %v3487, %v3525
    %v3544 = vadd.f32 %v3488, %v3526
    %v3545 = vadd.f32 %v3489, %v3527
    %v3546 = vadd.f32 %v3490, %v3528
    %v3547 = vadd.f32 %v3491, %v3529
    %v3548 = vadd.f32 %v3492, %v3530
    %v3549 = vadd.f32 %v3493, %v3531
    %v3550 = vadd.f32 %v3494, %v3532
    %v3551 = vadd.f32 %v3495, %v3533
    %v3552 = vadd.f32 %v3496, %v3534
    %v3553 = vadd.f32 %v3497, %v3535
    %v3554 = vadd.f32 %v3498, %v3536
    %v3555 = vadd.f32 %v3499, %v3537
    %v3556 = vadd.f32 %v3500, %v3538
    %v3557 = vadd.f32 %v3501, %v3539
    %v3558 = vld [vmem:[%s485] sm:$0xff]
    %v3559 = vld [vmem:[%s485 + $0x8] sm:$0x1]
    %v3560 = vld [vmem:[%s485 + $0x10] sm:$0xff]
    %v3561 = vld [vmem:[%s485 + $0x18] sm:$0x1]
    %v3562 = vld [vmem:[%s485 + $0x20] sm:$0xff]
    %v3563 = vld [vmem:[%s485 + $0x28] sm:$0x1]
    %v3564 = vld [vmem:[%s485 + $0x30] sm:$0xff]
    %v3565 = vld [vmem:[%s485 + $0x38] sm:$0x1]
    %v3566 = vld [vmem:[%s485 + $0x40] sm:$0xff]
    %v3567 = vld [vmem:[%s485 + $0x48] sm:$0x1]
    %v3568 = vld [vmem:[%s485 + $0x50] sm:$0xff]
    %v3569 = vld [vmem:[%s485 + $0x58] sm:$0x1]
    %v3570 = vld [vmem:[%s485 + $0x60] sm:$0xff]
    %v3571 = vld [vmem:[%s485 + $0x68] sm:$0x1]
    %v3572 = vld [vmem:[%s485 + $0x70] sm:$0xff]
    %v3573 = vld [vmem:[%s485 + $0x78] sm:$0x1]
    %v3574 = vld [vmem:[%s485 + $0x80] sm:$0xff]
    %v3575 = vld [vmem:[%s485 + $0x88] sm:$0x1]
    %s3576 = sld [smem:[#allocation7 + $0x3e]]
    %v3577 = vstv %s3576
    %v3578 = vmul.f32 %v3558, %v3577
    %v3579 = vmul.f32 %v3559, %v3577
    %v3580 = vmul.f32 %v3560, %v3577
    %v3581 = vmul.f32 %v3561, %v3577
    %v3582 = vmul.f32 %v3562, %v3577
    %v3583 = vmul.f32 %v3563, %v3577
    %v3584 = vmul.f32 %v3564, %v3577
    %v3585 = vmul.f32 %v3565, %v3577
    %v3586 = vmul.f32 %v3566, %v3577
    %v3587 = vmul.f32 %v3567, %v3577
    %v3588 = vmul.f32 %v3568, %v3577
    %v3589 = vmul.f32 %v3569, %v3577
    %v3590 = vmul.f32 %v3570, %v3577
    %v3591 = vmul.f32 %v3571, %v3577
    %v3592 = vmul.f32 %v3572, %v3577
    %v3593 = vmul.f32 %v3573, %v3577
    %v3594 = vmul.f32 %v3574, %v3577
    %v3595 = vmul.f32 %v3575, %v3577
    %v3596 = vadd.f32 %v3540, %v3578
    %v3597 = vadd.f32 %v3541, %v3579
    %v3598 = vadd.f32 %v3542, %v3580
    %v3599 = vadd.f32 %v3543, %v3581
    %v3600 = vadd.f32 %v3544, %v3582
    %v3601 = vadd.f32 %v3545, %v3583
    %v3602 = vadd.f32 %v3546, %v3584
    %v3603 = vadd.f32 %v3547, %v3585
    %v3604 = vadd.f32 %v3548, %v3586
    %v3605 = vadd.f32 %v3549, %v3587
    %v3606 = vadd.f32 %v3550, %v3588
    %v3607 = vadd.f32 %v3551, %v3589
    %v3608 = vadd.f32 %v3552, %v3590
    %v3609 = vadd.f32 %v3553, %v3591
    %v3610 = vadd.f32 %v3554, %v3592
    %v3611 = vadd.f32 %v3555, %v3593
    %v3612 = vadd.f32 %v3556, %v3594
    %v3613 = vadd.f32 %v3557, %v3595
    %v3614 = vld [vmem:[#allocation3 + $0x7] sm:$0xff]
    %v3615 = vld [vmem:[#allocation3 + $0xf] sm:$0x1]
    %v3616 = vld [vmem:[#allocation3 + $0x17] sm:$0xff]
    %v3617 = vld [vmem:[#allocation3 + $0x1f] sm:$0x1]
    %v3618 = vld [vmem:[#allocation3 + $0x27] sm:$0xff]
    %v3619 = vld [vmem:[#allocation3 + $0x2f] sm:$0x1]
    %v3620 = vld [vmem:[#allocation3 + $0x37] sm:$0xff]
    %v3621 = vld [vmem:[#allocation3 + $0x3f] sm:$0x1]
    %v3622 = vld [vmem:[#allocation3 + $0x47] sm:$0xff]
    %v3623 = vld [vmem:[#allocation3 + $0x4f] sm:$0x1]
    %v3624 = vld [vmem:[#allocation3 + $0x57] sm:$0xff]
    %v3625 = vld [vmem:[#allocation3 + $0x5f] sm:$0x1]
    %v3626 = vld [vmem:[#allocation3 + $0x67] sm:$0xff]
    %v3627 = vld [vmem:[#allocation3 + $0x6f] sm:$0x1]
    %v3628 = vld [vmem:[#allocation3 + $0x77] sm:$0xff]
    %v3629 = vld [vmem:[#allocation3 + $0x7f] sm:$0x1]
    %v3630 = vld [vmem:[#allocation3 + $0x87] sm:$0xff]
    %v3631 = vld [vmem:[#allocation3 + $0x8f] sm:$0x1]
    %v3632 = vld [vmem:[#allocation3 + $0x97] sm:$0xff]
    %v3633 = vld [vmem:[#allocation3 + $0x9f] sm:$0x1]
    %v3634 = vld [vmem:[#allocation3 + $0xa7] sm:$0xff]
    %v3635 = vld [vmem:[#allocation3 + $0xaf] sm:$0x1]
    %v3636 = vld [vmem:[#allocation3 + $0xb7] sm:$0xff]
    %v3637 = vld [vmem:[#allocation3 + $0xbf] sm:$0x1]
    %v3638 = vld [vmem:[#allocation3 + $0xc7] sm:$0xff]
    %v3639 = vld [vmem:[#allocation3 + $0xcf] sm:$0x1]
    %v3640 = vld [vmem:[#allocation3 + $0xd7] sm:$0xff]
    %v3641 = vld [vmem:[#allocation3 + $0xdf] sm:$0x1]
    %v3642 = vld [vmem:[#allocation3 + $0xe7] sm:$0xff]
    %v3643 = vld [vmem:[#allocation3 + $0xef] sm:$0x1]
    %v3644 = vld [vmem:[#allocation3 + $0xf7] sm:$0xff]
    %v3645 = vld [vmem:[#allocation3 + $0xff] sm:$0x1]
    %3646 = vst [vmem:[#allocation2] sm:$0xff] %v3614
    %3647 = vst [vmem:[#allocation2 + $0x8] sm:$0x1] %v3615
    %3648 = vst [vmem:[#allocation2 + $0x10] sm:$0xff] %v3616
    %3649 = vst [vmem:[#allocation2 + $0x18] sm:$0x1] %v3617
    %3650 = vst [vmem:[#allocation2 + $0x20] sm:$0xff] %v3618
    %3651 = vst [vmem:[#allocation2 + $0x28] sm:$0x1] %v3619
    %3652 = vst [vmem:[#allocation2 + $0x30] sm:$0xff] %v3620
    %3653 = vst [vmem:[#allocation2 + $0x38] sm:$0x1] %v3621
    %3654 = vst [vmem:[#allocation2 + $0x40] sm:$0xff] %v3622
    %3655 = vst [vmem:[#allocation2 + $0x48] sm:$0x1] %v3623
    %3656 = vst [vmem:[#allocation2 + $0x50] sm:$0xff] %v3624
    %3657 = vst [vmem:[#allocation2 + $0x58] sm:$0x1] %v3625
    %3658 = vst [vmem:[#allocation2 + $0x60] sm:$0xff] %v3626
    %3659 = vst [vmem:[#allocation2 + $0x68] sm:$0x1] %v3627
    %3660 = vst [vmem:[#allocation2 + $0x70] sm:$0xff] %v3628
    %3661 = vst [vmem:[#allocation2 + $0x78] sm:$0x1] %v3629
    %3662 = vst [vmem:[#allocation2 + $0x80] sm:$0xff] %v3630
    %3663 = vst [vmem:[#allocation2 + $0x88] sm:$0x1] %v3631
    %3664 = vst [vmem:[#allocation2 + $0x90] sm:$0xff] %v3632
    %3665 = vst [vmem:[#allocation2 + $0x98] sm:$0x1] %v3633
    %3666 = vst [vmem:[#allocation2 + $0xa0] sm:$0xff] %v3634
    %3667 = vst [vmem:[#allocation2 + $0xa8] sm:$0x1] %v3635
    %3668 = vst [vmem:[#allocation2 + $0xb0] sm:$0xff] %v3636
    %3669 = vst [vmem:[#allocation2 + $0xb8] sm:$0x1] %v3637
    %3670 = vst [vmem:[#allocation2 + $0xc0] sm:$0xff] %v3638
    %3671 = vst [vmem:[#allocation2 + $0xc8] sm:$0x1] %v3639
    %3672 = vst [vmem:[#allocation2 + $0xd0] sm:$0xff] %v3640
    %3673 = vst [vmem:[#allocation2 + $0xd8] sm:$0x1] %v3641
    %3674 = vst [vmem:[#allocation2 + $0xe0] sm:$0xff] %v3642
    %3675 = vst [vmem:[#allocation2 + $0xe8] sm:$0x1] %v3643
    %3676 = vst [vmem:[#allocation2 + $0xf0] sm:$0xff] %v3644
    %3677 = vst [vmem:[#allocation2 + $0xf8] sm:$0x1] %v3645
    %v3678 = vld [vmem:[#allocation2] sm:$0xff]
    %v3679 = vld [vmem:[#allocation2 + $0x8] sm:$0x1]
    %v3680 = vld [vmem:[#allocation2 + $0x10] sm:$0xff]
    %v3681 = vld [vmem:[#allocation2 + $0x18] sm:$0x1]
    %v3682 = vld [vmem:[#allocation2 + $0x20] sm:$0xff]
    %v3683 = vld [vmem:[#allocation2 + $0x28] sm:$0x1]
    %v3684 = vld [vmem:[#allocation2 + $0x30] sm:$0xff]
    %v3685 = vld [vmem:[#allocation2 + $0x38] sm:$0x1]
    %v3686 = vld [vmem:[#allocation2 + $0x40] sm:$0xff]
    %v3687 = vld [vmem:[#allocation2 + $0x48] sm:$0x1]
    %v3688 = vld [vmem:[#allocation2 + $0x50] sm:$0xff]
    %v3689 = vld [vmem:[#allocation2 + $0x58] sm:$0x1]
    %v3690 = vld [vmem:[#allocation2 + $0x60] sm:$0xff]
    %v3691 = vld [vmem:[#allocation2 + $0x68] sm:$0x1]
    %v3692 = vld [vmem:[#allocation2 + $0x70] sm:$0xff]
    %v3693 = vld [vmem:[#allocation2 + $0x78] sm:$0x1]
    %v3694 = vld [vmem:[#allocation2 + $0x80] sm:$0xff]
    %v3695 = vld [vmem:[#allocation2 + $0x88] sm:$0x1]
    %s3696 = sld [smem:[#allocation7 + $0x7]]
    %v3697 = vstv %s3696
    %v3698 = vmul.f32 %v3678, %v3697
    %v3699 = vmul.f32 %v3679, %v3697
    %v3700 = vmul.f32 %v3680, %v3697
    %v3701 = vmul.f32 %v3681, %v3697
    %v3702 = vmul.f32 %v3682, %v3697
    %v3703 = vmul.f32 %v3683, %v3697
    %v3704 = vmul.f32 %v3684, %v3697
    %v3705 = vmul.f32 %v3685, %v3697
    %v3706 = vmul.f32 %v3686, %v3697
    %v3707 = vmul.f32 %v3687, %v3697
    %v3708 = vmul.f32 %v3688, %v3697
    %v3709 = vmul.f32 %v3689, %v3697
    %v3710 = vmul.f32 %v3690, %v3697
    %v3711 = vmul.f32 %v3691, %v3697
    %v3712 = vmul.f32 %v3692, %v3697
    %v3713 = vmul.f32 %v3693, %v3697
    %v3714 = vmul.f32 %v3694, %v3697
    %v3715 = vmul.f32 %v3695, %v3697
    %v3716 = vadd.f32 %v3596, %v3698
    %v3717 = vadd.f32 %v3597, %v3699
    %v3718 = vadd.f32 %v3598, %v3700
    %v3719 = vadd.f32 %v3599, %v3701
    %v3720 = vadd.f32 %v3600, %v3702
    %v3721 = vadd.f32 %v3601, %v3703
    %v3722 = vadd.f32 %v3602, %v3704
    %v3723 = vadd.f32 %v3603, %v3705
    %v3724 = vadd.f32 %v3604, %v3706
    %v3725 = vadd.f32 %v3605, %v3707
    %v3726 = vadd.f32 %v3606, %v3708
    %v3727 = vadd.f32 %v3607, %v3709
    %v3728 = vadd.f32 %v3608, %v3710
    %v3729 = vadd.f32 %v3609, %v3711
    %v3730 = vadd.f32 %v3610, %v3712
    %v3731 = vadd.f32 %v3611, %v3713
    %v3732 = vadd.f32 %v3612, %v3714
    %v3733 = vadd.f32 %v3613, %v3715
    %v3734 = vld [vmem:[%s143] sm:$0xff]
    %v3735 = vld [vmem:[%s143 + $0x8] sm:$0x1]
    %v3736 = vld [vmem:[%s143 + $0x10] sm:$0xff]
    %v3737 = vld [vmem:[%s143 + $0x18] sm:$0x1]
    %v3738 = vld [vmem:[%s143 + $0x20] sm:$0xff]
    %v3739 = vld [vmem:[%s143 + $0x28] sm:$0x1]
    %v3740 = vld [vmem:[%s143 + $0x30] sm:$0xff]
    %v3741 = vld [vmem:[%s143 + $0x38] sm:$0x1]
    %v3742 = vld [vmem:[%s143 + $0x40] sm:$0xff]
    %v3743 = vld [vmem:[%s143 + $0x48] sm:$0x1]
    %v3744 = vld [vmem:[%s143 + $0x50] sm:$0xff]
    %v3745 = vld [vmem:[%s143 + $0x58] sm:$0x1]
    %v3746 = vld [vmem:[%s143 + $0x60] sm:$0xff]
    %v3747 = vld [vmem:[%s143 + $0x68] sm:$0x1]
    %v3748 = vld [vmem:[%s143 + $0x70] sm:$0xff]
    %v3749 = vld [vmem:[%s143 + $0x78] sm:$0x1]
    %v3750 = vld [vmem:[%s143 + $0x80] sm:$0xff]
    %v3751 = vld [vmem:[%s143 + $0x88] sm:$0x1]
    %s3752 = sld [smem:[#allocation7 + $0xf]]
    %v3753 = vstv %s3752
    %v3754 = vmul.f32 %v3734, %v3753
    %v3755 = vmul.f32 %v3735, %v3753
    %v3756 = vmul.f32 %v3736, %v3753
    %v3757 = vmul.f32 %v3737, %v3753
    %v3758 = vmul.f32 %v3738, %v3753
    %v3759 = vmul.f32 %v3739, %v3753
    %v3760 = vmul.f32 %v3740, %v3753
    %v3761 = vmul.f32 %v3741, %v3753
    %v3762 = vmul.f32 %v3742, %v3753
    %v3763 = vmul.f32 %v3743, %v3753
    %v3764 = vmul.f32 %v3744, %v3753
    %v3765 = vmul.f32 %v3745, %v3753
    %v3766 = vmul.f32 %v3746, %v3753
    %v3767 = vmul.f32 %v3747, %v3753
    %v3768 = vmul.f32 %v3748, %v3753
    %v3769 = vmul.f32 %v3749, %v3753
    %v3770 = vmul.f32 %v3750, %v3753
    %v3771 = vmul.f32 %v3751, %v3753
    %v3772 = vadd.f32 %v3716, %v3754
    %v3773 = vadd.f32 %v3717, %v3755
    %v3774 = vadd.f32 %v3718, %v3756
    %v3775 = vadd.f32 %v3719, %v3757
    %v3776 = vadd.f32 %v3720, %v3758
    %v3777 = vadd.f32 %v3721, %v3759
    %v3778 = vadd.f32 %v3722, %v3760
    %v3779 = vadd.f32 %v3723, %v3761
    %v3780 = vadd.f32 %v3724, %v3762
    %v3781 = vadd.f32 %v3725, %v3763
    %v3782 = vadd.f32 %v3726, %v3764
    %v3783 = vadd.f32 %v3727, %v3765
    %v3784 = vadd.f32 %v3728, %v3766
    %v3785 = vadd.f32 %v3729, %v3767
    %v3786 = vadd.f32 %v3730, %v3768
    %v3787 = vadd.f32 %v3731, %v3769
    %v3788 = vadd.f32 %v3732, %v3770
    %v3789 = vadd.f32 %v3733, %v3771
    %v3790 = vld [vmem:[%s200] sm:$0xff]
    %v3791 = vld [vmem:[%s200 + $0x8] sm:$0x1]
    %v3792 = vld [vmem:[%s200 + $0x10] sm:$0xff]
    %v3793 = vld [vmem:[%s200 + $0x18] sm:$0x1]
    %v3794 = vld [vmem:[%s200 + $0x20] sm:$0xff]
    %v3795 = vld [vmem:[%s200 + $0x28] sm:$0x1]
    %v3796 = vld [vmem:[%s200 + $0x30] sm:$0xff]
    %v3797 = vld [vmem:[%s200 + $0x38] sm:$0x1]
    %v3798 = vld [vmem:[%s200 + $0x40] sm:$0xff]
    %v3799 = vld [vmem:[%s200 + $0x48] sm:$0x1]
    %v3800 = vld [vmem:[%s200 + $0x50] sm:$0xff]
    %v3801 = vld [vmem:[%s200 + $0x58] sm:$0x1]
    %v3802 = vld [vmem:[%s200 + $0x60] sm:$0xff]
    %v3803 = vld [vmem:[%s200 + $0x68] sm:$0x1]
    %v3804 = vld [vmem:[%s200 + $0x70] sm:$0xff]
    %v3805 = vld [vmem:[%s200 + $0x78] sm:$0x1]
    %v3806 = vld [vmem:[%s200 + $0x80] sm:$0xff]
    %v3807 = vld [vmem:[%s200 + $0x88] sm:$0x1]
    %s3808 = sld [smem:[#allocation7 + $0x17]]
    %v3809 = vstv %s3808
    %v3810 = vmul.f32 %v3790, %v3809
    %v3811 = vmul.f32 %v3791, %v3809
    %v3812 = vmul.f32 %v3792, %v3809
    %v3813 = vmul.f32 %v3793, %v3809
    %v3814 = vmul.f32 %v3794, %v3809
    %v3815 = vmul.f32 %v3795, %v3809
    %v3816 = vmul.f32 %v3796, %v3809
    %v3817 = vmul.f32 %v3797, %v3809
    %v3818 = vmul.f32 %v3798, %v3809
    %v3819 = vmul.f32 %v3799, %v3809
    %v3820 = vmul.f32 %v3800, %v3809
    %v3821 = vmul.f32 %v3801, %v3809
    %v3822 = vmul.f32 %v3802, %v3809
    %v3823 = vmul.f32 %v3803, %v3809
    %v3824 = vmul.f32 %v3804, %v3809
    %v3825 = vmul.f32 %v3805, %v3809
    %v3826 = vmul.f32 %v3806, %v3809
    %v3827 = vmul.f32 %v3807, %v3809
    %v3828 = vadd.f32 %v3772, %v3810
    %v3829 = vadd.f32 %v3773, %v3811
    %v3830 = vadd.f32 %v3774, %v3812
    %v3831 = vadd.f32 %v3775, %v3813
    %v3832 = vadd.f32 %v3776, %v3814
    %v3833 = vadd.f32 %v3777, %v3815
    %v3834 = vadd.f32 %v3778, %v3816
    %v3835 = vadd.f32 %v3779, %v3817
    %v3836 = vadd.f32 %v3780, %v3818
    %v3837 = vadd.f32 %v3781, %v3819
    %v3838 = vadd.f32 %v3782, %v3820
    %v3839 = vadd.f32 %v3783, %v3821
    %v3840 = vadd.f32 %v3784, %v3822
    %v3841 = vadd.f32 %v3785, %v3823
    %v3842 = vadd.f32 %v3786, %v3824
    %v3843 = vadd.f32 %v3787, %v3825
    %v3844 = vadd.f32 %v3788, %v3826
    %v3845 = vadd.f32 %v3789, %v3827
    %v3846 = vld [vmem:[%s257] sm:$0xff]
    %v3847 = vld [vmem:[%s257 + $0x8] sm:$0x1]
    %v3848 = vld [vmem:[%s257 + $0x10] sm:$0xff]
    %v3849 = vld [vmem:[%s257 + $0x18] sm:$0x1]
    %v3850 = vld [vmem:[%s257 + $0x20] sm:$0xff]
    %v3851 = vld [vmem:[%s257 + $0x28] sm:$0x1]
    %v3852 = vld [vmem:[%s257 + $0x30] sm:$0xff]
    %v3853 = vld [vmem:[%s257 + $0x38] sm:$0x1]
    %v3854 = vld [vmem:[%s257 + $0x40] sm:$0xff]
    %v3855 = vld [vmem:[%s257 + $0x48] sm:$0x1]
    %v3856 = vld [vmem:[%s257 + $0x50] sm:$0xff]
    %v3857 = vld [vmem:[%s257 + $0x58] sm:$0x1]
    %v3858 = vld [vmem:[%s257 + $0x60] sm:$0xff]
    %v3859 = vld [vmem:[%s257 + $0x68] sm:$0x1]
    %v3860 = vld [vmem:[%s257 + $0x70] sm:$0xff]
    %v3861 = vld [vmem:[%s257 + $0x78] sm:$0x1]
    %v3862 = vld [vmem:[%s257 + $0x80] sm:$0xff]
    %v3863 = vld [vmem:[%s257 + $0x88] sm:$0x1]
    %s3864 = sld [smem:[#allocation7 + $0x1f]]
    %v3865 = vstv %s3864
    %v3866 = vmul.f32 %v3846, %v3865
    %v3867 = vmul.f32 %v3847, %v3865
    %v3868 = vmul.f32 %v3848, %v3865
    %v3869 = vmul.f32 %v3849, %v3865
    %v3870 = vmul.f32 %v3850, %v3865
    %v3871 = vmul.f32 %v3851, %v3865
    %v3872 = vmul.f32 %v3852, %v3865
    %v3873 = vmul.f32 %v3853, %v3865
    %v3874 = vmul.f32 %v3854, %v3865
    %v3875 = vmul.f32 %v3855, %v3865
    %v3876 = vmul.f32 %v3856, %v3865
    %v3877 = vmul.f32 %v3857, %v3865
    %v3878 = vmul.f32 %v3858, %v3865
    %v3879 = vmul.f32 %v3859, %v3865
    %v3880 = vmul.f32 %v3860, %v3865
    %v3881 = vmul.f32 %v3861, %v3865
    %v3882 = vmul.f32 %v3862, %v3865
    %v3883 = vmul.f32 %v3863, %v3865
    %v3884 = vadd.f32 %v3828, %v3866
    %v3885 = vadd.f32 %v3829, %v3867
    %v3886 = vadd.f32 %v3830, %v3868
    %v3887 = vadd.f32 %v3831, %v3869
    %v3888 = vadd.f32 %v3832, %v3870
    %v3889 = vadd.f32 %v3833, %v3871
    %v3890 = vadd.f32 %v3834, %v3872
    %v3891 = vadd.f32 %v3835, %v3873
    %v3892 = vadd.f32 %v3836, %v3874
    %v3893 = vadd.f32 %v3837, %v3875
    %v3894 = vadd.f32 %v3838, %v3876
    %v3895 = vadd.f32 %v3839, %v3877
    %v3896 = vadd.f32 %v3840, %v3878
    %v3897 = vadd.f32 %v3841, %v3879
    %v3898 = vadd.f32 %v3842, %v3880
    %v3899 = vadd.f32 %v3843, %v3881
    %v3900 = vadd.f32 %v3844, %v3882
    %v3901 = vadd.f32 %v3845, %v3883
    %v3902 = vld [vmem:[%s314] sm:$0xff]
    %v3903 = vld [vmem:[%s314 + $0x8] sm:$0x1]
    %v3904 = vld [vmem:[%s314 + $0x10] sm:$0xff]
    %v3905 = vld [vmem:[%s314 + $0x18] sm:$0x1]
    %v3906 = vld [vmem:[%s314 + $0x20] sm:$0xff]
    %v3907 = vld [vmem:[%s314 + $0x28] sm:$0x1]
    %v3908 = vld [vmem:[%s314 + $0x30] sm:$0xff]
    %v3909 = vld [vmem:[%s314 + $0x38] sm:$0x1]
    %v3910 = vld [vmem:[%s314 + $0x40] sm:$0xff]
    %v3911 = vld [vmem:[%s314 + $0x48] sm:$0x1]
    %v3912 = vld [vmem:[%s314 + $0x50] sm:$0xff]
    %v3913 = vld [vmem:[%s314 + $0x58] sm:$0x1]
    %v3914 = vld [vmem:[%s314 + $0x60] sm:$0xff]
    %v3915 = vld [vmem:[%s314 + $0x68] sm:$0x1]
    %v3916 = vld [vmem:[%s314 + $0x70] sm:$0xff]
    %v3917 = vld [vmem:[%s314 + $0x78] sm:$0x1]
    %v3918 = vld [vmem:[%s314 + $0x80] sm:$0xff]
    %v3919 = vld [vmem:[%s314 + $0x88] sm:$0x1]
    %s3920 = sld [smem:[#allocation7 + $0x27]]
    %v3921 = vstv %s3920
    %v3922 = vmul.f32 %v3902, %v3921
    %v3923 = vmul.f32 %v3903, %v3921
    %v3924 = vmul.f32 %v3904, %v3921
    %v3925 = vmul.f32 %v3905, %v3921
    %v3926 = vmul.f32 %v3906, %v3921
    %v3927 = vmul.f32 %v3907, %v3921
    %v3928 = vmul.f32 %v3908, %v3921
    %v3929 = vmul.f32 %v3909, %v3921
    %v3930 = vmul.f32 %v3910, %v3921
    %v3931 = vmul.f32 %v3911, %v3921
    %v3932 = vmul.f32 %v3912, %v3921
    %v3933 = vmul.f32 %v3913, %v3921
    %v3934 = vmul.f32 %v3914, %v3921
    %v3935 = vmul.f32 %v3915, %v3921
    %v3936 = vmul.f32 %v3916, %v3921
    %v3937 = vmul.f32 %v3917, %v3921
    %v3938 = vmul.f32 %v3918, %v3921
    %v3939 = vmul.f32 %v3919, %v3921
    %v3940 = vadd.f32 %v3884, %v3922
    %v3941 = vadd.f32 %v3885, %v3923
    %v3942 = vadd.f32 %v3886, %v3924
    %v3943 = vadd.f32 %v3887, %v3925
    %v3944 = vadd.f32 %v3888, %v3926
    %v3945 = vadd.f32 %v3889, %v3927
    %v3946 = vadd.f32 %v3890, %v3928
    %v3947 = vadd.f32 %v3891, %v3929
    %v3948 = vadd.f32 %v3892, %v3930
    %v3949 = vadd.f32 %v3893, %v3931
    %v3950 = vadd.f32 %v3894, %v3932
    %v3951 = vadd.f32 %v3895, %v3933
    %v3952 = vadd.f32 %v3896, %v3934
    %v3953 = vadd.f32 %v3897, %v3935
    %v3954 = vadd.f32 %v3898, %v3936
    %v3955 = vadd.f32 %v3899, %v3937
    %v3956 = vadd.f32 %v3900, %v3938
    %v3957 = vadd.f32 %v3901, %v3939
    %v3958 = vld [vmem:[%s371] sm:$0xff]
    %v3959 = vld [vmem:[%s371 + $0x8] sm:$0x1]
    %v3960 = vld [vmem:[%s371 + $0x10] sm:$0xff]
    %v3961 = vld [vmem:[%s371 + $0x18] sm:$0x1]
    %v3962 = vld [vmem:[%s371 + $0x20] sm:$0xff]
    %v3963 = vld [vmem:[%s371 + $0x28] sm:$0x1]
    %v3964 = vld [vmem:[%s371 + $0x30] sm:$0xff]
    %v3965 = vld [vmem:[%s371 + $0x38] sm:$0x1]
    %v3966 = vld [vmem:[%s371 + $0x40] sm:$0xff]
    %v3967 = vld [vmem:[%s371 + $0x48] sm:$0x1]
    %v3968 = vld [vmem:[%s371 + $0x50] sm:$0xff]
    %v3969 = vld [vmem:[%s371 + $0x58] sm:$0x1]
    %v3970 = vld [vmem:[%s371 + $0x60] sm:$0xff]
    %v3971 = vld [vmem:[%s371 + $0x68] sm:$0x1]
    %v3972 = vld [vmem:[%s371 + $0x70] sm:$0xff]
    %v3973 = vld [vmem:[%s371 + $0x78] sm:$0x1]
    %v3974 = vld [vmem:[%s371 + $0x80] sm:$0xff]
    %v3975 = vld [vmem:[%s371 + $0x88] sm:$0x1]
    %s3976 = sld [smem:[#allocation7 + $0x2f]]
    %v3977 = vstv %s3976
    %v3978 = vmul.f32 %v3958, %v3977
    %v3979 = vmul.f32 %v3959, %v3977
    %v3980 = vmul.f32 %v3960, %v3977
    %v3981 = vmul.f32 %v3961, %v3977
    %v3982 = vmul.f32 %v3962, %v3977
    %v3983 = vmul.f32 %v3963, %v3977
    %v3984 = vmul.f32 %v3964, %v3977
    %v3985 = vmul.f32 %v3965, %v3977
    %v3986 = vmul.f32 %v3966, %v3977
    %v3987 = vmul.f32 %v3967, %v3977
    %v3988 = vmul.f32 %v3968, %v3977
    %v3989 = vmul.f32 %v3969, %v3977
    %v3990 = vmul.f32 %v3970, %v3977
    %v3991 = vmul.f32 %v3971, %v3977
    %v3992 = vmul.f32 %v3972, %v3977
    %v3993 = vmul.f32 %v3973, %v3977
    %v3994 = vmul.f32 %v3974, %v3977
    %v3995 = vmul.f32 %v3975, %v3977
    %v3996 = vadd.f32 %v3940, %v3978
    %v3997 = vadd.f32 %v3941, %v3979
    %v3998 = vadd.f32 %v3942, %v3980
    %v3999 = vadd.f32 %v3943, %v3981
    %v4000 = vadd.f32 %v3944, %v3982
    %v4001 = vadd.f32 %v3945, %v3983
    %v4002 = vadd.f32 %v3946, %v3984
    %v4003 = vadd.f32 %v3947, %v3985
    %v4004 = vadd.f32 %v3948, %v3986
    %v4005 = vadd.f32 %v3949, %v3987
    %v4006 = vadd.f32 %v3950, %v3988
    %v4007 = vadd.f32 %v3951, %v3989
    %v4008 = vadd.f32 %v3952, %v3990
    %v4009 = vadd.f32 %v3953, %v3991
    %v4010 = vadd.f32 %v3954, %v3992
    %v4011 = vadd.f32 %v3955, %v3993
    %v4012 = vadd.f32 %v3956, %v3994
    %v4013 = vadd.f32 %v3957, %v3995
    %v4014 = vld [vmem:[%s428] sm:$0xff]
    %v4015 = vld [vmem:[%s428 + $0x8] sm:$0x1]
    %v4016 = vld [vmem:[%s428 + $0x10] sm:$0xff]
    %v4017 = vld [vmem:[%s428 + $0x18] sm:$0x1]
    %v4018 = vld [vmem:[%s428 + $0x20] sm:$0xff]
    %v4019 = vld [vmem:[%s428 + $0x28] sm:$0x1]
    %v4020 = vld [vmem:[%s428 + $0x30] sm:$0xff]
    %v4021 = vld [vmem:[%s428 + $0x38] sm:$0x1]
    %v4022 = vld [vmem:[%s428 + $0x40] sm:$0xff]
    %v4023 = vld [vmem:[%s428 + $0x48] sm:$0x1]
    %v4024 = vld [vmem:[%s428 + $0x50] sm:$0xff]
    %v4025 = vld [vmem:[%s428 + $0x58] sm:$0x1]
    %v4026 = vld [vmem:[%s428 + $0x60] sm:$0xff]
    %v4027 = vld [vmem:[%s428 + $0x68] sm:$0x1]
    %v4028 = vld [vmem:[%s428 + $0x70] sm:$0xff]
    %v4029 = vld [vmem:[%s428 + $0x78] sm:$0x1]
    %v4030 = vld [vmem:[%s428 + $0x80] sm:$0xff]
    %v4031 = vld [vmem:[%s428 + $0x88] sm:$0x1]
    %s4032 = sld [smem:[#allocation7 + $0x37]]
    %v4033 = vstv %s4032
    %v4034 = vmul.f32 %v4014, %v4033
    %v4035 = vmul.f32 %v4015, %v4033
    %v4036 = vmul.f32 %v4016, %v4033
    %v4037 = vmul.f32 %v4017, %v4033
    %v4038 = vmul.f32 %v4018, %v4033
    %v4039 = vmul.f32 %v4019, %v4033
    %v4040 = vmul.f32 %v4020, %v4033
    %v4041 = vmul.f32 %v4021, %v4033
    %v4042 = vmul.f32 %v4022, %v4033
    %v4043 = vmul.f32 %v4023, %v4033
    %v4044 = vmul.f32 %v4024, %v4033
    %v4045 = vmul.f32 %v4025, %v4033
    %v4046 = vmul.f32 %v4026, %v4033
    %v4047 = vmul.f32 %v4027, %v4033
    %v4048 = vmul.f32 %v4028, %v4033
    %v4049 = vmul.f32 %v4029, %v4033
    %v4050 = vmul.f32 %v4030, %v4033
    %v4051 = vmul.f32 %v4031, %v4033
    %v4052 = vadd.f32 %v3996, %v4034
    %v4053 = vadd.f32 %v3997, %v4035
    %v4054 = vadd.f32 %v3998, %v4036
    %v4055 = vadd.f32 %v3999, %v4037
    %v4056 = vadd.f32 %v4000, %v4038
    %v4057 = vadd.f32 %v4001, %v4039
    %v4058 = vadd.f32 %v4002, %v4040
    %v4059 = vadd.f32 %v4003, %v4041
    %v4060 = vadd.f32 %v4004, %v4042
    %v4061 = vadd.f32 %v4005, %v4043
    %v4062 = vadd.f32 %v4006, %v4044
    %v4063 = vadd.f32 %v4007, %v4045
    %v4064 = vadd.f32 %v4008, %v4046
    %v4065 = vadd.f32 %v4009, %v4047
    %v4066 = vadd.f32 %v4010, %v4048
    %v4067 = vadd.f32 %v4011, %v4049
    %v4068 = vadd.f32 %v4012, %v4050
    %v4069 = vadd.f32 %v4013, %v4051
    %v4070 = vld [vmem:[%s485] sm:$0xff]
    %v4071 = vld [vmem:[%s485 + $0x8] sm:$0x1]
    %v4072 = vld [vmem:[%s485 + $0x10] sm:$0xff]
    %v4073 = vld [vmem:[%s485 + $0x18] sm:$0x1]
    %v4074 = vld [vmem:[%s485 + $0x20] sm:$0xff]
    %v4075 = vld [vmem:[%s485 + $0x28] sm:$0x1]
    %v4076 = vld [vmem:[%s485 + $0x30] sm:$0xff]
    %v4077 = vld [vmem:[%s485 + $0x38] sm:$0x1]
    %v4078 = vld [vmem:[%s485 + $0x40] sm:$0xff]
    %v4079 = vld [vmem:[%s485 + $0x48] sm:$0x1]
    %v4080 = vld [vmem:[%s485 + $0x50] sm:$0xff]
    %v4081 = vld [vmem:[%s485 + $0x58] sm:$0x1]
    %v4082 = vld [vmem:[%s485 + $0x60] sm:$0xff]
    %v4083 = vld [vmem:[%s485 + $0x68] sm:$0x1]
    %v4084 = vld [vmem:[%s485 + $0x70] sm:$0xff]
    %v4085 = vld [vmem:[%s485 + $0x78] sm:$0x1]
    %v4086 = vld [vmem:[%s485 + $0x80] sm:$0xff]
    %v4087 = vld [vmem:[%s485 + $0x88] sm:$0x1]
    %s4088 = sld [smem:[#allocation7 + $0x3f]]
    %v4089 = vstv %s4088
    %v4090 = vmul.f32 %v4070, %v4089
    %v4091 = vmul.f32 %v4071, %v4089
    %v4092 = vmul.f32 %v4072, %v4089
    %v4093 = vmul.f32 %v4073, %v4089
    %v4094 = vmul.f32 %v4074, %v4089
    %v4095 = vmul.f32 %v4075, %v4089
    %v4096 = vmul.f32 %v4076, %v4089
    %v4097 = vmul.f32 %v4077, %v4089
    %v4098 = vmul.f32 %v4078, %v4089
    %v4099 = vmul.f32 %v4079, %v4089
    %v4100 = vmul.f32 %v4080, %v4089
    %v4101 = vmul.f32 %v4081, %v4089
    %v4102 = vmul.f32 %v4082, %v4089
    %v4103 = vmul.f32 %v4083, %v4089
    %v4104 = vmul.f32 %v4084, %v4089
    %v4105 = vmul.f32 %v4085, %v4089
    %v4106 = vmul.f32 %v4086, %v4089
    %v4107 = vmul.f32 %v4087, %v4089
    %v4108 = vadd.f32 %v4052, %v4090
    %v4109 = vadd.f32 %v4053, %v4091
    %v4110 = vadd.f32 %v4054, %v4092
    %v4111 = vadd.f32 %v4055, %v4093
    %v4112 = vadd.f32 %v4056, %v4094
    %v4113 = vadd.f32 %v4057, %v4095
    %v4114 = vadd.f32 %v4058, %v4096
    %v4115 = vadd.f32 %v4059, %v4097
    %v4116 = vadd.f32 %v4060, %v4098
    %v4117 = vadd.f32 %v4061, %v4099
    %v4118 = vadd.f32 %v4062, %v4100
    %v4119 = vadd.f32 %v4063, %v4101
    %v4120 = vadd.f32 %v4064, %v4102
    %v4121 = vadd.f32 %v4065, %v4103
    %v4122 = vadd.f32 %v4066, %v4104
    %v4123 = vadd.f32 %v4067, %v4105
    %v4124 = vadd.f32 %v4068, %v4106
    %v4125 = vadd.f32 %v4069, %v4107
    %4126 = vst [vmem:[#allocation8] sm:$0xff] %v4108
    %4127 = vst [vmem:[#allocation8 + $0x8] sm:$0x1] %v4109
    %4128 = vst [vmem:[#allocation8 + $0x10] sm:$0xff] %v4110
    %4129 = vst [vmem:[#allocation8 + $0x18] sm:$0x1] %v4111
    %4130 = vst [vmem:[#allocation8 + $0x20] sm:$0xff] %v4112
    %4131 = vst [vmem:[#allocation8 + $0x28] sm:$0x1] %v4113
    %4132 = vst [vmem:[#allocation8 + $0x30] sm:$0xff] %v4114
    %4133 = vst [vmem:[#allocation8 + $0x38] sm:$0x1] %v4115
    %4134 = vst [vmem:[#allocation8 + $0x40] sm:$0xff] %v4116
    %4135 = vst [vmem:[#allocation8 + $0x48] sm:$0x1] %v4117
    %4136 = vst [vmem:[#allocation8 + $0x50] sm:$0xff] %v4118
    %4137 = vst [vmem:[#allocation8 + $0x58] sm:$0x1] %v4119
    %4138 = vst [vmem:[#allocation8 + $0x60] sm:$0xff] %v4120
    %4139 = vst [vmem:[#allocation8 + $0x68] sm:$0x1] %v4121
    %4140 = vst [vmem:[#allocation8 + $0x70] sm:$0xff] %v4122
    %4141 = vst [vmem:[#allocation8 + $0x78] sm:$0x1] %v4123
    %4142 = vst [vmem:[#allocation8 + $0x80] sm:$0xff] %v4124
    %4143 = vst [vmem:[#allocation8 + $0x88] sm:$0x1] %v4125
    // Predicated region
    $region18: #{tpu_custom_call.1} parent=1 // pred_check
      _
    $region19: #{tpu_custom_call.1} parent=1 // pred_check_branch
      %4145 = sbr.rel (0) target = $region21
    $region20: #{tpu_custom_call.1} parent=1 // pred_region
      %4147 = vsyncadd [#allocation5], 0
      %s4148 = sshll.u32 [#allocation8], 4
      %s4149 = int_to_ptr.vmem [resolvable:$true] %s4148
      %s4150 = sshll.u32 %s2, 4
      %s4151 = int_to_ptr.hbm [resolvable:$true] %s4150
      %4156 = dma.vmem_to_hbm [thread:$0]  %s4149, 2304, %s4151, [#allocation5], 128, 128, 8
    $region21: #{tpu_custom_call.1} parent=1 // pred_fallthru
      _
    // Predicated region
    $region22: #{tpu_custom_call.1} parent=1 // pred_check
      _
    $region23: #{tpu_custom_call.1} parent=1 // pred_check_branch
      %4158 = sbr.rel (0) target = $region25
    $region24: #{tpu_custom_call.1} parent=1 // pred_region
      %4160 = dma.done [#allocation5], 2304
    $region25: #{tpu_custom_call.1} parent=1 // pred_fallthru
      _
    %4161 = vsyncpa [#allocation4], 1
    %4162 = vsyncpa [#allocation5], 1
    %4163 = vsyncpa [#allocation6], 1

</llo_original>
